<compile_context>
chip_gen: v6e
topology: v6e:2x2x1
jax: 0.10.0
libtpu: 0.0.40
codegen_flags: <defaults>
</compile_context>

<pallas_src>
import math

import jax
import jax.numpy as jnp
from jax import lax
from jax.experimental import pallas as pl
from jax.experimental.pallas import tpu as pltpu

_EPS = 1e-5          # torch.nn.BatchNorm2d default eps
_LANE = 128          # TPU lane width
_TAPS = ((-1, -1), (-1, 0), (0, -1), (0, 0))   # shared 2x2 neighborhood offsets


def _round_up(v: int, m: int) -> int:
    return (v + m - 1) // m * m


def _hw_config():
    """(vmem_limit_bytes, row_tile_cap) tuned per TPU generation."""
    try:
        phys = int(pltpu.get_tpu_info().vmem_capacity_bytes)
    except Exception:
        phys = 64 * 1024 * 1024
    if phys >= 100 * 1024 * 1024:        # v5e / v6e: 128 MiB physical VMEM
        return 80 * 1024 * 1024, 1024
    return 40 * 1024 * 1024, 512         # v7x: 64 MiB physical VMEM


_VMEM_LIMIT, _ROW_TILE_CAP = _hw_config()


def _row_tiling(n_rows: int):
    """Row tile size / padded row count; >= 2 tiles whenever n_rows allows so
    the 'parallel' axis can shard across v7x's two TensorCores."""
    base = _round_up(max(n_rows, 16), 16)
    tn = min(_ROW_TILE_CAP, _round_up(-(-base // 2), 16))
    n_pad = _round_up(base, tn)
    return tn, n_pad


def _compiler_params():
    return pltpu.CompilerParams(
        dimension_semantics=("parallel",),
        vmem_limit_bytes=_VMEM_LIMIT,
    )


# ---------------------------------------------------------------------------
# Pallas kernels
# ---------------------------------------------------------------------------

def _matmul_stats_kernel(x_ref, w_ref, y_ref, psum_ref, psumsq_ref):
    """One N-tile of Y = X @ W (bf16 operands, f32 accumulate).  Y is stored in
    bf16; per-tile partial sum / sum-of-squares (f32) feed global BN stats."""
    acc = jnp.dot(x_ref[...], w_ref[...], preferred_element_type=jnp.float32)
    y = acc.astype(jnp.bfloat16)
    y_ref[...] = y
    yf = y.astype(jnp.float32)           # stats on exactly what BN will read
    psum_ref[...] = jnp.sum(yf, axis=0, keepdims=True)[None]
    psumsq_ref[...] = jnp.sum(yf * yf, axis=0, keepdims=True)[None]


def _matmul_tanh_kernel(x_ref, w_ref, o_ref):
    """One N-tile of tanh(X @ W) (final layer, no normalization)."""
    acc = jnp.dot(x_ref[...], w_ref[...], preferred_element_type=jnp.float32)
    o_ref[...] = jnp.tanh(acc).astype(o_ref.dtype)


def _bn_relu_kernel(y_ref, scale_ref, shift_ref, o_ref):
    """Apply precomputed BatchNorm affine (scale/shift) + ReLU, tiled over N."""
    y = y_ref[...].astype(jnp.float32)
    o = y * scale_ref[...] + shift_ref[...]
    o_ref[...] = jnp.maximum(o, 0.0).astype(o_ref.dtype)


# ---------------------------------------------------------------------------
# pallas_call wrappers
# ---------------------------------------------------------------------------

def _matmul_stats(x, w_mat):
    """x: [N, CK], w_mat: [CK, C] (C multiple of 128) ->
    (y [N_pad, C] bf16, col_sum [C] f32, col_sumsq [C] f32)."""
    n, ck = x.shape
    c = w_mat.shape[1]
    assert c % _LANE == 0
    tn, n_pad = _row_tiling(n)
    n_tiles = n_pad // tn

    xb = jnp.pad(x.astype(jnp.bfloat16), ((0, n_pad - n), (0, 0)))
    wb = w_mat.astype(jnp.bfloat16)

    y, ps, ps2 = pl.pallas_call(
        _matmul_stats_kernel,
        out_shape=(
            jax.ShapeDtypeStruct((n_pad, c), jnp.bfloat16),
            jax.ShapeDtypeStruct((n_tiles, 1, c), jnp.float32),
            jax.ShapeDtypeStruct((n_tiles, 1, c), jnp.float32),
        ),
        grid_spec=pltpu.PrefetchScalarGridSpec(
            num_scalar_prefetch=0,
            grid=(n_tiles,),
            in_specs=[
                pl.BlockSpec((tn, ck), lambda i: (i, 0)),
                pl.BlockSpec((ck, c), lambda i: (0, 0)),   # constant -> no re-DMA
            ],
            out_specs=(
                pl.BlockSpec((tn, c), lambda i: (i, 0)),
                pl.BlockSpec((1, 1, c), lambda i: (i, 0, 0)),
                pl.BlockSpec((1, 1, c), lambda i: (i, 0, 0)),
            ),
        ),
        compiler_params=_compiler_params(),
    )(xb, wb)
    # Zero-padded rows contribute exactly 0 to both partials.
    return y, jnp.sum(ps, axis=(0, 1)), jnp.sum(ps2, axis=(0, 1))


def _matmul_tanh(x, w_mat):
    n, ck = x.shape
    c = w_mat.shape[1]
    assert c % _LANE == 0
    tn, n_pad = _row_tiling(n)
    n_tiles = n_pad // tn

    xb = jnp.pad(x.astype(jnp.bfloat16), ((0, n_pad - n), (0, 0)))
    wb = w_mat.astype(jnp.bfloat16)

    return pl.pallas_call(
        _matmul_tanh_kernel,
        out_shape=jax.ShapeDtypeStruct((n_pad, c), jnp.bfloat16),
        grid_spec=pltpu.PrefetchScalarGridSpec(
            num_scalar_prefetch=0,
            grid=(n_tiles,),
            in_specs=[
                pl.BlockSpec((tn, ck), lambda i: (i, 0)),
                pl.BlockSpec((ck, c), lambda i: (0, 0)),
            ],
            out_specs=pl.BlockSpec((tn, c), lambda i: (i, 0)),
        ),
        compiler_params=_compiler_params(),
    )(xb, wb)


def _bn_relu_apply(y, scale_cols, shift_cols):
    """y: [N, C] bf16, scale/shift: [C] f32 -> [N_pad, C] bf16."""
    n, c = y.shape
    tn, n_pad = _row_tiling(n)
    if n_pad != n:
        y = jnp.pad(y, ((0, n_pad - n), (0, 0)))
    n_tiles = n_pad // tn

    return pl.pallas_call(
        _bn_relu_kernel,
        out_shape=jax.ShapeDtypeStruct((n_pad, c), jnp.bfloat16),
        grid_spec=pltpu.PrefetchScalarGridSpec(
            num_scalar_prefetch=0,
            grid=(n_tiles,),
            in_specs=[
                pl.BlockSpec((tn, c), lambda i: (i, 0)),
                pl.BlockSpec((1, c), lambda i: (0, 0)),
                pl.BlockSpec((1, c), lambda i: (0, 0)),
            ],
            out_specs=pl.BlockSpec((tn, c), lambda i: (i, 0)),
        ),
        compiler_params=_compiler_params(),
    )(y, scale_cols.reshape(1, c).astype(jnp.float32),
      shift_cols.reshape(1, c).astype(jnp.float32))


# ---------------------------------------------------------------------------
# Layer glue: phase-merged ConvTranspose2d(4,2,1) and the 1x1-input conv1
# ---------------------------------------------------------------------------

def _merged_weight(w, cp):
    """ConvTranspose2d(Cin, Cout, 4, 2, 1) weight [Cin,Cout,4,4] ->
    merged matrix [4*Cin, 4*cp].  Rows: tap-major over _TAPS; columns:
    phase-major (t_h, t_w), channel-minor.  Phase (t_h, t_w) of patch (m, n)
    is output pixel (2m - 1 + t_h, 2n - 1 + t_w); its tap (dh, dw) uses
    kernel element (t_h - 2*dh, t_w - 2*dw)."""
    Cout = w.shape[1]
    rows = []
    for dh, dw in _TAPS:
        cols = []
        for t_h in (0, 1):
            for t_w in (0, 1):
                wk = w[:, :, t_h - 2 * dh, t_w - 2 * dw]          # [Cin, Cout]
                cols.append(jnp.pad(wk, ((0, 0), (0, cp - Cout))))
        rows.append(jnp.concatenate(cols, axis=1))                # [Cin, 4*cp]
    return jnp.concatenate(rows, axis=0)                          # [4*Cin, 4*cp]


def _patch_slab(x):
    """x: [B,H,W,Cin] -> slab [B*(H+1)*(W+1), 4*Cin] of the 2x2 neighborhoods
    x[m-1:m+1, n-1:n+1] (zero padded at the borders), tap-major over _TAPS."""
    B, H, W, _ = x.shape
    xp = jnp.pad(x, ((0, 0), (1, 1), (1, 1), (0, 0)))
    wins = [xp[:, 1 + dh:2 + dh + H, 1 + dw:2 + dw + W, :] for dh, dw in _TAPS]
    slab = jnp.concatenate(wins, axis=-1)
    return slab.reshape(B * (H + 1) * (W + 1), slab.shape[-1])


def _pixel_shuffle(y, B, H, W, cp, Cout):
    """y: [B*(H+1)*(W+1), 4*cp] (phase-major columns) -> [B, 2H, 2W, Cout]."""
    y = y.reshape(B, H + 1, W + 1, 2, 2, cp)
    y = jnp.transpose(y, (0, 1, 3, 2, 4, 5)).reshape(B, 2 * H + 2, 2 * W + 2, cp)
    return y[:, 1:2 * H + 1, 1:2 * W + 1, :Cout]


def _border_correction(y, B, H, W, cp):
    """Sum / sum-of-squares of the merged-matmul outputs that fall outside the
    real 2H x 2W image (cropped by the pixel shuffle); subtracted from the
    in-kernel BN partials so batch statistics stay exact."""
    yb = y.reshape(B, H + 1, W + 1, 4, cp).astype(jnp.float32)
    bad_sum, bad_sumsq = [], []
    for t_h in (0, 1):
        for t_w in (0, 1):
            p = 2 * t_h + t_w
            m_bad = 0 if t_h == 0 else H
            n_bad = 0 if t_w == 0 else W
            row = yb[:, m_bad, :, p, :]          # [B, W+1, cp]
            col = yb[:, :, n_bad, p, :]          # [B, H+1, cp]
            corner = yb[:, m_bad, n_bad, p, :]   # [B, cp]
            bad_sum.append(row.sum((0, 1)) + col.sum((0, 1)) - corner.sum(0))
            bad_sumsq.append((row * row).sum((0, 1)) + (col * col).sum((0, 1))
                             - (corner * corner).sum(0))
    return jnp.stack(bad_sum), jnp.stack(bad_sumsq)               # [4, cp] each


def _bn_scale_shift(ch_sum, ch_sumsq, count, gamma, beta, cp, Cout):
    mean = ch_sum / count
    var = jnp.maximum(ch_sumsq / count - mean * mean, 0.0)
    gamma_p = jnp.pad(gamma.astype(jnp.float32), (0, cp - Cout),
                      constant_values=1.0)
    beta_p = jnp.pad(beta.astype(jnp.float32), (0, cp - Cout))
    scale = gamma_p * lax.rsqrt(var + _EPS)
    shift = beta_p - mean * scale
    return scale, shift


def _conv1_layer(latent, w, gamma, beta):
    """ConvTranspose2d(128, C, 4, 1, 0) on a 1x1 input + BatchNorm + ReLU as a
    direct [B, Cin] @ [Cin, 16*C] matmul (no zero-heavy im2col).
    Returns [B, 4, 4, C] bf16 (NHWC)."""
    B, Cin = latent.shape
    _, Cout, K, _ = w.shape                      # K == 4
    cp = _round_up(Cout, 8)                      # 16*cp is a multiple of 128

    # columns ordered (kh, kw, cout) so the output reshapes directly to NHWC
    w_mat = jnp.transpose(w, (0, 2, 3, 1))                        # [Cin,K,K,Cout]
    w_mat = jnp.pad(w_mat, ((0, 0), (0, 0), (0, 0), (0, cp - Cout)))
    w_mat = w_mat.reshape(Cin, K * K * cp)

    y, col_sum, col_sumsq = _matmul_stats(latent, w_mat)          # [B_pad, 16*cp]

    count = B * K * K
    ch_sum = jnp.sum(col_sum.reshape(K * K, cp), axis=0)
    ch_sumsq = jnp.sum(col_sumsq.reshape(K * K, cp), axis=0)
    scale, shift = _bn_scale_shift(ch_sum, ch_sumsq, count, gamma, beta, cp, Cout)

    act = _bn_relu_apply(y, jnp.tile(scale, K * K), jnp.tile(shift, K * K))
    return act[:B].reshape(B, K, K, cp)[..., :Cout]


def _upsample_layer(x, w, gamma, beta, *, epilogue):
    """ConvTranspose2d(Cin, Cout, 4, 2, 1, bias=False) + (BN+ReLU | tanh).

    All four sub-pixel output phases share the same 2x2 input neighborhood, so
    the layer is ONE matmul [N, 4*Cin] @ [4*Cin, 4*Cout_pad] followed by a
    depth-to-space pixel shuffle with a 1-pixel crop on each side."""
    B, H, W, _ = x.shape
    Cout = w.shape[1]
    cp = _round_up(Cout, 32)                     # 4*cp multiple of 128 -> lane dense
    n_real = B * (H + 1) * (W + 1)

    slab = _patch_slab(x)
    w_big = _merged_weight(w, cp)

    if epilogue == "tanh":
        y = _matmul_tanh(slab, w_big)
        return _pixel_shuffle(y[:n_real], B, H, W, cp, Cout)

    y, col_sum, col_sumsq = _matmul_stats(slab, w_big)
    bad_sum, bad_sumsq = _border_correction(y[:n_real], B, H, W, cp)
    count = B * (2 * H) * (2 * W)
    ch_sum = jnp.sum(col_sum.reshape(4, cp) - bad_sum, axis=0)
    ch_sumsq = jnp.sum(col_sumsq.reshape(4, cp) - bad_sumsq, axis=0)
    scale, shift = _bn_scale_shift(ch_sum, ch_sumsq, count, gamma, beta, cp, Cout)

    act = _bn_relu_apply(y, jnp.tile(scale, 4), jnp.tile(shift, 4))
    return _pixel_shuffle(act[:n_real], B, H, W, cp, Cout)


# ---------------------------------------------------------------------------
# Pure-JAX f32 reference
# ---------------------------------------------------------------------------

def _ref_conv_transpose(x, w, stride, padding):
    B, H, W, Cin = x.shape
    K = w.shape[2]
    if stride > 1:
        Hs, Ws = (H - 1) * stride + 1, (W - 1) * stride + 1
        xz = jnp.zeros((B, Hs, Ws, Cin), x.dtype).at[:, ::stride, ::stride, :].set(x)
    else:
        xz = x
    pad = K - 1 - padding
    xp = jnp.pad(xz, ((0, 0), (pad, pad), (pad, pad), (0, 0)))
    w_hwio = jnp.transpose(w[:, :, ::-1, ::-1], (2, 3, 0, 1))     # [K,K,Cin,Cout]
    return lax.conv_general_dilated(xp, w_hwio, (1, 1), "VALID",
                                    dimension_numbers=("NHWC", "HWIO", "NHWC"))


def _ref_bn_relu(y, gamma, beta):
    mean = jnp.mean(y, axis=(0, 1, 2), keepdims=True)
    var = jnp.mean((y - mean) ** 2, axis=(0, 1, 2), keepdims=True)
    y = (y - mean) * lax.rsqrt(var + _EPS)
    y = y * gamma.reshape(1, 1, 1, -1) + beta.reshape(1, 1, 1, -1)
    return jnp.maximum(y, 0.0)


def generator_forward_ref(latent_nchw, params):
    x = jnp.transpose(latent_nchw, (0, 2, 3, 1)).astype(jnp.float32)
    x = _ref_bn_relu(_ref_conv_transpose(x, params["conv1_w"], 1, 0),
                     params["norm1_gamma"], params["norm1_beta"])
    for blk in params["blocks"]:
        x = _ref_bn_relu(_ref_conv_transpose(x, blk["w"], 2, 1),
                         blk["gamma"], blk["beta"])
    y = jnp.tanh(_ref_conv_transpose(x, params["conv_last_w"], 2, 1))
    return jnp.transpose(y, (0, 3, 1, 2))


# ---------------------------------------------------------------------------
# Generator: parameter init + forward
# ---------------------------------------------------------------------------

def init_generator_params(key, img_size):
    """Deterministic parameter init mirroring Generator.__init__ shapes."""
    num = []
    i = int(img_size * 8)
    while len(num) < math.log2(img_size) - math.log2(4) - 1:
        num.append(int(i))
        i /= 2.0

    params = {"num": num}
    key, sub = jax.random.split(key)
    # conv1: ConvTranspose2d(128, num[0], 4, 1, 0, bias=False)
    params["conv1_w"] = 0.05 * jax.random.normal(sub, (128, num[0], 4, 4), jnp.float32)
    params["norm1_gamma"] = jnp.ones((num[0],), jnp.float32)
    params["norm1_beta"] = jnp.zeros((num[0],), jnp.float32)

    blocks = []
    for c in num:
        key, sub = jax.random.split(key)
        blocks.append({
            # Upsample_Block(c): ConvTranspose2d(c, c//2, 4, 2, 1, bias=False)
            "w": 0.05 * jax.random.normal(sub, (c, c // 2, 4, 4), jnp.float32),
            "gamma": jnp.ones((c // 2,), jnp.float32),
            "beta": jnp.zeros((c // 2,), jnp.float32),
        })
    params["blocks"] = blocks

    key, sub = jax.random.split(key)
    # conv_last: ConvTranspose2d(num[-1]//2, 3, 4, 2, 1, bias=False)
    params["conv_last_w"] = 0.05 * jax.random.normal(
        sub, (num[-1] // 2, 3, 4, 4), jnp.float32)
    return params


def generator_forward(latent_nchw, params):
    B = latent_nchw.shape[0]
    latent = latent_nchw.reshape(B, -1).astype(jnp.float32)       # [B, 128]
    # conv1 -> norm1 -> relu
    x = _conv1_layer(latent, params["conv1_w"],
                     params["norm1_gamma"], params["norm1_beta"])
    # upsample blocks
    for blk in params["blocks"]:
        x = _upsample_layer(x, blk["w"], blk["gamma"], blk["beta"],
                            epilogue="bn_relu")
    # conv_last -> tanh
    x = _upsample_layer(x, params["conv_last_w"], None, None, epilogue="tanh")
    return jnp.transpose(x, (0, 3, 1, 2)).astype(jnp.float32)     # NHWC -> NCHW


if __name__ == "__main__":
    img_size = 16   # channel schedule num = [128]; output [B, 3, 16, 16]
    batch = 2

    key = jax.random.PRNGKey(0)
    kp, kl = jax.random.split(key)
    params = init_generator_params(kp, img_size)
    latent = jax.random.normal(kl, (batch, 128, 1, 1), jnp.float32)

    out = jax.jit(lambda z: generator_forward(z, params))(latent)
    out = jax.block_until_ready(out)
    assert out.shape == (batch, 3, img_size, img_size), out.shape

    ref = jax.block_until_ready(generator_forward_ref(latent, params))
    max_err = float(jnp.max(jnp.abs(out - ref)))
    # Pallas path uses bf16 MXU operands and bf16 intermediate activations;
    # the reference is pure f32, so the tolerance is deliberately loosened.
    assert jnp.allclose(out, ref, atol=5e-2, rtol=5e-2), max_err

    print("KERNEL_OK")
</pallas_src>

<mosaic_0001>
module attributes {stable_mosaic.version = 11 : i64} {
  func.func @_matmul_stats_kernel(%arg0: i32, %arg1: memref<16x128xbf16, #tpu.memory_space<vmem>>, %arg2: memref<128x2048xbf16, #tpu.memory_space<vmem>>, %arg3: memref<16x2048xbf16, #tpu.memory_space<vmem>>, %arg4: memref<1x1x2048xf32, #tpu.memory_space<vmem>>, %arg5: memref<1x1x2048xf32, #tpu.memory_space<vmem>>) attributes {dimension_semantics = [#tpu.dimension_semantics<parallel>], iteration_bounds = array<i64: 1>, scalar_prefetch = 0 : i64, scratch_operands = 0 : i64, tpu.core_type = #tpu.core_type<tc>, window_params = [{transform_indices = @transform_0, window_bounds = array<i64: 16, 128>}, {pipeline_mode = #tpu.pipeline_mode<synchronous>, transform_indices = @transform_1, window_bounds = array<i64: 128, 2048>}, {transform_indices = @transform_2, window_bounds = array<i64: 16, 2048>}, {transform_indices = @transform_3, window_bounds = array<i64: 1, 1, 2048>}, {transform_indices = @transform_4, window_bounds = array<i64: 1, 1, 2048>}]} {
    %c0 = arith.constant 0 : index
    %c0_0 = arith.constant 0 : index
    %0 = vector.load %arg1[%c0, %c0_0] : memref<16x128xbf16, #tpu.memory_space<vmem>>, vector<16x128xbf16>
    %c0_1 = arith.constant 0 : index
    %c0_2 = arith.constant 0 : index
    %1 = vector.load %arg2[%c0_1, %c0_2] : memref<128x2048xbf16, #tpu.memory_space<vmem>>, vector<128x2048xbf16>
    %cst = arith.constant dense<0.000000e+00> : vector<16x2048xf32>
    %2 = tpu.matmul %0, %1, %cst {dimension_numbers = #tpu.dot_dimension_numbers<[1], [0], [0], [1], [0, 0, 1, 1], [], []>} : vector<16x128xbf16>, vector<128x2048xbf16>, vector<16x2048xf32> -> vector<16x2048xf32>
    %3 = arith.truncf %2 : vector<16x2048xf32> to vector<16x2048xbf16>
    %c0_3 = arith.constant 0 : index
    %c0_4 = arith.constant 0 : index
    %4 = vector.load %arg3[%c0_3, %c0_4] : memref<16x2048xbf16, #tpu.memory_space<vmem>>, vector<16x2048xbf16>
    tpu.vector_store %arg3[%c0_3, %c0_4], %3 {strides = array<i32>} : memref<16x2048xbf16, #tpu.memory_space<vmem>>, vector<16x2048xbf16>,
    %5 = arith.extf %3 : vector<16x2048xbf16> to vector<16x2048xf32>
    %cst_5 = arith.constant dense<0.000000e+00> : vector<2048xf32>
    %6 = vector.multi_reduction <add>, %5, %cst_5 [0] : vector<16x2048xf32> to vector<2048xf32>
    %7 = vector.shape_cast %6 : vector<2048xf32> to vector<1x2048xf32>
    %8 = vector.shape_cast %7 : vector<1x2048xf32> to vector<1x1x2048xf32>
    %c0_6 = arith.constant 0 : index
    %c0_7 = arith.constant 0 : index
    %c0_8 = arith.constant 0 : index
    %9 = vector.load %arg4[%c0_6, %c0_7, %c0_8] : memref<1x1x2048xf32, #tpu.memory_space<vmem>>, vector<1x1x2048xf32>
    tpu.vector_store %arg4[%c0_6, %c0_7, %c0_8], %8 {strides = array<i32>} : memref<1x1x2048xf32, #tpu.memory_space<vmem>>, vector<1x1x2048xf32>,
    %10 = arith.mulf %5, %5 : vector<16x2048xf32>
    %cst_9 = arith.constant dense<0.000000e+00> : vector<2048xf32>
    %11 = vector.multi_reduction <add>, %10, %cst_9 [0] : vector<16x2048xf32> to vector<2048xf32>
    %12 = vector.shape_cast %11 : vector<2048xf32> to vector<1x2048xf32>
    %13 = vector.shape_cast %12 : vector<1x2048xf32> to vector<1x1x2048xf32>
    %c0_10 = arith.constant 0 : index
    %c0_11 = arith.constant 0 : index
    %c0_12 = arith.constant 0 : index
    %14 = vector.load %arg5[%c0_10, %c0_11, %c0_12] : memref<1x1x2048xf32, #tpu.memory_space<vmem>>, vector<1x1x2048xf32>
    tpu.vector_store %arg5[%c0_10, %c0_11, %c0_12], %13 {strides = array<i32>} : memref<1x1x2048xf32, #tpu.memory_space<vmem>>, vector<1x1x2048xf32>,
    return
  }
  func.func @transform_0(%arg0: i32) -> (i32, i32) {
    %c0_i32 = arith.constant 0 : i32
    %c0_i32_0 = arith.constant 0 : i32
    return %arg0, %c0_i32 : i32, i32
  }
  func.func @transform_1(%arg0: i32) -> (i32, i32) {
    %c0_i32 = arith.constant 0 : i32
    %c0_i32_0 = arith.constant 0 : i32
    %c0_i32_1 = arith.constant 0 : i32
    return %c0_i32, %c0_i32_0 : i32, i32
  }
  func.func @transform_2(%arg0: i32) -> (i32, i32) {
    %c0_i32 = arith.constant 0 : i32
    %c0_i32_0 = arith.constant 0 : i32
    return %arg0, %c0_i32 : i32, i32
  }
  func.func @transform_3(%arg0: i32) -> (i32, i32, i32) {
    %c0_i32 = arith.constant 0 : i32
    %c0_i32_0 = arith.constant 0 : i32
    %c0_i32_1 = arith.constant 0 : i32
    return %arg0, %c0_i32, %c0_i32_0 : i32, i32, i32
  }
  func.func @transform_4(%arg0: i32) -> (i32, i32, i32) {
    %c0_i32 = arith.constant 0 : i32
    %c0_i32_0 = arith.constant 0 : i32
    %c0_i32_1 = arith.constant 0 : i32
    return %arg0, %c0_i32, %c0_i32_0 : i32, i32, i32
  }
}

module attributes {stable_mosaic.version = 11 : i64} {
  func.func @_bn_relu_kernel(%arg0: i32, %arg1: memref<16x2048xbf16, #tpu.memory_space<vmem>>, %arg2: memref<1x2048xf32, #tpu.memory_space<vmem>>, %arg3: memref<1x2048xf32, #tpu.memory_space<vmem>>, %arg4: memref<16x2048xbf16, #tpu.memory_space<vmem>>) attributes {dimension_semantics = [#tpu.dimension_semantics<parallel>], iteration_bounds = array<i64: 1>, scalar_prefetch = 0 : i64, scratch_operands = 0 : i64, tpu.core_type = #tpu.core_type<tc>, window_params = [{transform_indices = @transform_0, window_bounds = array<i64: 16, 2048>}, {pipeline_mode = #tpu.pipeline_mode<synchronous>, transform_indices = @transform_1, window_bounds = array<i64: 1, 2048>}, {pipeline_mode = #tpu.pipeline_mode<synchronous>, transform_indices = @transform_2, window_bounds = array<i64: 1, 2048>}, {transform_indices = @transform_3, window_bounds = array<i64: 16, 2048>}]} {
    %c0 = arith.constant 0 : index
    %c0_0 = arith.constant 0 : index
    %0 = vector.load %arg1[%c0, %c0_0] : memref<16x2048xbf16, #tpu.memory_space<vmem>>, vector<16x2048xbf16>
    %1 = arith.extf %0 : vector<16x2048xbf16> to vector<16x2048xf32>
    %c0_1 = arith.constant 0 : index
    %c0_2 = arith.constant 0 : index
    %2 = vector.load %arg2[%c0_1, %c0_2] : memref<1x2048xf32, #tpu.memory_space<vmem>>, vector<1x2048xf32>
    %3 = vector.broadcast %2 : vector<1x2048xf32> to vector<16x2048xf32>
    %4 = arith.mulf %1, %3 : vector<16x2048xf32>
    %c0_3 = arith.constant 0 : index
    %c0_4 = arith.constant 0 : index
    %5 = vector.load %arg3[%c0_3, %c0_4] : memref<1x2048xf32, #tpu.memory_space<vmem>>, vector<1x2048xf32>
    %6 = vector.broadcast %5 : vector<1x2048xf32> to vector<16x2048xf32>
    %7 = arith.addf %4, %6 : vector<16x2048xf32>
    %cst = arith.constant 0.000000e+00 : f32
    %8 = vector.broadcast %cst : f32 to vector<16x2048xf32>
    %9 = arith.maximumf %7, %8 : vector<16x2048xf32>
    %10 = arith.truncf %9 : vector<16x2048xf32> to vector<16x2048xbf16>
    %c0_5 = arith.constant 0 : index
    %c0_6 = arith.constant 0 : index
    %11 = vector.load %arg4[%c0_5, %c0_6] : memref<16x2048xbf16, #tpu.memory_space<vmem>>, vector<16x2048xbf16>
    tpu.vector_store %arg4[%c0_5, %c0_6], %10 {strides = array<i32>} : memref<16x2048xbf16, #tpu.memory_space<vmem>>, vector<16x2048xbf16>,
    return
  }
  func.func @transform_0(%arg0: i32) -> (i32, i32) {
    %c0_i32 = arith.constant 0 : i32
    %c0_i32_0 = arith.constant 0 : i32
    return %arg0, %c0_i32 : i32, i32
  }
  func.func @transform_1(%arg0: i32) -> (i32, i32) {
    %c0_i32 = arith.constant 0 : i32
    %c0_i32_0 = arith.constant 0 : i32
    %c0_i32_1 = arith.constant 0 : i32
    return %c0_i32, %c0_i32_0 : i32, i32
  }
  func.func @transform_2(%arg0: i32) -> (i32, i32) {
    %c0_i32 = arith.constant 0 : i32
    %c0_i32_0 = arith.constant 0 : i32
    %c0_i32_1 = arith.constant 0 : i32
    return %c0_i32, %c0_i32_0 : i32, i32
  }
  func.func @transform_3(%arg0: i32) -> (i32, i32) {
    %c0_i32 = arith.constant 0 : i32
    %c0_i32_0 = arith.constant 0 : i32
    return %arg0, %c0_i32 : i32, i32
  }
}

module attributes {stable_mosaic.version = 11 : i64} {
  func.func @_matmul_stats_kernel(%arg0: i32, %arg1: memref<32x512xbf16, #tpu.memory_space<vmem>>, %arg2: memref<512x256xbf16, #tpu.memory_space<vmem>>, %arg3: memref<32x256xbf16, #tpu.memory_space<vmem>>, %arg4: memref<1x1x256xf32, #tpu.memory_space<vmem>>, %arg5: memref<1x1x256xf32, #tpu.memory_space<vmem>>) attributes {dimension_semantics = [#tpu.dimension_semantics<parallel>], iteration_bounds = array<i64: 2>, scalar_prefetch = 0 : i64, scratch_operands = 0 : i64, tpu.core_type = #tpu.core_type<tc>, window_params = [{transform_indices = @transform_0, window_bounds = array<i64: 32, 512>}, {pipeline_mode = #tpu.pipeline_mode<synchronous>, transform_indices = @transform_1, window_bounds = array<i64: 512, 256>}, {transform_indices = @transform_2, window_bounds = array<i64: 32, 256>}, {transform_indices = @transform_3, window_bounds = array<i64: 1, 1, 256>}, {transform_indices = @transform_4, window_bounds = array<i64: 1, 1, 256>}]} {
    %c0 = arith.constant 0 : index
    %c0_0 = arith.constant 0 : index
    %0 = vector.load %arg1[%c0, %c0_0] : memref<32x512xbf16, #tpu.memory_space<vmem>>, vector<32x512xbf16>
    %c0_1 = arith.constant 0 : index
    %c0_2 = arith.constant 0 : index
    %1 = vector.load %arg2[%c0_1, %c0_2] : memref<512x256xbf16, #tpu.memory_space<vmem>>, vector<512x256xbf16>
    %cst = arith.constant dense<0.000000e+00> : vector<32x256xf32>
    %2 = tpu.matmul %0, %1, %cst {dimension_numbers = #tpu.dot_dimension_numbers<[1], [0], [0], [1], [0, 0, 1, 1], [], []>} : vector<32x512xbf16>, vector<512x256xbf16>, vector<32x256xf32> -> vector<32x256xf32>
    %3 = arith.truncf %2 : vector<32x256xf32> to vector<32x256xbf16>
    %c0_3 = arith.constant 0 : index
    %c0_4 = arith.constant 0 : index
    %4 = vector.load %arg3[%c0_3, %c0_4] : memref<32x256xbf16, #tpu.memory_space<vmem>>, vector<32x256xbf16>
    tpu.vector_store %arg3[%c0_3, %c0_4], %3 {strides = array<i32>} : memref<32x256xbf16, #tpu.memory_space<vmem>>, vector<32x256xbf16>,
    %5 = arith.extf %3 : vector<32x256xbf16> to vector<32x256xf32>
    %cst_5 = arith.constant dense<0.000000e+00> : vector<256xf32>
    %6 = vector.multi_reduction <add>, %5, %cst_5 [0] : vector<32x256xf32> to vector<256xf32>
    %7 = vector.shape_cast %6 : vector<256xf32> to vector<1x256xf32>
    %8 = vector.shape_cast %7 : vector<1x256xf32> to vector<1x1x256xf32>
    %c0_6 = arith.constant 0 : index
    %c0_7 = arith.constant 0 : index
    %c0_8 = arith.constant 0 : index
    %9 = vector.load %arg4[%c0_6, %c0_7, %c0_8] : memref<1x1x256xf32, #tpu.memory_space<vmem>>, vector<1x1x256xf32>
    tpu.vector_store %arg4[%c0_6, %c0_7, %c0_8], %8 {strides = array<i32>} : memref<1x1x256xf32, #tpu.memory_space<vmem>>, vector<1x1x256xf32>,
    %10 = arith.mulf %5, %5 : vector<32x256xf32>
    %cst_9 = arith.constant dense<0.000000e+00> : vector<256xf32>
    %11 = vector.multi_reduction <add>, %10, %cst_9 [0] : vector<32x256xf32> to vector<256xf32>
    %12 = vector.shape_cast %11 : vector<256xf32> to vector<1x256xf32>
    %13 = vector.shape_cast %12 : vector<1x256xf32> to vector<1x1x256xf32>
    %c0_10 = arith.constant 0 : index
    %c0_11 = arith.constant 0 : index
    %c0_12 = arith.constant 0 : index
    %14 = vector.load %arg5[%c0_10, %c0_11, %c0_12] : memref<1x1x256xf32, #tpu.memory_space<vmem>>, vector<1x1x256xf32>
    tpu.vector_store %arg5[%c0_10, %c0_11, %c0_12], %13 {strides = array<i32>} : memref<1x1x256xf32, #tpu.memory_space<vmem>>, vector<1x1x256xf32>,
    return
  }
  func.func @transform_0(%arg0: i32) -> (i32, i32) {
    %c0_i32 = arith.constant 0 : i32
    %c0_i32_0 = arith.constant 0 : i32
    return %arg0, %c0_i32 : i32, i32
  }
  func.func @transform_1(%arg0: i32) -> (i32, i32) {
    %c0_i32 = arith.constant 0 : i32
    %c0_i32_0 = arith.constant 0 : i32
    %c0_i32_1 = arith.constant 0 : i32
    return %c0_i32, %c0_i32_0 : i32, i32
  }
  func.func @transform_2(%arg0: i32) -> (i32, i32) {
    %c0_i32 = arith.constant 0 : i32
    %c0_i32_0 = arith.constant 0 : i32
    return %arg0, %c0_i32 : i32, i32
  }
  func.func @transform_3(%arg0: i32) -> (i32, i32, i32) {
    %c0_i32 = arith.constant 0 : i32
    %c0_i32_0 = arith.constant 0 : i32
    %c0_i32_1 = arith.constant 0 : i32
    return %arg0, %c0_i32, %c0_i32_0 : i32, i32, i32
  }
  func.func @transform_4(%arg0: i32) -> (i32, i32, i32) {
    %c0_i32 = arith.constant 0 : i32
    %c0_i32_0 = arith.constant 0 : i32
    %c0_i32_1 = arith.constant 0 : i32
    return %arg0, %c0_i32, %c0_i32_0 : i32, i32, i32
  }
}

module attributes {stable_mosaic.version = 11 : i64} {
  func.func @_bn_relu_kernel(%arg0: i32, %arg1: memref<32x256xbf16, #tpu.memory_space<vmem>>, %arg2: memref<1x256xf32, #tpu.memory_space<vmem>>, %arg3: memref<1x256xf32, #tpu.memory_space<vmem>>, %arg4: memref<32x256xbf16, #tpu.memory_space<vmem>>) attributes {dimension_semantics = [#tpu.dimension_semantics<parallel>], iteration_bounds = array<i64: 2>, scalar_prefetch = 0 : i64, scratch_operands = 0 : i64, tpu.core_type = #tpu.core_type<tc>, window_params = [{transform_indices = @transform_0, window_bounds = array<i64: 32, 256>}, {pipeline_mode = #tpu.pipeline_mode<synchronous>, transform_indices = @transform_1, window_bounds = array<i64: 1, 256>}, {pipeline_mode = #tpu.pipeline_mode<synchronous>, transform_indices = @transform_2, window_bounds = array<i64: 1, 256>}, {transform_indices = @transform_3, window_bounds = array<i64: 32, 256>}]} {
    %c0 = arith.constant 0 : index
    %c0_0 = arith.constant 0 : index
    %0 = vector.load %arg1[%c0, %c0_0] : memref<32x256xbf16, #tpu.memory_space<vmem>>, vector<32x256xbf16>
    %1 = arith.extf %0 : vector<32x256xbf16> to vector<32x256xf32>
    %c0_1 = arith.constant 0 : index
    %c0_2 = arith.constant 0 : index
    %2 = vector.load %arg2[%c0_1, %c0_2] : memref<1x256xf32, #tpu.memory_space<vmem>>, vector<1x256xf32>
    %3 = vector.broadcast %2 : vector<1x256xf32> to vector<32x256xf32>
    %4 = arith.mulf %1, %3 : vector<32x256xf32>
    %c0_3 = arith.constant 0 : index
    %c0_4 = arith.constant 0 : index
    %5 = vector.load %arg3[%c0_3, %c0_4] : memref<1x256xf32, #tpu.memory_space<vmem>>, vector<1x256xf32>
    %6 = vector.broadcast %5 : vector<1x256xf32> to vector<32x256xf32>
    %7 = arith.addf %4, %6 : vector<32x256xf32>
    %cst = arith.constant 0.000000e+00 : f32
    %8 = vector.broadcast %cst : f32 to vector<32x256xf32>
    %9 = arith.maximumf %7, %8 : vector<32x256xf32>
    %10 = arith.truncf %9 : vector<32x256xf32> to vector<32x256xbf16>
    %c0_5 = arith.constant 0 : index
    %c0_6 = arith.constant 0 : index
    %11 = vector.load %arg4[%c0_5, %c0_6] : memref<32x256xbf16, #tpu.memory_space<vmem>>, vector<32x256xbf16>
    tpu.vector_store %arg4[%c0_5, %c0_6], %10 {strides = array<i32>} : memref<32x256xbf16, #tpu.memory_space<vmem>>, vector<32x256xbf16>,
    return
  }
  func.func @transform_0(%arg0: i32) -> (i32, i32) {
    %c0_i32 = arith.constant 0 : i32
    %c0_i32_0 = arith.constant 0 : i32
    return %arg0, %c0_i32 : i32, i32
  }
  func.func @transform_1(%arg0: i32) -> (i32, i32) {
    %c0_i32 = arith.constant 0 : i32
    %c0_i32_0 = arith.constant 0 : i32
    %c0_i32_1 = arith.constant 0 : i32
    return %c0_i32, %c0_i32_0 : i32, i32
  }
  func.func @transform_2(%arg0: i32) -> (i32, i32) {
    %c0_i32 = arith.constant 0 : i32
    %c0_i32_0 = arith.constant 0 : i32
    %c0_i32_1 = arith.constant 0 : i32
    return %c0_i32, %c0_i32_0 : i32, i32
  }
  func.func @transform_3(%arg0: i32) -> (i32, i32) {
    %c0_i32 = arith.constant 0 : i32
    %c0_i32_0 = arith.constant 0 : i32
    return %arg0, %c0_i32 : i32, i32
  }
}

module attributes {stable_mosaic.version = 11 : i64} {
  func.func @_matmul_tanh_kernel(%arg0: i32, %arg1: memref<96x256xbf16, #tpu.memory_space<vmem>>, %arg2: memref<256x128xbf16, #tpu.memory_space<vmem>>, %arg3: memref<96x128xbf16, #tpu.memory_space<vmem>>) attributes {dimension_semantics = [#tpu.dimension_semantics<parallel>], iteration_bounds = array<i64: 2>, scalar_prefetch = 0 : i64, scratch_operands = 0 : i64, tpu.core_type = #tpu.core_type<tc>, window_params = [{transform_indices = @transform_0, window_bounds = array<i64: 96, 256>}, {pipeline_mode = #tpu.pipeline_mode<synchronous>, transform_indices = @transform_1, window_bounds = array<i64: 256, 128>}, {transform_indices = @transform_2, window_bounds = array<i64: 96, 128>}]} {
    %c0 = arith.constant 0 : index
    %c0_0 = arith.constant 0 : index
    %0 = vector.load %arg1[%c0, %c0_0] : memref<96x256xbf16, #tpu.memory_space<vmem>>, vector<96x256xbf16>
    %c0_1 = arith.constant 0 : index
    %c0_2 = arith.constant 0 : index
    %1 = vector.load %arg2[%c0_1, %c0_2] : memref<256x128xbf16, #tpu.memory_space<vmem>>, vector<256x128xbf16>
    %cst = arith.constant dense<0.000000e+00> : vector<96x128xf32>
    %2 = tpu.matmul %0, %1, %cst {dimension_numbers = #tpu.dot_dimension_numbers<[1], [0], [0], [1], [0, 0, 1, 1], [], []>} : vector<96x256xbf16>, vector<256x128xbf16>, vector<96x128xf32> -> vector<96x128xf32>
    %3 = math.tanh %2 : vector<96x128xf32>
    %4 = arith.truncf %3 : vector<96x128xf32> to vector<96x128xbf16>
    %c0_3 = arith.constant 0 : index
    %c0_4 = arith.constant 0 : index
    %5 = vector.load %arg3[%c0_3, %c0_4] : memref<96x128xbf16, #tpu.memory_space<vmem>>, vector<96x128xbf16>
    tpu.vector_store %arg3[%c0_3, %c0_4], %4 {strides = array<i32>} : memref<96x128xbf16, #tpu.memory_space<vmem>>, vector<96x128xbf16>,
    return
  }
  func.func @transform_0(%arg0: i32) -> (i32, i32) {
    %c0_i32 = arith.constant 0 : i32
    %c0_i32_0 = arith.constant 0 : i32
    return %arg0, %c0_i32 : i32, i32
  }
  func.func @transform_1(%arg0: i32) -> (i32, i32) {
    %c0_i32 = arith.constant 0 : i32
    %c0_i32_0 = arith.constant 0 : i32
    %c0_i32_1 = arith.constant 0 : i32
    return %c0_i32, %c0_i32_0 : i32, i32
  }
  func.func @transform_2(%arg0: i32) -> (i32, i32) {
    %c0_i32 = arith.constant 0 : i32
    %c0_i32_0 = arith.constant 0 : i32
    return %arg0, %c0_i32 : i32, i32
  }
}

</mosaic_0001>

<llo_original>
// kernel: tile.27
$region0: #{tile.27}
  #allocation0 [shape = 's32[1]{0}', space=sflag, size = 0x4, scoped, tag = 'scoped memory for tile.27']
  %s0 = inlined_call_operand.vmem [shape: f32[128], index: 0, kind: input, shape index: {}]
  %s1 = inlined_call_operand.vmem [shape: f32[16,128], index: 1, kind: output, shape index: {}]
  // Predicated region
  $region2: #{tile.27} parent=0 // pred_check
    _
  $region3: #{tile.27} parent=0 // pred_check_branch
    %3 = sbr.rel (0) target = $region5
  $region4: #{tile.27} parent=0 // pred_region
    _
  $region5: #{tile.27} parent=0 // pred_fallthru
    _
  %v4 = vld [vmem:[%s0] ss:$0 sm:$0xff]
  %5 = vst [vmem:[%s1] sm:$0xff] %v4
  %s6 = scalar_lea.vmem %s1, 8
  %7 = vst [vmem:[%s6] sm:$0xff] %v4

// kernel: _lambda_.6
$region0: #{_lambda_.6}
  #allocation0 [shape = 'u32[]', space=smem, size = 0x4, offset = 0x4, fixed_abs, tag = 'smem constant byte address 0x4 - core index']
  #allocation1 [shape = 'u32[144,128]{1,0:T(1,128)}', space=vmem, size = 0x12000, scoped, tag = 'internal scratch']
  %s0 = inlined_call_operand.vmem [shape: bf16[16,2048], index: 0, kind: input, shape index: {}]
  %s1 = inlined_call_operand.vmem [shape: f32[1,2048], index: 1, kind: input, shape index: {}]
  %s2 = inlined_call_operand.vmem [shape: f32[1,2048], index: 2, kind: input, shape index: {}]
  %s3 = inlined_call_operand.vmem [shape: bf16[16,2048], index: 3, kind: output, shape index: {}]
  %s4 = sld [smem:[#allocation0]]
  $region22: #{_lambda_.6} parent=0
    _
  %s6 = ssub.s32 1, %s4
  %s7 = scalar_select 0, %s6, %s4
  // Predicated region
  $region2: #{_lambda_.6} parent=0 // pred_check
    _
  $region3: #{_lambda_.6} parent=0 // pred_check_branch
    %9 = sbr.rel (0) target = $region5
  $region4: #{_lambda_.6} parent=0 // pred_region
    _
  $region5: #{_lambda_.6} parent=0 // pred_fallthru
    _
  // Predicated region
  $region6: #{_lambda_.6} parent=0 // pred_check
    _
  $region7: #{_lambda_.6} parent=0 // pred_check_branch
    %11 = sbr.rel (0) target = $region9
  $region8: #{_lambda_.6} parent=0 // pred_region
    _
  $region9: #{_lambda_.6} parent=0 // pred_fallthru
    _
  // Predicated region
  $region10: #{_lambda_.6} parent=0 // pred_check
    _
  $region11: #{_lambda_.6} parent=0 // pred_check_branch
    %13 = sbr.rel (0) target = $region13
  $region12: #{_lambda_.6} parent=0 // pred_region
    _
  $region13: #{_lambda_.6} parent=0 // pred_fallthru
    _
  %v14 = vld [vmem:[%s0] sm:$0xff]
  %v15 = vld [vmem:[%s0 + $0x8] sm:$0xff]
  %v16 = vld [vmem:[%s0 + $0x10] sm:$0xff]
  %v17 = vld [vmem:[%s0 + $0x18] sm:$0xff]
  %v18 = vld [vmem:[%s0 + $0x20] sm:$0xff]
  %v19 = vld [vmem:[%s0 + $0x28] sm:$0xff]
  %v20 = vld [vmem:[%s0 + $0x30] sm:$0xff]
  %v21 = vld [vmem:[%s0 + $0x38] sm:$0xff]
  %v22 = vld [vmem:[%s0 + $0x40] sm:$0xff]
  %v23 = vld [vmem:[%s0 + $0x48] sm:$0xff]
  %v24 = vld [vmem:[%s0 + $0x50] sm:$0xff]
  %v25 = vld [vmem:[%s0 + $0x58] sm:$0xff]
  %v26 = vld [vmem:[%s0 + $0x60] sm:$0xff]
  %v27 = vld [vmem:[%s0 + $0x68] sm:$0xff]
  %v28 = vld [vmem:[%s0 + $0x70] sm:$0xff]
  %v29 = vld [vmem:[%s0 + $0x78] sm:$0xff]
  %v30 = vunpack.c.l.bf16 %v14
  %v31 = vunpack.c.h.bf16 %v14
  %v32 = vunpack.c.l.bf16 %v15
  %v33 = vunpack.c.h.bf16 %v15
  %v34 = vunpack.c.l.bf16 %v16
  %v35 = vunpack.c.h.bf16 %v16
  %v36 = vunpack.c.l.bf16 %v17
  %v37 = vunpack.c.h.bf16 %v17
  %v38 = vunpack.c.l.bf16 %v18
  %v39 = vunpack.c.h.bf16 %v18
  %v40 = vunpack.c.l.bf16 %v19
  %v41 = vunpack.c.h.bf16 %v19
  %v42 = vunpack.c.l.bf16 %v20
  %v43 = vunpack.c.h.bf16 %v20
  %v44 = vunpack.c.l.bf16 %v21
  %v45 = vunpack.c.h.bf16 %v21
  %v46 = vunpack.c.l.bf16 %v22
  %v47 = vunpack.c.h.bf16 %v22
  %v48 = vunpack.c.l.bf16 %v23
  %v49 = vunpack.c.h.bf16 %v23
  %v50 = vunpack.c.l.bf16 %v24
  %v51 = vunpack.c.h.bf16 %v24
  %v52 = vunpack.c.l.bf16 %v25
  %v53 = vunpack.c.h.bf16 %v25
  %v54 = vunpack.c.l.bf16 %v26
  %v55 = vunpack.c.h.bf16 %v26
  %v56 = vunpack.c.l.bf16 %v27
  %v57 = vunpack.c.h.bf16 %v27
  %v58 = vunpack.c.l.bf16 %v28
  %v59 = vunpack.c.h.bf16 %v28
  %v60 = vunpack.c.l.bf16 %v29
  %v61 = vunpack.c.h.bf16 %v29
  %v62 = vld [vmem:[%s1] sm:$0xff]
  %v63 = vld [vmem:[%s1 + $0x8] sm:$0xff]
  %v66 = vlaneseq
  %v67 = vshrl.u32 %v66, 7
  %v68 = vsub.s32 0, %v67
  %v69 = vrot.slane %v62, %v68
  %v70 = vlaneseq
  %v71 = vshrl.u32 %v70, 7
  %v72 = vsub.s32 1, %v71
  %v73 = vrot.slane %v62, %v72
  %v74 = vlaneseq
  %v75 = vshrl.u32 %v74, 7
  %v76 = vsub.s32 2, %v75
  %v77 = vrot.slane %v62, %v76
  %v78 = vlaneseq
  %v79 = vshrl.u32 %v78, 7
  %v80 = vsub.s32 3, %v79
  %v81 = vrot.slane %v62, %v80
  %v82 = vlaneseq
  %v83 = vshrl.u32 %v82, 7
  %v84 = vsub.s32 4, %v83
  %v85 = vrot.slane %v62, %v84
  %v86 = vlaneseq
  %v87 = vshrl.u32 %v86, 7
  %v88 = vsub.s32 5, %v87
  %v89 = vrot.slane %v62, %v88
  %v90 = vlaneseq
  %v91 = vshrl.u32 %v90, 7
  %v92 = vsub.s32 6, %v91
  %v93 = vrot.slane %v62, %v92
  %v94 = vlaneseq
  %v95 = vshrl.u32 %v94, 7
  %v96 = vsub.s32 7, %v95
  %v97 = vrot.slane %v62, %v96
  %v98 = vlaneseq
  %v99 = vshrl.u32 %v98, 7
  %v100 = vsub.s32 0, %v99
  %v101 = vrot.slane %v63, %v100
  %v102 = vlaneseq
  %v103 = vshrl.u32 %v102, 7
  %v104 = vsub.s32 1, %v103
  %v105 = vrot.slane %v63, %v104
  %v106 = vlaneseq
  %v107 = vshrl.u32 %v106, 7
  %v108 = vsub.s32 2, %v107
  %v109 = vrot.slane %v63, %v108
  %v110 = vlaneseq
  %v111 = vshrl.u32 %v110, 7
  %v112 = vsub.s32 3, %v111
  %v113 = vrot.slane %v63, %v112
  %v114 = vlaneseq
  %v115 = vshrl.u32 %v114, 7
  %v116 = vsub.s32 4, %v115
  %v117 = vrot.slane %v63, %v116
  %v118 = vlaneseq
  %v119 = vshrl.u32 %v118, 7
  %v120 = vsub.s32 5, %v119
  %v121 = vrot.slane %v63, %v120
  %v122 = vlaneseq
  %v123 = vshrl.u32 %v122, 7
  %v124 = vsub.s32 6, %v123
  %v125 = vrot.slane %v63, %v124
  %v126 = vlaneseq
  %v127 = vshrl.u32 %v126, 7
  %v128 = vsub.s32 7, %v127
  %v129 = vrot.slane %v63, %v128
  %v146 = vmul.f32 %v30, %v69
  %v147 = vmul.f32 %v31, %v73
  %v148 = vmul.f32 %v32, %v77
  %v149 = vmul.f32 %v33, %v81
  %v150 = vmul.f32 %v34, %v85
  %v151 = vmul.f32 %v35, %v89
  %v152 = vmul.f32 %v36, %v93
  %v153 = vmul.f32 %v37, %v97
  %v154 = vmul.f32 %v38, %v101
  %v155 = vmul.f32 %v39, %v105
  %v156 = vmul.f32 %v40, %v109
  %v157 = vmul.f32 %v41, %v113
  %v158 = vmul.f32 %v42, %v117
  %v159 = vmul.f32 %v43, %v121
  %v160 = vmul.f32 %v44, %v125
  %v161 = vmul.f32 %v45, %v129
  %v162 = vmul.f32 %v46, %v69
  %v163 = vmul.f32 %v47, %v73
  %v164 = vmul.f32 %v48, %v77
  %v165 = vmul.f32 %v49, %v81
  %v166 = vmul.f32 %v50, %v85
  %v167 = vmul.f32 %v51, %v89
  %v168 = vmul.f32 %v52, %v93
  %v169 = vmul.f32 %v53, %v97
  %v170 = vmul.f32 %v54, %v101
  %v171 = vmul.f32 %v55, %v105
  %v172 = vmul.f32 %v56, %v109
  %v173 = vmul.f32 %v57, %v113
  %v174 = vmul.f32 %v58, %v117
  %v175 = vmul.f32 %v59, %v121
  %v176 = vmul.f32 %v60, %v125
  %v177 = vmul.f32 %v61, %v129
  %v178 = vld [vmem:[%s2] sm:$0xff]
  %v179 = vld [vmem:[%s2 + $0x8] sm:$0xff]
  %v182 = vlaneseq
  %v183 = vshrl.u32 %v182, 7
  %v184 = vsub.s32 0, %v183
  %v185 = vrot.slane %v178, %v184
  %v186 = vlaneseq
  %v187 = vshrl.u32 %v186, 7
  %v188 = vsub.s32 1, %v187
  %v189 = vrot.slane %v178, %v188
  %v190 = vlaneseq
  %v191 = vshrl.u32 %v190, 7
  %v192 = vsub.s32 2, %v191
  %v193 = vrot.slane %v178, %v192
  %v194 = vlaneseq
  %v195 = vshrl.u32 %v194, 7
  %v196 = vsub.s32 3, %v195
  %v197 = vrot.slane %v178, %v196
  %v198 = vlaneseq
  %v199 = vshrl.u32 %v198, 7
  %v200 = vsub.s32 4, %v199
  %v201 = vrot.slane %v178, %v200
  %v202 = vlaneseq
  %v203 = vshrl.u32 %v202, 7
  %v204 = vsub.s32 5, %v203
  %v205 = vrot.slane %v178, %v204
  %v206 = vlaneseq
  %v207 = vshrl.u32 %v206, 7
  %v208 = vsub.s32 6, %v207
  %v209 = vrot.slane %v178, %v208
  %v210 = vlaneseq
  %v211 = vshrl.u32 %v210, 7
  %v212 = vsub.s32 7, %v211
  %v213 = vrot.slane %v178, %v212
  %v214 = vlaneseq
  %v215 = vshrl.u32 %v214, 7
  %v216 = vsub.s32 0, %v215
  %v217 = vrot.slane %v179, %v216
  %v218 = vlaneseq
  %v219 = vshrl.u32 %v218, 7
  %v220 = vsub.s32 1, %v219
  %v221 = vrot.slane %v179, %v220
  %v222 = vlaneseq
  %v223 = vshrl.u32 %v222, 7
  %v224 = vsub.s32 2, %v223
  %v225 = vrot.slane %v179, %v224
  %v226 = vlaneseq
  %v227 = vshrl.u32 %v226, 7
  %v228 = vsub.s32 3, %v227
  %v229 = vrot.slane %v179, %v228
  %v230 = vlaneseq
  %v231 = vshrl.u32 %v230, 7
  %v232 = vsub.s32 4, %v231
  %v233 = vrot.slane %v179, %v232
  %v234 = vlaneseq
  %v235 = vshrl.u32 %v234, 7
  %v236 = vsub.s32 5, %v235
  %v237 = vrot.slane %v179, %v236
  %v238 = vlaneseq
  %v239 = vshrl.u32 %v238, 7
  %v240 = vsub.s32 6, %v239
  %v241 = vrot.slane %v179, %v240
  %v242 = vlaneseq
  %v243 = vshrl.u32 %v242, 7
  %v244 = vsub.s32 7, %v243
  %v245 = vrot.slane %v179, %v244
  %v262 = vadd.f32 %v146, %v185
  %v263 = vadd.f32 %v147, %v189
  %v264 = vadd.f32 %v148, %v193
  %v265 = vadd.f32 %v149, %v197
  %v266 = vadd.f32 %v150, %v201
  %v267 = vadd.f32 %v151, %v205
  %v268 = vadd.f32 %v152, %v209
  %v269 = vadd.f32 %v153, %v213
  %v270 = vadd.f32 %v154, %v217
  %v271 = vadd.f32 %v155, %v221
  %v272 = vadd.f32 %v156, %v225
  %v273 = vadd.f32 %v157, %v229
  %v274 = vadd.f32 %v158, %v233
  %v275 = vadd.f32 %v159, %v237
  %v276 = vadd.f32 %v160, %v241
  %v277 = vadd.f32 %v161, %v245
  %v278 = vadd.f32 %v162, %v185
  %v279 = vadd.f32 %v163, %v189
  %v280 = vadd.f32 %v164, %v193
  %v281 = vadd.f32 %v165, %v197
  %v282 = vadd.f32 %v166, %v201
  %v283 = vadd.f32 %v167, %v205
  %v284 = vadd.f32 %v168, %v209
  %v285 = vadd.f32 %v169, %v213
  %v286 = vadd.f32 %v170, %v217
  %v287 = vadd.f32 %v171, %v221
  %v288 = vadd.f32 %v172, %v225
  %v289 = vadd.f32 %v173, %v229
  %v290 = vadd.f32 %v174, %v233
  %v291 = vadd.f32 %v175, %v237
  %v292 = vadd.f32 %v176, %v241
  %v293 = vadd.f32 %v177, %v245
  %v294 = vmax.f32 %v262, 0.0
  %v295 = vmax.f32 %v263, 0.0
  %v296 = vmax.f32 %v264, 0.0
  %v297 = vmax.f32 %v265, 0.0
  %v298 = vmax.f32 %v266, 0.0
  %v299 = vmax.f32 %v267, 0.0
  %v300 = vmax.f32 %v268, 0.0
  %v301 = vmax.f32 %v269, 0.0
  %v302 = vmax.f32 %v270, 0.0
  %v303 = vmax.f32 %v271, 0.0
  %v304 = vmax.f32 %v272, 0.0
  %v305 = vmax.f32 %v273, 0.0
  %v306 = vmax.f32 %v274, 0.0
  %v307 = vmax.f32 %v275, 0.0
  %v308 = vmax.f32 %v276, 0.0
  %v309 = vmax.f32 %v277, 0.0
  %v310 = vmax.f32 %v278, 0.0
  %v311 = vmax.f32 %v279, 0.0
  %v312 = vmax.f32 %v280, 0.0
  %v313 = vmax.f32 %v281, 0.0
  %v314 = vmax.f32 %v282, 0.0
  %v315 = vmax.f32 %v283, 0.0
  %v316 = vmax.f32 %v284, 0.0
  %v317 = vmax.f32 %v285, 0.0
  %v318 = vmax.f32 %v286, 0.0
  %v319 = vmax.f32 %v287, 0.0
  %v320 = vmax.f32 %v288, 0.0
  %v321 = vmax.f32 %v289, 0.0
  %v322 = vmax.f32 %v290, 0.0
  %v323 = vmax.f32 %v291, 0.0
  %v324 = vmax.f32 %v292, 0.0
  %v325 = vmax.f32 %v293, 0.0
  %v326 = vpack.c.bf16 %v310, %v294
  %v327 = vpack.c.bf16 %v311, %v295
  %v328 = vpack.c.bf16 %v312, %v296
  %v329 = vpack.c.bf16 %v313, %v297
  %v330 = vpack.c.bf16 %v314, %v298
  %v331 = vpack.c.bf16 %v315, %v299
  %v332 = vpack.c.bf16 %v316, %v300
  %v333 = vpack.c.bf16 %v317, %v301
  %v334 = vpack.c.bf16 %v318, %v302
  %v335 = vpack.c.bf16 %v319, %v303
  %v336 = vpack.c.bf16 %v320, %v304
  %v337 = vpack.c.bf16 %v321, %v305
  %v338 = vpack.c.bf16 %v322, %v306
  %v339 = vpack.c.bf16 %v323, %v307
  %v340 = vpack.c.bf16 %v324, %v308
  %v341 = vpack.c.bf16 %v325, %v309
  %v358 = vunpack.c.l.b16 %v326
  %v359 = vunpack.c.l.b16 %v327
  %v360 = vunpack.c.l.b16 %v328
  %v361 = vunpack.c.l.b16 %v329
  %v362 = vunpack.c.l.b16 %v330
  %v363 = vunpack.c.l.b16 %v331
  %v364 = vunpack.c.l.b16 %v332
  %v365 = vunpack.c.l.b16 %v333
  %v366 = vunpack.c.l.b16 %v334
  %v367 = vunpack.c.l.b16 %v335
  %v368 = vunpack.c.l.b16 %v336
  %v369 = vunpack.c.l.b16 %v337
  %v370 = vunpack.c.l.b16 %v338
  %v371 = vunpack.c.l.b16 %v339
  %v372 = vunpack.c.l.b16 %v340
  %v373 = vunpack.c.l.b16 %v341
  %v374 = vunpack.c.h.b16 %v326
  %v375 = vunpack.c.h.b16 %v327
  %v376 = vunpack.c.h.b16 %v328
  %v377 = vunpack.c.h.b16 %v329
  %v378 = vunpack.c.h.b16 %v330
  %v379 = vunpack.c.h.b16 %v331
  %v380 = vunpack.c.h.b16 %v332
  %v381 = vunpack.c.h.b16 %v333
  %v382 = vunpack.c.h.b16 %v334
  %v383 = vunpack.c.h.b16 %v335
  %v384 = vunpack.c.h.b16 %v336
  %v385 = vunpack.c.h.b16 %v337
  %v386 = vunpack.c.h.b16 %v338
  %v387 = vunpack.c.h.b16 %v339
  %v388 = vunpack.c.h.b16 %v340
  %v389 = vunpack.c.h.b16 %v341
  %v390 = vpack.c.b16 %v359, %v358
  %v391 = vpack.c.b16 %v361, %v360
  %v392 = vpack.c.b16 %v363, %v362
  %v393 = vpack.c.b16 %v365, %v364
  %v394 = vpack.c.b16 %v367, %v366
  %v395 = vpack.c.b16 %v369, %v368
  %v396 = vpack.c.b16 %v371, %v370
  %v397 = vpack.c.b16 %v373, %v372
  %v398 = vpack.c.b16 %v375, %v374
  %v399 = vpack.c.b16 %v377, %v376
  %v400 = vpack.c.b16 %v379, %v378
  %v401 = vpack.c.b16 %v381, %v380
  %v402 = vpack.c.b16 %v383, %v382
  %v403 = vpack.c.b16 %v385, %v384
  %v404 = vpack.c.b16 %v387, %v386
  %v405 = vpack.c.b16 %v389, %v388
  %422 = vst [vmem:[%s3] sm:$0xff] %v390
  %423 = vst [vmem:[%s3 + $0x8] sm:$0xff] %v391
  %424 = vst [vmem:[%s3 + $0x10] sm:$0xff] %v392
  %425 = vst [vmem:[%s3 + $0x18] sm:$0xff] %v393
  %426 = vst [vmem:[%s3 + $0x20] sm:$0xff] %v394
  %427 = vst [vmem:[%s3 + $0x28] sm:$0xff] %v395
  %428 = vst [vmem:[%s3 + $0x30] sm:$0xff] %v396
  %429 = vst [vmem:[%s3 + $0x38] sm:$0xff] %v397
  %430 = vst [vmem:[%s3 + $0x40] sm:$0xff] %v398
  %431 = vst [vmem:[%s3 + $0x48] sm:$0xff] %v399
  %432 = vst [vmem:[%s3 + $0x50] sm:$0xff] %v400
  %433 = vst [vmem:[%s3 + $0x58] sm:$0xff] %v401
  %434 = vst [vmem:[%s3 + $0x60] sm:$0xff] %v402
  %435 = vst [vmem:[%s3 + $0x68] sm:$0xff] %v403
  %436 = vst [vmem:[%s3 + $0x70] sm:$0xff] %v404
  %437 = vst [vmem:[%s3 + $0x78] sm:$0xff] %v405
  // Predicated region
  $region14: #{_lambda_.6} parent=0 // pred_check
    _
  $region15: #{_lambda_.6} parent=0 // pred_check_branch
    %439 = sbr.rel (0) target = $region17
  $region16: #{_lambda_.6} parent=0 // pred_region
    _
  $region17: #{_lambda_.6} parent=0 // pred_fallthru
    _
  // Predicated region
  $region18: #{_lambda_.6} parent=0 // pred_check
    _
  $region19: #{_lambda_.6} parent=0 // pred_check_branch
    %441 = sbr.rel (0) target = $region21
  $region20: #{_lambda_.6} parent=0 // pred_region
    _
  $region21: #{_lambda_.6} parent=0 // pred_fallthru
    _

// kernel: _lambda_.5
$region0: #{_lambda_.5}
  #allocation0 [shape = 'u32[]', space=smem, size = 0x4, offset = 0x4, fixed_abs, tag = 'smem constant byte address 0x4 - core index']
  #allocation1 [shape = 'u32[144,128]{1,0:T(1,128)}', space=vmem, size = 0x12000, scoped, tag = 'internal scratch']
  %s0 = inlined_call_operand.vmem [shape: bf16[16,128], index: 0, kind: input, shape index: {}]
  %s1 = inlined_call_operand.hbm [shape: bf16[128,2048], index: 1, kind: input, shape index: {}]
  %s2 = inlined_call_operand.vmem [shape: bf16[16,2048], index: 2, kind: output, shape index: {0}]
  %s3 = inlined_call_operand.vmem [shape: f32[1,1,2048], index: 3, kind: output, shape index: {1}]
  %s4 = inlined_call_operand.vmem [shape: f32[1,1,2048], index: 4, kind: output, shape index: {2}]
  %5 = xla_tuple %s2, %s3, %s4
  %s6 = sld [smem:[#allocation0]]
  $region38: #{_lambda_.5} parent=0
    _
  %s8 = ssub.s32 1, %s6
  %s9 = scalar_select 0, %s8, %s6
  $region1: #{_lambda_.5} parent=0
    #allocation2 [shape = 'u8[524288]{0}', space=vmem, size = 0x80000, scoped, tag = 'input window, operand 1, single buffered']
    #allocation3 [shape = 's32[1]{0}', space=sflag, size = 0x4, scoped, tag = 'scoped memory for _lambda_.5']
    %10 = vsyncpa [#allocation3], 0
    // Predicated region
    $region2: #{_lambda_.5} parent=1 // pred_check
      _
    $region3: #{_lambda_.5} parent=1 // pred_check_branch
      %12 = sbr.rel (0) target = $region5
    $region4: #{_lambda_.5} parent=1 // pred_region
      _
    $region5: #{_lambda_.5} parent=1 // pred_fallthru
      _
    // Predicated region
    $region6: #{_lambda_.5} parent=1 // pred_check
      _
    $region7: #{_lambda_.5} parent=1 // pred_check_branch
      %14 = sbr.rel (0) target = $region9
    $region8: #{_lambda_.5} parent=1 // pred_region
      %s16 = ssub.s32 16384, 16384
      %17 = vsyncadd [#allocation3], %s16
      %s18 = sshll.u32 [#allocation2], 4
      %s19 = int_to_ptr.vmem [resolvable:$true] %s18
      %24 = dma.hbm_to_vmem [thread:$0]  %s1, 16384, %s19, [#allocation3], 1024, 1024, 64
    $region9: #{_lambda_.5} parent=1 // pred_fallthru
      _
    // Predicated region
    $region10: #{_lambda_.5} parent=1 // pred_check
      _
    $region11: #{_lambda_.5} parent=1 // pred_check_branch
      %26 = sbr.rel (0) target = $region13
    $region12: #{_lambda_.5} parent=1 // pred_region
      %27 = dma.done [#allocation3], 16384
    $region13: #{_lambda_.5} parent=1 // pred_fallthru
      _
    %v29 = vld [vmem:[%s0] sm:$0xf]
    %v30 = vld [vmem:[%s0 + $0x4] sm:$0xf]
    %v31 = vld [vmem:[#allocation2] sm:$0xff]
    %v32 = vld [vmem:[#allocation2 + $0x8] sm:$0xff]
    %v33 = vld [vmem:[#allocation2 + $0x10] sm:$0xff]
    %v34 = vld [vmem:[#allocation2 + $0x18] sm:$0xff]
    %v35 = vld [vmem:[#allocation2 + $0x20] sm:$0xff]
    %v36 = vld [vmem:[#allocation2 + $0x28] sm:$0xff]
    %v37 = vld [vmem:[#allocation2 + $0x30] sm:$0xff]
    %v38 = vld [vmem:[#allocation2 + $0x38] sm:$0xff]
    %v39 = vld [vmem:[#allocation2 + $0x40] sm:$0xff]
    %v40 = vld [vmem:[#allocation2 + $0x48] sm:$0xff]
    %v41 = vld [vmem:[#allocation2 + $0x50] sm:$0xff]
    %v42 = vld [vmem:[#allocation2 + $0x58] sm:$0xff]
    %v43 = vld [vmem:[#allocation2 + $0x60] sm:$0xff]
    %v44 = vld [vmem:[#allocation2 + $0x68] sm:$0xff]
    %v45 = vld [vmem:[#allocation2 + $0x70] sm:$0xff]
    %v46 = vld [vmem:[#allocation2 + $0x78] sm:$0xff]
    %v47 = vld [vmem:[#allocation2 + $0x80] sm:$0xff]
    %v48 = vld [vmem:[#allocation2 + $0x88] sm:$0xff]
    %v49 = vld [vmem:[#allocation2 + $0x90] sm:$0xff]
    %v50 = vld [vmem:[#allocation2 + $0x98] sm:$0xff]
    %v51 = vld [vmem:[#allocation2 + $0xa0] sm:$0xff]
    %v52 = vld [vmem:[#allocation2 + $0xa8] sm:$0xff]
    %v53 = vld [vmem:[#allocation2 + $0xb0] sm:$0xff]
    %v54 = vld [vmem:[#allocation2 + $0xb8] sm:$0xff]
    %v55 = vld [vmem:[#allocation2 + $0xc0] sm:$0xff]
    %v56 = vld [vmem:[#allocation2 + $0xc8] sm:$0xff]
    %v57 = vld [vmem:[#allocation2 + $0xd0] sm:$0xff]
    %v58 = vld [vmem:[#allocation2 + $0xd8] sm:$0xff]
    %v59 = vld [vmem:[#allocation2 + $0xe0] sm:$0xff]
    %v60 = vld [vmem:[#allocation2 + $0xe8] sm:$0xff]
    %v61 = vld [vmem:[#allocation2 + $0xf0] sm:$0xff]
    %v62 = vld [vmem:[#allocation2 + $0xf8] sm:$0xff]
    %v63 = vld [vmem:[#allocation2 + $0x100] sm:$0xff]
    %v64 = vld [vmem:[#allocation2 + $0x108] sm:$0xff]
    %v65 = vld [vmem:[#allocation2 + $0x110] sm:$0xff]
    %v66 = vld [vmem:[#allocation2 + $0x118] sm:$0xff]
    %v67 = vld [vmem:[#allocation2 + $0x120] sm:$0xff]
    %v68 = vld [vmem:[#allocation2 + $0x128] sm:$0xff]
    %v69 = vld [vmem:[#allocation2 + $0x130] sm:$0xff]
    %v70 = vld [vmem:[#allocation2 + $0x138] sm:$0xff]
    %v71 = vld [vmem:[#allocation2 + $0x140] sm:$0xff]
    %v72 = vld [vmem:[#allocation2 + $0x148] sm:$0xff]
    %v73 = vld [vmem:[#allocation2 + $0x150] sm:$0xff]
    %v74 = vld [vmem:[#allocation2 + $0x158] sm:$0xff]
    %v75 = vld [vmem:[#allocation2 + $0x160] sm:$0xff]
    %v76 = vld [vmem:[#allocation2 + $0x168] sm:$0xff]
    %v77 = vld [vmem:[#allocation2 + $0x170] sm:$0xff]
    %v78 = vld [vmem:[#allocation2 + $0x178] sm:$0xff]
    %v79 = vld [vmem:[#allocation2 + $0x180] sm:$0xff]
    %v80 = vld [vmem:[#allocation2 + $0x188] sm:$0xff]
    %v81 = vld [vmem:[#allocation2 + $0x190] sm:$0xff]
    %v82 = vld [vmem:[#allocation2 + $0x198] sm:$0xff]
    %v83 = vld [vmem:[#allocation2 + $0x1a0] sm:$0xff]
    %v84 = vld [vmem:[#allocation2 + $0x1a8] sm:$0xff]
    %v85 = vld [vmem:[#allocation2 + $0x1b0] sm:$0xff]
    %v86 = vld [vmem:[#allocation2 + $0x1b8] sm:$0xff]
    %v87 = vld [vmem:[#allocation2 + $0x1c0] sm:$0xff]
    %v88 = vld [vmem:[#allocation2 + $0x1c8] sm:$0xff]
    %v89 = vld [vmem:[#allocation2 + $0x1d0] sm:$0xff]
    %v90 = vld [vmem:[#allocation2 + $0x1d8] sm:$0xff]
    %v91 = vld [vmem:[#allocation2 + $0x1e0] sm:$0xff]
    %v92 = vld [vmem:[#allocation2 + $0x1e8] sm:$0xff]
    %v93 = vld [vmem:[#allocation2 + $0x1f0] sm:$0xff]
    %v94 = vld [vmem:[#allocation2 + $0x1f8] sm:$0xff]
    %v95 = vld [vmem:[#allocation2 + $0x200] sm:$0xff]
    %v96 = vld [vmem:[#allocation2 + $0x208] sm:$0xff]
    %v97 = vld [vmem:[#allocation2 + $0x210] sm:$0xff]
    %v98 = vld [vmem:[#allocation2 + $0x218] sm:$0xff]
    %v99 = vld [vmem:[#allocation2 + $0x220] sm:$0xff]
    %v100 = vld [vmem:[#allocation2 + $0x228] sm:$0xff]
    %v101 = vld [vmem:[#allocation2 + $0x230] sm:$0xff]
    %v102 = vld [vmem:[#allocation2 + $0x238] sm:$0xff]
    %v103 = vld [vmem:[#allocation2 + $0x240] sm:$0xff]
    %v104 = vld [vmem:[#allocation2 + $0x248] sm:$0xff]
    %v105 = vld [vmem:[#allocation2 + $0x250] sm:$0xff]
    %v106 = vld [vmem:[#allocation2 + $0x258] sm:$0xff]
    %v107 = vld [vmem:[#allocation2 + $0x260] sm:$0xff]
    %v108 = vld [vmem:[#allocation2 + $0x268] sm:$0xff]
    %v109 = vld [vmem:[#allocation2 + $0x270] sm:$0xff]
    %v110 = vld [vmem:[#allocation2 + $0x278] sm:$0xff]
    %v111 = vld [vmem:[#allocation2 + $0x280] sm:$0xff]
    %v112 = vld [vmem:[#allocation2 + $0x288] sm:$0xff]
    %v113 = vld [vmem:[#allocation2 + $0x290] sm:$0xff]
    %v114 = vld [vmem:[#allocation2 + $0x298] sm:$0xff]
    %v115 = vld [vmem:[#allocation2 + $0x2a0] sm:$0xff]
    %v116 = vld [vmem:[#allocation2 + $0x2a8] sm:$0xff]
    %v117 = vld [vmem:[#allocation2 + $0x2b0] sm:$0xff]
    %v118 = vld [vmem:[#allocation2 + $0x2b8] sm:$0xff]
    %v119 = vld [vmem:[#allocation2 + $0x2c0] sm:$0xff]
    %v120 = vld [vmem:[#allocation2 + $0x2c8] sm:$0xff]
    %v121 = vld [vmem:[#allocation2 + $0x2d0] sm:$0xff]
    %v122 = vld [vmem:[#allocation2 + $0x2d8] sm:$0xff]
    %v123 = vld [vmem:[#allocation2 + $0x2e0] sm:$0xff]
    %v124 = vld [vmem:[#allocation2 + $0x2e8] sm:$0xff]
    %v125 = vld [vmem:[#allocation2 + $0x2f0] sm:$0xff]
    %v126 = vld [vmem:[#allocation2 + $0x2f8] sm:$0xff]
    %v127 = vld [vmem:[#allocation2 + $0x300] sm:$0xff]
    %v128 = vld [vmem:[#allocation2 + $0x308] sm:$0xff]
    %v129 = vld [vmem:[#allocation2 + $0x310] sm:$0xff]
    %v130 = vld [vmem:[#allocation2 + $0x318] sm:$0xff]
    %v131 = vld [vmem:[#allocation2 + $0x320] sm:$0xff]
    %v132 = vld [vmem:[#allocation2 + $0x328] sm:$0xff]
    %v133 = vld [vmem:[#allocation2 + $0x330] sm:$0xff]
    %v134 = vld [vmem:[#allocation2 + $0x338] sm:$0xff]
    %v135 = vld [vmem:[#allocation2 + $0x340] sm:$0xff]
    %v136 = vld [vmem:[#allocation2 + $0x348] sm:$0xff]
    %v137 = vld [vmem:[#allocation2 + $0x350] sm:$0xff]
    %v138 = vld [vmem:[#allocation2 + $0x358] sm:$0xff]
    %v139 = vld [vmem:[#allocation2 + $0x360] sm:$0xff]
    %v140 = vld [vmem:[#allocation2 + $0x368] sm:$0xff]
    %v141 = vld [vmem:[#allocation2 + $0x370] sm:$0xff]
    %v142 = vld [vmem:[#allocation2 + $0x378] sm:$0xff]
    %v143 = vld [vmem:[#allocation2 + $0x380] sm:$0xff]
    %v144 = vld [vmem:[#allocation2 + $0x388] sm:$0xff]
    %v145 = vld [vmem:[#allocation2 + $0x390] sm:$0xff]
    %v146 = vld [vmem:[#allocation2 + $0x398] sm:$0xff]
    %v147 = vld [vmem:[#allocation2 + $0x3a0] sm:$0xff]
    %v148 = vld [vmem:[#allocation2 + $0x3a8] sm:$0xff]
    %v149 = vld [vmem:[#allocation2 + $0x3b0] sm:$0xff]
    %v150 = vld [vmem:[#allocation2 + $0x3b8] sm:$0xff]
    %v151 = vld [vmem:[#allocation2 + $0x3c0] sm:$0xff]
    %v152 = vld [vmem:[#allocation2 + $0x3c8] sm:$0xff]
    %v153 = vld [vmem:[#allocation2 + $0x3d0] sm:$0xff]
    %v154 = vld [vmem:[#allocation2 + $0x3d8] sm:$0xff]
    %v155 = vld [vmem:[#allocation2 + $0x3e0] sm:$0xff]
    %v156 = vld [vmem:[#allocation2 + $0x3e8] sm:$0xff]
    %v157 = vld [vmem:[#allocation2 + $0x3f0] sm:$0xff]
    %v158 = vld [vmem:[#allocation2 + $0x3f8] sm:$0xff]
    %v161 = vunpack.c.l.b16 %v29
    %v162 = vunpack.c.l.b16 %v30
    %v163 = vpack.c.b16 %v162, %v161
    %v293 = vunpack.c.l.b16 %v31
    %v294 = vunpack.c.h.b16 %v31
    %v295 = vunpack.c.l.b16 %v32
    %v296 = vunpack.c.h.b16 %v32
    %v297 = vunpack.c.l.b16 %v33
    %v298 = vunpack.c.h.b16 %v33
    %v299 = vunpack.c.l.b16 %v34
    %v300 = vunpack.c.h.b16 %v34
    %v301 = vunpack.c.l.b16 %v35
    %v302 = vunpack.c.h.b16 %v35
    %v303 = vunpack.c.l.b16 %v36
    %v304 = vunpack.c.h.b16 %v36
    %v305 = vunpack.c.l.b16 %v37
    %v306 = vunpack.c.h.b16 %v37
    %v307 = vunpack.c.l.b16 %v38
    %v308 = vunpack.c.h.b16 %v38
    %v309 = vunpack.c.l.b16 %v39
    %v310 = vunpack.c.h.b16 %v39
    %v311 = vunpack.c.l.b16 %v40
    %v312 = vunpack.c.h.b16 %v40
    %v313 = vunpack.c.l.b16 %v41
    %v314 = vunpack.c.h.b16 %v41
    %v315 = vunpack.c.l.b16 %v42
    %v316 = vunpack.c.h.b16 %v42
    %v317 = vunpack.c.l.b16 %v43
    %v318 = vunpack.c.h.b16 %v43
    %v319 = vunpack.c.l.b16 %v44
    %v320 = vunpack.c.h.b16 %v44
    %v321 = vunpack.c.l.b16 %v45
    %v322 = vunpack.c.h.b16 %v45
    %v323 = vunpack.c.l.b16 %v46
    %v324 = vunpack.c.h.b16 %v46
    %v325 = vunpack.c.l.b16 %v47
    %v326 = vunpack.c.h.b16 %v47
    %v327 = vunpack.c.l.b16 %v48
    %v328 = vunpack.c.h.b16 %v48
    %v329 = vunpack.c.l.b16 %v49
    %v330 = vunpack.c.h.b16 %v49
    %v331 = vunpack.c.l.b16 %v50
    %v332 = vunpack.c.h.b16 %v50
    %v333 = vunpack.c.l.b16 %v51
    %v334 = vunpack.c.h.b16 %v51
    %v335 = vunpack.c.l.b16 %v52
    %v336 = vunpack.c.h.b16 %v52
    %v337 = vunpack.c.l.b16 %v53
    %v338 = vunpack.c.h.b16 %v53
    %v339 = vunpack.c.l.b16 %v54
    %v340 = vunpack.c.h.b16 %v54
    %v341 = vunpack.c.l.b16 %v55
    %v342 = vunpack.c.h.b16 %v55
    %v343 = vunpack.c.l.b16 %v56
    %v344 = vunpack.c.h.b16 %v56
    %v345 = vunpack.c.l.b16 %v57
    %v346 = vunpack.c.h.b16 %v57
    %v347 = vunpack.c.l.b16 %v58
    %v348 = vunpack.c.h.b16 %v58
    %v349 = vunpack.c.l.b16 %v59
    %v350 = vunpack.c.h.b16 %v59
    %v351 = vunpack.c.l.b16 %v60
    %v352 = vunpack.c.h.b16 %v60
    %v353 = vunpack.c.l.b16 %v61
    %v354 = vunpack.c.h.b16 %v61
    %v355 = vunpack.c.l.b16 %v62
    %v356 = vunpack.c.h.b16 %v62
    %v357 = vunpack.c.l.b16 %v63
    %v358 = vunpack.c.h.b16 %v63
    %v359 = vunpack.c.l.b16 %v64
    %v360 = vunpack.c.h.b16 %v64
    %v361 = vunpack.c.l.b16 %v65
    %v362 = vunpack.c.h.b16 %v65
    %v363 = vunpack.c.l.b16 %v66
    %v364 = vunpack.c.h.b16 %v66
    %v365 = vunpack.c.l.b16 %v67
    %v366 = vunpack.c.h.b16 %v67
    %v367 = vunpack.c.l.b16 %v68
    %v368 = vunpack.c.h.b16 %v68
    %v369 = vunpack.c.l.b16 %v69
    %v370 = vunpack.c.h.b16 %v69
    %v371 = vunpack.c.l.b16 %v70
    %v372 = vunpack.c.h.b16 %v70
    %v373 = vunpack.c.l.b16 %v71
    %v374 = vunpack.c.h.b16 %v71
    %v375 = vunpack.c.l.b16 %v72
    %v376 = vunpack.c.h.b16 %v72
    %v377 = vunpack.c.l.b16 %v73
    %v378 = vunpack.c.h.b16 %v73
    %v379 = vunpack.c.l.b16 %v74
    %v380 = vunpack.c.h.b16 %v74
    %v381 = vunpack.c.l.b16 %v75
    %v382 = vunpack.c.h.b16 %v75
    %v383 = vunpack.c.l.b16 %v76
    %v384 = vunpack.c.h.b16 %v76
    %v385 = vunpack.c.l.b16 %v77
    %v386 = vunpack.c.h.b16 %v77
    %v387 = vunpack.c.l.b16 %v78
    %v388 = vunpack.c.h.b16 %v78
    %v389 = vunpack.c.l.b16 %v79
    %v390 = vunpack.c.h.b16 %v79
    %v391 = vunpack.c.l.b16 %v80
    %v392 = vunpack.c.h.b16 %v80
    %v393 = vunpack.c.l.b16 %v81
    %v394 = vunpack.c.h.b16 %v81
    %v395 = vunpack.c.l.b16 %v82
    %v396 = vunpack.c.h.b16 %v82
    %v397 = vunpack.c.l.b16 %v83
    %v398 = vunpack.c.h.b16 %v83
    %v399 = vunpack.c.l.b16 %v84
    %v400 = vunpack.c.h.b16 %v84
    %v401 = vunpack.c.l.b16 %v85
    %v402 = vunpack.c.h.b16 %v85
    %v403 = vunpack.c.l.b16 %v86
    %v404 = vunpack.c.h.b16 %v86
    %v405 = vunpack.c.l.b16 %v87
    %v406 = vunpack.c.h.b16 %v87
    %v407 = vunpack.c.l.b16 %v88
    %v408 = vunpack.c.h.b16 %v88
    %v409 = vunpack.c.l.b16 %v89
    %v410 = vunpack.c.h.b16 %v89
    %v411 = vunpack.c.l.b16 %v90
    %v412 = vunpack.c.h.b16 %v90
    %v413 = vunpack.c.l.b16 %v91
    %v414 = vunpack.c.h.b16 %v91
    %v415 = vunpack.c.l.b16 %v92
    %v416 = vunpack.c.h.b16 %v92
    %v417 = vunpack.c.l.b16 %v93
    %v418 = vunpack.c.h.b16 %v93
    %v419 = vunpack.c.l.b16 %v94
    %v420 = vunpack.c.h.b16 %v94
    %v421 = vunpack.c.l.b16 %v95
    %v422 = vunpack.c.h.b16 %v95
    %v423 = vunpack.c.l.b16 %v96
    %v424 = vunpack.c.h.b16 %v96
    %v425 = vunpack.c.l.b16 %v97
    %v426 = vunpack.c.h.b16 %v97
    %v427 = vunpack.c.l.b16 %v98
    %v428 = vunpack.c.h.b16 %v98
    %v429 = vunpack.c.l.b16 %v99
    %v430 = vunpack.c.h.b16 %v99
    %v431 = vunpack.c.l.b16 %v100
    %v432 = vunpack.c.h.b16 %v100
    %v433 = vunpack.c.l.b16 %v101
    %v434 = vunpack.c.h.b16 %v101
    %v435 = vunpack.c.l.b16 %v102
    %v436 = vunpack.c.h.b16 %v102
    %v437 = vunpack.c.l.b16 %v103
    %v438 = vunpack.c.h.b16 %v103
    %v439 = vunpack.c.l.b16 %v104
    %v440 = vunpack.c.h.b16 %v104
    %v441 = vunpack.c.l.b16 %v105
    %v442 = vunpack.c.h.b16 %v105
    %v443 = vunpack.c.l.b16 %v106
    %v444 = vunpack.c.h.b16 %v106
    %v445 = vunpack.c.l.b16 %v107
    %v446 = vunpack.c.h.b16 %v107
    %v447 = vunpack.c.l.b16 %v108
    %v448 = vunpack.c.h.b16 %v108
    %v449 = vunpack.c.l.b16 %v109
    %v450 = vunpack.c.h.b16 %v109
    %v451 = vunpack.c.l.b16 %v110
    %v452 = vunpack.c.h.b16 %v110
    %v453 = vunpack.c.l.b16 %v111
    %v454 = vunpack.c.h.b16 %v111
    %v455 = vunpack.c.l.b16 %v112
    %v456 = vunpack.c.h.b16 %v112
    %v457 = vunpack.c.l.b16 %v113
    %v458 = vunpack.c.h.b16 %v113
    %v459 = vunpack.c.l.b16 %v114
    %v460 = vunpack.c.h.b16 %v114
    %v461 = vunpack.c.l.b16 %v115
    %v462 = vunpack.c.h.b16 %v115
    %v463 = vunpack.c.l.b16 %v116
    %v464 = vunpack.c.h.b16 %v116
    %v465 = vunpack.c.l.b16 %v117
    %v466 = vunpack.c.h.b16 %v117
    %v467 = vunpack.c.l.b16 %v118
    %v468 = vunpack.c.h.b16 %v118
    %v469 = vunpack.c.l.b16 %v119
    %v470 = vunpack.c.h.b16 %v119
    %v471 = vunpack.c.l.b16 %v120
    %v472 = vunpack.c.h.b16 %v120
    %v473 = vunpack.c.l.b16 %v121
    %v474 = vunpack.c.h.b16 %v121
    %v475 = vunpack.c.l.b16 %v122
    %v476 = vunpack.c.h.b16 %v122
    %v477 = vunpack.c.l.b16 %v123
    %v478 = vunpack.c.h.b16 %v123
    %v479 = vunpack.c.l.b16 %v124
    %v480 = vunpack.c.h.b16 %v124
    %v481 = vunpack.c.l.b16 %v125
    %v482 = vunpack.c.h.b16 %v125
    %v483 = vunpack.c.l.b16 %v126
    %v484 = vunpack.c.h.b16 %v126
    %v485 = vunpack.c.l.b16 %v127
    %v486 = vunpack.c.h.b16 %v127
    %v487 = vunpack.c.l.b16 %v128
    %v488 = vunpack.c.h.b16 %v128
    %v489 = vunpack.c.l.b16 %v129
    %v490 = vunpack.c.h.b16 %v129
    %v491 = vunpack.c.l.b16 %v130
    %v492 = vunpack.c.h.b16 %v130
    %v493 = vunpack.c.l.b16 %v131
    %v494 = vunpack.c.h.b16 %v131
    %v495 = vunpack.c.l.b16 %v132
    %v496 = vunpack.c.h.b16 %v132
    %v497 = vunpack.c.l.b16 %v133
    %v498 = vunpack.c.h.b16 %v133
    %v499 = vunpack.c.l.b16 %v134
    %v500 = vunpack.c.h.b16 %v134
    %v501 = vunpack.c.l.b16 %v135
    %v502 = vunpack.c.h.b16 %v135
    %v503 = vunpack.c.l.b16 %v136
    %v504 = vunpack.c.h.b16 %v136
    %v505 = vunpack.c.l.b16 %v137
    %v506 = vunpack.c.h.b16 %v137
    %v507 = vunpack.c.l.b16 %v138
    %v508 = vunpack.c.h.b16 %v138
    %v509 = vunpack.c.l.b16 %v139
    %v510 = vunpack.c.h.b16 %v139
    %v511 = vunpack.c.l.b16 %v140
    %v512 = vunpack.c.h.b16 %v140
    %v513 = vunpack.c.l.b16 %v141
    %v514 = vunpack.c.h.b16 %v141
    %v515 = vunpack.c.l.b16 %v142
    %v516 = vunpack.c.h.b16 %v142
    %v517 = vunpack.c.l.b16 %v143
    %v518 = vunpack.c.h.b16 %v143
    %v519 = vunpack.c.l.b16 %v144
    %v520 = vunpack.c.h.b16 %v144
    %v521 = vunpack.c.l.b16 %v145
    %v522 = vunpack.c.h.b16 %v145
    %v523 = vunpack.c.l.b16 %v146
    %v524 = vunpack.c.h.b16 %v146
    %v525 = vunpack.c.l.b16 %v147
    %v526 = vunpack.c.h.b16 %v147
    %v527 = vunpack.c.l.b16 %v148
    %v528 = vunpack.c.h.b16 %v148
    %v529 = vunpack.c.l.b16 %v149
    %v530 = vunpack.c.h.b16 %v149
    %v531 = vunpack.c.l.b16 %v150
    %v532 = vunpack.c.h.b16 %v150
    %v533 = vunpack.c.l.b16 %v151
    %v534 = vunpack.c.h.b16 %v151
    %v535 = vunpack.c.l.b16 %v152
    %v536 = vunpack.c.h.b16 %v152
    %v537 = vunpack.c.l.b16 %v153
    %v538 = vunpack.c.h.b16 %v153
    %v539 = vunpack.c.l.b16 %v154
    %v540 = vunpack.c.h.b16 %v154
    %v541 = vunpack.c.l.b16 %v155
    %v542 = vunpack.c.h.b16 %v155
    %v543 = vunpack.c.l.b16 %v156
    %v544 = vunpack.c.h.b16 %v156
    %v545 = vunpack.c.l.b16 %v157
    %v546 = vunpack.c.h.b16 %v157
    %v547 = vunpack.c.l.b16 %v158
    %v548 = vunpack.c.h.b16 %v158
    %v549 = vpack.c.b16 %v309, %v293
    %v550 = vpack.c.b16 %v310, %v294
    %v551 = vpack.c.b16 %v311, %v295
    %v552 = vpack.c.b16 %v312, %v296
    %v553 = vpack.c.b16 %v313, %v297
    %v554 = vpack.c.b16 %v314, %v298
    %v555 = vpack.c.b16 %v315, %v299
    %v556 = vpack.c.b16 %v316, %v300
    %v557 = vpack.c.b16 %v317, %v301
    %v558 = vpack.c.b16 %v318, %v302
    %v559 = vpack.c.b16 %v319, %v303
    %v560 = vpack.c.b16 %v320, %v304
    %v561 = vpack.c.b16 %v321, %v305
    %v562 = vpack.c.b16 %v322, %v306
    %v563 = vpack.c.b16 %v323, %v307
    %v564 = vpack.c.b16 %v324, %v308
    %v565 = vpack.c.b16 %v341, %v325
    %v566 = vpack.c.b16 %v342, %v326
    %v567 = vpack.c.b16 %v343, %v327
    %v568 = vpack.c.b16 %v344, %v328
    %v569 = vpack.c.b16 %v345, %v329
    %v570 = vpack.c.b16 %v346, %v330
    %v571 = vpack.c.b16 %v347, %v331
    %v572 = vpack.c.b16 %v348, %v332
    %v573 = vpack.c.b16 %v349, %v333
    %v574 = vpack.c.b16 %v350, %v334
    %v575 = vpack.c.b16 %v351, %v335
    %v576 = vpack.c.b16 %v352, %v336
    %v577 = vpack.c.b16 %v353, %v337
    %v578 = vpack.c.b16 %v354, %v338
    %v579 = vpack.c.b16 %v355, %v339
    %v580 = vpack.c.b16 %v356, %v340
    %v581 = vpack.c.b16 %v373, %v357
    %v582 = vpack.c.b16 %v374, %v358
    %v583 = vpack.c.b16 %v375, %v359
    %v584 = vpack.c.b16 %v376, %v360
    %v585 = vpack.c.b16 %v377, %v361
    %v586 = vpack.c.b16 %v378, %v362
    %v587 = vpack.c.b16 %v379, %v363
    %v588 = vpack.c.b16 %v380, %v364
    %v589 = vpack.c.b16 %v381, %v365
    %v590 = vpack.c.b16 %v382, %v366
    %v591 = vpack.c.b16 %v383, %v367
    %v592 = vpack.c.b16 %v384, %v368
    %v593 = vpack.c.b16 %v385, %v369
    %v594 = vpack.c.b16 %v386, %v370
    %v595 = vpack.c.b16 %v387, %v371
    %v596 = vpack.c.b16 %v388, %v372
    %v597 = vpack.c.b16 %v405, %v389
    %v598 = vpack.c.b16 %v406, %v390
    %v599 = vpack.c.b16 %v407, %v391
    %v600 = vpack.c.b16 %v408, %v392
    %v601 = vpack.c.b16 %v409, %v393
    %v602 = vpack.c.b16 %v410, %v394
    %v603 = vpack.c.b16 %v411, %v395
    %v604 = vpack.c.b16 %v412, %v396
    %v605 = vpack.c.b16 %v413, %v397
    %v606 = vpack.c.b16 %v414, %v398
    %v607 = vpack.c.b16 %v415, %v399
    %v608 = vpack.c.b16 %v416, %v400
    %v609 = vpack.c.b16 %v417, %v401
    %v610 = vpack.c.b16 %v418, %v402
    %v611 = vpack.c.b16 %v419, %v403
    %v612 = vpack.c.b16 %v420, %v404
    %v613 = vpack.c.b16 %v437, %v421
    %v614 = vpack.c.b16 %v438, %v422
    %v615 = vpack.c.b16 %v439, %v423
    %v616 = vpack.c.b16 %v440, %v424
    %v617 = vpack.c.b16 %v441, %v425
    %v618 = vpack.c.b16 %v442, %v426
    %v619 = vpack.c.b16 %v443, %v427
    %v620 = vpack.c.b16 %v444, %v428
    %v621 = vpack.c.b16 %v445, %v429
    %v622 = vpack.c.b16 %v446, %v430
    %v623 = vpack.c.b16 %v447, %v431
    %v624 = vpack.c.b16 %v448, %v432
    %v625 = vpack.c.b16 %v449, %v433
    %v626 = vpack.c.b16 %v450, %v434
    %v627 = vpack.c.b16 %v451, %v435
    %v628 = vpack.c.b16 %v452, %v436
    %v629 = vpack.c.b16 %v469, %v453
    %v630 = vpack.c.b16 %v470, %v454
    %v631 = vpack.c.b16 %v471, %v455
    %v632 = vpack.c.b16 %v472, %v456
    %v633 = vpack.c.b16 %v473, %v457
    %v634 = vpack.c.b16 %v474, %v458
    %v635 = vpack.c.b16 %v475, %v459
    %v636 = vpack.c.b16 %v476, %v460
    %v637 = vpack.c.b16 %v477, %v461
    %v638 = vpack.c.b16 %v478, %v462
    %v639 = vpack.c.b16 %v479, %v463
    %v640 = vpack.c.b16 %v480, %v464
    %v641 = vpack.c.b16 %v481, %v465
    %v642 = vpack.c.b16 %v482, %v466
    %v643 = vpack.c.b16 %v483, %v467
    %v644 = vpack.c.b16 %v484, %v468
    %v645 = vpack.c.b16 %v501, %v485
    %v646 = vpack.c.b16 %v502, %v486
    %v647 = vpack.c.b16 %v503, %v487
    %v648 = vpack.c.b16 %v504, %v488
    %v649 = vpack.c.b16 %v505, %v489
    %v650 = vpack.c.b16 %v506, %v490
    %v651 = vpack.c.b16 %v507, %v491
    %v652 = vpack.c.b16 %v508, %v492
    %v653 = vpack.c.b16 %v509, %v493
    %v654 = vpack.c.b16 %v510, %v494
    %v655 = vpack.c.b16 %v511, %v495
    %v656 = vpack.c.b16 %v512, %v496
    %v657 = vpack.c.b16 %v513, %v497
    %v658 = vpack.c.b16 %v514, %v498
    %v659 = vpack.c.b16 %v515, %v499
    %v660 = vpack.c.b16 %v516, %v500
    %v661 = vpack.c.b16 %v533, %v517
    %v662 = vpack.c.b16 %v534, %v518
    %v663 = vpack.c.b16 %v535, %v519
    %v664 = vpack.c.b16 %v536, %v520
    %v665 = vpack.c.b16 %v537, %v521
    %v666 = vpack.c.b16 %v538, %v522
    %v667 = vpack.c.b16 %v539, %v523
    %v668 = vpack.c.b16 %v540, %v524
    %v669 = vpack.c.b16 %v541, %v525
    %v670 = vpack.c.b16 %v542, %v526
    %v671 = vpack.c.b16 %v543, %v527
    %v672 = vpack.c.b16 %v544, %v528
    %v673 = vpack.c.b16 %v545, %v529
    %v674 = vpack.c.b16 %v546, %v530
    %v675 = vpack.c.b16 %v547, %v531
    %v676 = vpack.c.b16 %v548, %v532
    %805 = vmatprep.subr.bf16.mxu0 %v662
    %806 = vmatpush1.bf16.msra.mxu0 %v661
    %807 = vmatprep.subr.bf16.mxu0 %v646
    %808 = vmatpush1.bf16.msra.mxu0 %v645
    %809 = vmatprep.subr.bf16.mxu0 %v630
    %810 = vmatpush1.bf16.msra.mxu0 %v629
    %811 = vmatprep.subr.bf16.mxu0 %v614
    %812 = vmatpush1.bf16.msra.mxu0 %v613
    %813 = vmatprep.subr.bf16.mxu0 %v598
    %814 = vmatpush1.bf16.msra.mxu0 %v597
    %815 = vmatprep.subr.bf16.mxu0 %v582
    %816 = vmatpush1.bf16.msra.mxu0 %v581
    %817 = vmatprep.subr.bf16.mxu0 %v566
    %818 = vmatpush1.bf16.msra.mxu0 %v565
    %819 = vmatprep.subr.bf16.mxu0 %v550
    %820 = vmatpush1.bf16.msra.mxu0 %v549
    %821 = vmatprep.subr.bf16.mxu0 0
    %822 = vmatpush2.bf16.msra.mxu0 0
    %823 = vmatprep.subr.bf16.mxu0 0
    %824 = vmatpush2.bf16.msra.mxu0 0
    %825 = vmatprep.subr.bf16.mxu0 0
    %826 = vmatpush2.bf16.msra.mxu0 0
    %827 = vmatprep.subr.bf16.mxu0 0
    %828 = vmatpush2.bf16.msra.mxu0 0
    %829 = vmatprep.subr.bf16.mxu0 0
    %830 = vmatpush2.bf16.msra.mxu0 0
    %831 = vmatprep.subr.bf16.mxu0 0
    %832 = vmatpush2.bf16.msra.mxu0 0
    %833 = vmatprep.subr.bf16.mxu0 0
    %834 = vmatpush2.bf16.msra.mxu0 0
    %835 = vmatprep.subr.bf16.mxu0 0
    %836 = vmatpush2.bf16.msra.mxu0 0
    %837 = vmatprep.mubr.bf16.mxu0 0
    %838 = vmatmul.mubr.bf16.gmra.mxu0 %v163
    %v839 = vpop.f32.mrf.mxu0
    %v840 = vadd.f32 0.0, %v839
    %v841 = vpop.f32.mrf.mxu0
    %v842 = vadd.f32 0.0, %v841
    %v843 = vpop.f32.mrf.mxu0
    %v844 = vadd.f32 0.0, %v843
    %v845 = vpop.f32.mrf.mxu0
    %v846 = vadd.f32 0.0, %v845
    %847 = vdwg.mxu0
    %848 = vmatprep.subr.bf16.mxu0 %v664
    %849 = vmatpush1.bf16.msra.mxu0 %v663
    %850 = vmatprep.subr.bf16.mxu0 %v648
    %851 = vmatpush1.bf16.msra.mxu0 %v647
    %852 = vmatprep.subr.bf16.mxu0 %v632
    %853 = vmatpush1.bf16.msra.mxu0 %v631
    %854 = vmatprep.subr.bf16.mxu0 %v616
    %855 = vmatpush1.bf16.msra.mxu0 %v615
    %856 = vmatprep.subr.bf16.mxu0 %v600
    %857 = vmatpush1.bf16.msra.mxu0 %v599
    %858 = vmatprep.subr.bf16.mxu0 %v584
    %859 = vmatpush1.bf16.msra.mxu0 %v583
    %860 = vmatprep.subr.bf16.mxu0 %v568
    %861 = vmatpush1.bf16.msra.mxu0 %v567
    %862 = vmatprep.subr.bf16.mxu0 %v552
    %863 = vmatpush1.bf16.msra.mxu0 %v551
    %864 = vmatprep.subr.bf16.mxu0 0
    %865 = vmatpush2.bf16.msra.mxu0 0
    %866 = vmatprep.subr.bf16.mxu0 0
    %867 = vmatpush2.bf16.msra.mxu0 0
    %868 = vmatprep.subr.bf16.mxu0 0
    %869 = vmatpush2.bf16.msra.mxu0 0
    %870 = vmatprep.subr.bf16.mxu0 0
    %871 = vmatpush2.bf16.msra.mxu0 0
    %872 = vmatprep.subr.bf16.mxu0 0
    %873 = vmatpush2.bf16.msra.mxu0 0
    %874 = vmatprep.subr.bf16.mxu0 0
    %875 = vmatpush2.bf16.msra.mxu0 0
    %876 = vmatprep.subr.bf16.mxu0 0
    %877 = vmatpush2.bf16.msra.mxu0 0
    %878 = vmatprep.subr.bf16.mxu0 0
    %879 = vmatpush2.bf16.msra.mxu0 0
    %880 = vmatprep.mubr.bf16.mxu0 0
    %881 = vmatmul.mubr.bf16.gmra.mxu0 %v163
    %v882 = vpop.f32.mrf.mxu0
    %v883 = vadd.f32 0.0, %v882
    %v884 = vpop.f32.mrf.mxu0
    %v885 = vadd.f32 0.0, %v884
    %v886 = vpop.f32.mrf.mxu0
    %v887 = vadd.f32 0.0, %v886
    %v888 = vpop.f32.mrf.mxu0
    %v889 = vadd.f32 0.0, %v888
    %890 = vdwg.mxu0
    %891 = vmatprep.subr.bf16.mxu0 %v666
    %892 = vmatpush1.bf16.msra.mxu0 %v665
    %893 = vmatprep.subr.bf16.mxu0 %v650
    %894 = vmatpush1.bf16.msra.mxu0 %v649
    %895 = vmatprep.subr.bf16.mxu0 %v634
    %896 = vmatpush1.bf16.msra.mxu0 %v633
    %897 = vmatprep.subr.bf16.mxu0 %v618
    %898 = vmatpush1.bf16.msra.mxu0 %v617
    %899 = vmatprep.subr.bf16.mxu0 %v602
    %900 = vmatpush1.bf16.msra.mxu0 %v601
    %901 = vmatprep.subr.bf16.mxu0 %v586
    %902 = vmatpush1.bf16.msra.mxu0 %v585
    %903 = vmatprep.subr.bf16.mxu0 %v570
    %904 = vmatpush1.bf16.msra.mxu0 %v569
    %905 = vmatprep.subr.bf16.mxu0 %v554
    %906 = vmatpush1.bf16.msra.mxu0 %v553
    %907 = vmatprep.subr.bf16.mxu0 0
    %908 = vmatpush2.bf16.msra.mxu0 0
    %909 = vmatprep.subr.bf16.mxu0 0
    %910 = vmatpush2.bf16.msra.mxu0 0
    %911 = vmatprep.subr.bf16.mxu0 0
    %912 = vmatpush2.bf16.msra.mxu0 0
    %913 = vmatprep.subr.bf16.mxu0 0
    %914 = vmatpush2.bf16.msra.mxu0 0
    %915 = vmatprep.subr.bf16.mxu0 0
    %916 = vmatpush2.bf16.msra.mxu0 0
    %917 = vmatprep.subr.bf16.mxu0 0
    %918 = vmatpush2.bf16.msra.mxu0 0
    %919 = vmatprep.subr.bf16.mxu0 0
    %920 = vmatpush2.bf16.msra.mxu0 0
    %921 = vmatprep.subr.bf16.mxu0 0
    %922 = vmatpush2.bf16.msra.mxu0 0
    %923 = vmatprep.mubr.bf16.mxu0 0
    %924 = vmatmul.mubr.bf16.gmra.mxu0 %v163
    %v925 = vpop.f32.mrf.mxu0
    %v926 = vadd.f32 0.0, %v925
    %v927 = vpop.f32.mrf.mxu0
    %v928 = vadd.f32 0.0, %v927
    %v929 = vpop.f32.mrf.mxu0
    %v930 = vadd.f32 0.0, %v929
    %v931 = vpop.f32.mrf.mxu0
    %v932 = vadd.f32 0.0, %v931
    %933 = vdwg.mxu0
    %934 = vmatprep.subr.bf16.mxu0 %v668
    %935 = vmatpush1.bf16.msra.mxu0 %v667
    %936 = vmatprep.subr.bf16.mxu0 %v652
    %937 = vmatpush1.bf16.msra.mxu0 %v651
    %938 = vmatprep.subr.bf16.mxu0 %v636
    %939 = vmatpush1.bf16.msra.mxu0 %v635
    %940 = vmatprep.subr.bf16.mxu0 %v620
    %941 = vmatpush1.bf16.msra.mxu0 %v619
    %942 = vmatprep.subr.bf16.mxu0 %v604
    %943 = vmatpush1.bf16.msra.mxu0 %v603
    %944 = vmatprep.subr.bf16.mxu0 %v588
    %945 = vmatpush1.bf16.msra.mxu0 %v587
    %946 = vmatprep.subr.bf16.mxu0 %v572
    %947 = vmatpush1.bf16.msra.mxu0 %v571
    %948 = vmatprep.subr.bf16.mxu0 %v556
    %949 = vmatpush1.bf16.msra.mxu0 %v555
    %950 = vmatprep.subr.bf16.mxu0 0
    %951 = vmatpush2.bf16.msra.mxu0 0
    %952 = vmatprep.subr.bf16.mxu0 0
    %953 = vmatpush2.bf16.msra.mxu0 0
    %954 = vmatprep.subr.bf16.mxu0 0
    %955 = vmatpush2.bf16.msra.mxu0 0
    %956 = vmatprep.subr.bf16.mxu0 0
    %957 = vmatpush2.bf16.msra.mxu0 0
    %958 = vmatprep.subr.bf16.mxu0 0
    %959 = vmatpush2.bf16.msra.mxu0 0
    %960 = vmatprep.subr.bf16.mxu0 0
    %961 = vmatpush2.bf16.msra.mxu0 0
    %962 = vmatprep.subr.bf16.mxu0 0
    %963 = vmatpush2.bf16.msra.mxu0 0
    %964 = vmatprep.subr.bf16.mxu0 0
    %965 = vmatpush2.bf16.msra.mxu0 0
    %966 = vmatprep.mubr.bf16.mxu0 0
    %967 = vmatmul.mubr.bf16.gmra.mxu0 %v163
    %v968 = vpop.f32.mrf.mxu0
    %v969 = vadd.f32 0.0, %v968
    %v970 = vpop.f32.mrf.mxu0
    %v971 = vadd.f32 0.0, %v970
    %v972 = vpop.f32.mrf.mxu0
    %v973 = vadd.f32 0.0, %v972
    %v974 = vpop.f32.mrf.mxu0
    %v975 = vadd.f32 0.0, %v974
    %976 = vdwg.mxu0
    %977 = vmatprep.subr.bf16.mxu0 %v670
    %978 = vmatpush1.bf16.msra.mxu0 %v669
    %979 = vmatprep.subr.bf16.mxu0 %v654
    %980 = vmatpush1.bf16.msra.mxu0 %v653
    %981 = vmatprep.subr.bf16.mxu0 %v638
    %982 = vmatpush1.bf16.msra.mxu0 %v637
    %983 = vmatprep.subr.bf16.mxu0 %v622
    %984 = vmatpush1.bf16.msra.mxu0 %v621
    %985 = vmatprep.subr.bf16.mxu0 %v606
    %986 = vmatpush1.bf16.msra.mxu0 %v605
    %987 = vmatprep.subr.bf16.mxu0 %v590
    %988 = vmatpush1.bf16.msra.mxu0 %v589
    %989 = vmatprep.subr.bf16.mxu0 %v574
    %990 = vmatpush1.bf16.msra.mxu0 %v573
    %991 = vmatprep.subr.bf16.mxu0 %v558
    %992 = vmatpush1.bf16.msra.mxu0 %v557
    %993 = vmatprep.subr.bf16.mxu0 0
    %994 = vmatpush2.bf16.msra.mxu0 0
    %995 = vmatprep.subr.bf16.mxu0 0
    %996 = vmatpush2.bf16.msra.mxu0 0
    %997 = vmatprep.subr.bf16.mxu0 0
    %998 = vmatpush2.bf16.msra.mxu0 0
    %999 = vmatprep.subr.bf16.mxu0 0
    %1000 = vmatpush2.bf16.msra.mxu0 0
    %1001 = vmatprep.subr.bf16.mxu0 0
    %1002 = vmatpush2.bf16.msra.mxu0 0
    %1003 = vmatprep.subr.bf16.mxu0 0
    %1004 = vmatpush2.bf16.msra.mxu0 0
    %1005 = vmatprep.subr.bf16.mxu0 0
    %1006 = vmatpush2.bf16.msra.mxu0 0
    %1007 = vmatprep.subr.bf16.mxu0 0
    %1008 = vmatpush2.bf16.msra.mxu0 0
    %1009 = vmatprep.mubr.bf16.mxu0 0
    %1010 = vmatmul.mubr.bf16.gmra.mxu0 %v163
    %v1011 = vpop.f32.mrf.mxu0
    %v1012 = vadd.f32 0.0, %v1011
    %v1013 = vpop.f32.mrf.mxu0
    %v1014 = vadd.f32 0.0, %v1013
    %v1015 = vpop.f32.mrf.mxu0
    %v1016 = vadd.f32 0.0, %v1015
    %v1017 = vpop.f32.mrf.mxu0
    %v1018 = vadd.f32 0.0, %v1017
    %1019 = vdwg.mxu0
    %1020 = vmatprep.subr.bf16.mxu0 %v672
    %1021 = vmatpush1.bf16.msra.mxu0 %v671
    %1022 = vmatprep.subr.bf16.mxu0 %v656
    %1023 = vmatpush1.bf16.msra.mxu0 %v655
    %1024 = vmatprep.subr.bf16.mxu0 %v640
    %1025 = vmatpush1.bf16.msra.mxu0 %v639
    %1026 = vmatprep.subr.bf16.mxu0 %v624
    %1027 = vmatpush1.bf16.msra.mxu0 %v623
    %1028 = vmatprep.subr.bf16.mxu0 %v608
    %1029 = vmatpush1.bf16.msra.mxu0 %v607
    %1030 = vmatprep.subr.bf16.mxu0 %v592
    %1031 = vmatpush1.bf16.msra.mxu0 %v591
    %1032 = vmatprep.subr.bf16.mxu0 %v576
    %1033 = vmatpush1.bf16.msra.mxu0 %v575
    %1034 = vmatprep.subr.bf16.mxu0 %v560
    %1035 = vmatpush1.bf16.msra.mxu0 %v559
    %1036 = vmatprep.subr.bf16.mxu0 0
    %1037 = vmatpush2.bf16.msra.mxu0 0
    %1038 = vmatprep.subr.bf16.mxu0 0
    %1039 = vmatpush2.bf16.msra.mxu0 0
    %1040 = vmatprep.subr.bf16.mxu0 0
    %1041 = vmatpush2.bf16.msra.mxu0 0
    %1042 = vmatprep.subr.bf16.mxu0 0
    %1043 = vmatpush2.bf16.msra.mxu0 0
    %1044 = vmatprep.subr.bf16.mxu0 0
    %1045 = vmatpush2.bf16.msra.mxu0 0
    %1046 = vmatprep.subr.bf16.mxu0 0
    %1047 = vmatpush2.bf16.msra.mxu0 0
    %1048 = vmatprep.subr.bf16.mxu0 0
    %1049 = vmatpush2.bf16.msra.mxu0 0
    %1050 = vmatprep.subr.bf16.mxu0 0
    %1051 = vmatpush2.bf16.msra.mxu0 0
    %1052 = vmatprep.mubr.bf16.mxu0 0
    %1053 = vmatmul.mubr.bf16.gmra.mxu0 %v163
    %v1054 = vpop.f32.mrf.mxu0
    %v1055 = vadd.f32 0.0, %v1054
    %v1056 = vpop.f32.mrf.mxu0
    %v1057 = vadd.f32 0.0, %v1056
    %v1058 = vpop.f32.mrf.mxu0
    %v1059 = vadd.f32 0.0, %v1058
    %v1060 = vpop.f32.mrf.mxu0
    %v1061 = vadd.f32 0.0, %v1060
    %1062 = vdwg.mxu0
    %1063 = vmatprep.subr.bf16.mxu0 %v674
    %1064 = vmatpush1.bf16.msra.mxu0 %v673
    %1065 = vmatprep.subr.bf16.mxu0 %v658
    %1066 = vmatpush1.bf16.msra.mxu0 %v657
    %1067 = vmatprep.subr.bf16.mxu0 %v642
    %1068 = vmatpush1.bf16.msra.mxu0 %v641
    %1069 = vmatprep.subr.bf16.mxu0 %v626
    %1070 = vmatpush1.bf16.msra.mxu0 %v625
    %1071 = vmatprep.subr.bf16.mxu0 %v610
    %1072 = vmatpush1.bf16.msra.mxu0 %v609
    %1073 = vmatprep.subr.bf16.mxu0 %v594
    %1074 = vmatpush1.bf16.msra.mxu0 %v593
    %1075 = vmatprep.subr.bf16.mxu0 %v578
    %1076 = vmatpush1.bf16.msra.mxu0 %v577
    %1077 = vmatprep.subr.bf16.mxu0 %v562
    %1078 = vmatpush1.bf16.msra.mxu0 %v561
    %1079 = vmatprep.subr.bf16.mxu0 0
    %1080 = vmatpush2.bf16.msra.mxu0 0
    %1081 = vmatprep.subr.bf16.mxu0 0
    %1082 = vmatpush2.bf16.msra.mxu0 0
    %1083 = vmatprep.subr.bf16.mxu0 0
    %1084 = vmatpush2.bf16.msra.mxu0 0
    %1085 = vmatprep.subr.bf16.mxu0 0
    %1086 = vmatpush2.bf16.msra.mxu0 0
    %1087 = vmatprep.subr.bf16.mxu0 0
    %1088 = vmatpush2.bf16.msra.mxu0 0
    %1089 = vmatprep.subr.bf16.mxu0 0
    %1090 = vmatpush2.bf16.msra.mxu0 0
    %1091 = vmatprep.subr.bf16.mxu0 0
    %1092 = vmatpush2.bf16.msra.mxu0 0
    %1093 = vmatprep.subr.bf16.mxu0 0
    %1094 = vmatpush2.bf16.msra.mxu0 0
    %1095 = vmatprep.mubr.bf16.mxu0 0
    %1096 = vmatmul.mubr.bf16.gmra.mxu0 %v163
    %v1097 = vpop.f32.mrf.mxu0
    %v1098 = vadd.f32 0.0, %v1097
    %v1099 = vpop.f32.mrf.mxu0
    %v1100 = vadd.f32 0.0, %v1099
    %v1101 = vpop.f32.mrf.mxu0
    %v1102 = vadd.f32 0.0, %v1101
    %v1103 = vpop.f32.mrf.mxu0
    %v1104 = vadd.f32 0.0, %v1103
    %1105 = vdwg.mxu0
    %1106 = vmatprep.subr.bf16.mxu0 %v676
    %1107 = vmatpush1.bf16.msra.mxu0 %v675
    %1108 = vmatprep.subr.bf16.mxu0 %v660
    %1109 = vmatpush1.bf16.msra.mxu0 %v659
    %1110 = vmatprep.subr.bf16.mxu0 %v644
    %1111 = vmatpush1.bf16.msra.mxu0 %v643
    %1112 = vmatprep.subr.bf16.mxu0 %v628
    %1113 = vmatpush1.bf16.msra.mxu0 %v627
    %1114 = vmatprep.subr.bf16.mxu0 %v612
    %1115 = vmatpush1.bf16.msra.mxu0 %v611
    %1116 = vmatprep.subr.bf16.mxu0 %v596
    %1117 = vmatpush1.bf16.msra.mxu0 %v595
    %1118 = vmatprep.subr.bf16.mxu0 %v580
    %1119 = vmatpush1.bf16.msra.mxu0 %v579
    %1120 = vmatprep.subr.bf16.mxu0 %v564
    %1121 = vmatpush1.bf16.msra.mxu0 %v563
    %1122 = vmatprep.subr.bf16.mxu0 0
    %1123 = vmatpush2.bf16.msra.mxu0 0
    %1124 = vmatprep.subr.bf16.mxu0 0
    %1125 = vmatpush2.bf16.msra.mxu0 0
    %1126 = vmatprep.subr.bf16.mxu0 0
    %1127 = vmatpush2.bf16.msra.mxu0 0
    %1128 = vmatprep.subr.bf16.mxu0 0
    %1129 = vmatpush2.bf16.msra.mxu0 0
    %1130 = vmatprep.subr.bf16.mxu0 0
    %1131 = vmatpush2.bf16.msra.mxu0 0
    %1132 = vmatprep.subr.bf16.mxu0 0
    %1133 = vmatpush2.bf16.msra.mxu0 0
    %1134 = vmatprep.subr.bf16.mxu0 0
    %1135 = vmatpush2.bf16.msra.mxu0 0
    %1136 = vmatprep.subr.bf16.mxu0 0
    %1137 = vmatpush2.bf16.msra.mxu0 0
    %1138 = vmatprep.mubr.bf16.mxu0 0
    %1139 = vmatmul.mubr.bf16.gmra.mxu0 %v163
    %v1140 = vpop.f32.mrf.mxu0
    %v1141 = vadd.f32 0.0, %v1140
    %v1142 = vpop.f32.mrf.mxu0
    %v1143 = vadd.f32 0.0, %v1142
    %v1144 = vpop.f32.mrf.mxu0
    %v1145 = vadd.f32 0.0, %v1144
    %v1146 = vpop.f32.mrf.mxu0
    %v1147 = vadd.f32 0.0, %v1146
    %1148 = vdwg.mxu0
    %v1149 = vpack.c.bf16 %v844, %v840
    %v1150 = vpack.c.bf16 %v846, %v842
    %v1151 = vpack.c.bf16 %v887, %v883
    %v1152 = vpack.c.bf16 %v889, %v885
    %v1153 = vpack.c.bf16 %v930, %v926
    %v1154 = vpack.c.bf16 %v932, %v928
    %v1155 = vpack.c.bf16 %v973, %v969
    %v1156 = vpack.c.bf16 %v975, %v971
    %v1157 = vpack.c.bf16 %v1016, %v1012
    %v1158 = vpack.c.bf16 %v1018, %v1014
    %v1159 = vpack.c.bf16 %v1059, %v1055
    %v1160 = vpack.c.bf16 %v1061, %v1057
    %v1161 = vpack.c.bf16 %v1102, %v1098
    %v1162 = vpack.c.bf16 %v1104, %v1100
    %v1163 = vpack.c.bf16 %v1145, %v1141
    %v1164 = vpack.c.bf16 %v1147, %v1143
    %v1181 = vunpack.c.l.b16 %v1149
    %v1182 = vunpack.c.l.b16 %v1150
    %v1183 = vunpack.c.l.b16 %v1151
    %v1184 = vunpack.c.l.b16 %v1152
    %v1185 = vunpack.c.l.b16 %v1153
    %v1186 = vunpack.c.l.b16 %v1154
    %v1187 = vunpack.c.l.b16 %v1155
    %v1188 = vunpack.c.l.b16 %v1156
    %v1189 = vunpack.c.l.b16 %v1157
    %v1190 = vunpack.c.l.b16 %v1158
    %v1191 = vunpack.c.l.b16 %v1159
    %v1192 = vunpack.c.l.b16 %v1160
    %v1193 = vunpack.c.l.b16 %v1161
    %v1194 = vunpack.c.l.b16 %v1162
    %v1195 = vunpack.c.l.b16 %v1163
    %v1196 = vunpack.c.l.b16 %v1164
    %v1197 = vunpack.c.h.b16 %v1149
    %v1198 = vunpack.c.h.b16 %v1150
    %v1199 = vunpack.c.h.b16 %v1151
    %v1200 = vunpack.c.h.b16 %v1152
    %v1201 = vunpack.c.h.b16 %v1153
    %v1202 = vunpack.c.h.b16 %v1154
    %v1203 = vunpack.c.h.b16 %v1155
    %v1204 = vunpack.c.h.b16 %v1156
    %v1205 = vunpack.c.h.b16 %v1157
    %v1206 = vunpack.c.h.b16 %v1158
    %v1207 = vunpack.c.h.b16 %v1159
    %v1208 = vunpack.c.h.b16 %v1160
    %v1209 = vunpack.c.h.b16 %v1161
    %v1210 = vunpack.c.h.b16 %v1162
    %v1211 = vunpack.c.h.b16 %v1163
    %v1212 = vunpack.c.h.b16 %v1164
    %v1213 = vpack.c.b16 %v1182, %v1181
    %v1214 = vpack.c.b16 %v1184, %v1183
    %v1215 = vpack.c.b16 %v1186, %v1185
    %v1216 = vpack.c.b16 %v1188, %v1187
    %v1217 = vpack.c.b16 %v1190, %v1189
    %v1218 = vpack.c.b16 %v1192, %v1191
    %v1219 = vpack.c.b16 %v1194, %v1193
    %v1220 = vpack.c.b16 %v1196, %v1195
    %v1221 = vpack.c.b16 %v1198, %v1197
    %v1222 = vpack.c.b16 %v1200, %v1199
    %v1223 = vpack.c.b16 %v1202, %v1201
    %v1224 = vpack.c.b16 %v1204, %v1203
    %v1225 = vpack.c.b16 %v1206, %v1205
    %v1226 = vpack.c.b16 %v1208, %v1207
    %v1227 = vpack.c.b16 %v1210, %v1209
    %v1228 = vpack.c.b16 %v1212, %v1211
    %1245 = vst [vmem:[%s2] sm:$0xff] %v1213
    %1246 = vst [vmem:[%s2 + $0x8] sm:$0xff] %v1214
    %1247 = vst [vmem:[%s2 + $0x10] sm:$0xff] %v1215
    %1248 = vst [vmem:[%s2 + $0x18] sm:$0xff] %v1216
    %1249 = vst [vmem:[%s2 + $0x20] sm:$0xff] %v1217
    %1250 = vst [vmem:[%s2 + $0x28] sm:$0xff] %v1218
    %1251 = vst [vmem:[%s2 + $0x30] sm:$0xff] %v1219
    %1252 = vst [vmem:[%s2 + $0x38] sm:$0xff] %v1220
    %1253 = vst [vmem:[%s2 + $0x40] sm:$0xff] %v1221
    %1254 = vst [vmem:[%s2 + $0x48] sm:$0xff] %v1222
    %1255 = vst [vmem:[%s2 + $0x50] sm:$0xff] %v1223
    %1256 = vst [vmem:[%s2 + $0x58] sm:$0xff] %v1224
    %1257 = vst [vmem:[%s2 + $0x60] sm:$0xff] %v1225
    %1258 = vst [vmem:[%s2 + $0x68] sm:$0xff] %v1226
    %1259 = vst [vmem:[%s2 + $0x70] sm:$0xff] %v1227
    %1260 = vst [vmem:[%s2 + $0x78] sm:$0xff] %v1228
    %v1261 = vunpack.c.l.bf16 %v1149
    %v1262 = vunpack.c.l.bf16 %v1150
    %v1263 = vunpack.c.l.bf16 %v1151
    %v1264 = vunpack.c.l.bf16 %v1152
    %v1265 = vunpack.c.l.bf16 %v1153
    %v1266 = vunpack.c.l.bf16 %v1154
    %v1267 = vunpack.c.l.bf16 %v1155
    %v1268 = vunpack.c.l.bf16 %v1156
    %v1269 = vunpack.c.l.bf16 %v1157
    %v1270 = vunpack.c.l.bf16 %v1158
    %v1271 = vunpack.c.l.bf16 %v1159
    %v1272 = vunpack.c.l.bf16 %v1160
    %v1273 = vunpack.c.l.bf16 %v1161
    %v1274 = vunpack.c.l.bf16 %v1162
    %v1275 = vunpack.c.l.bf16 %v1163
    %v1276 = vunpack.c.l.bf16 %v1164
    %v1277 = vunpack.c.h.bf16 %v1149
    %v1278 = vunpack.c.h.bf16 %v1150
    %v1279 = vunpack.c.h.bf16 %v1151
    %v1280 = vunpack.c.h.bf16 %v1152
    %v1281 = vunpack.c.h.bf16 %v1153
    %v1282 = vunpack.c.h.bf16 %v1154
    %v1283 = vunpack.c.h.bf16 %v1155
    %v1284 = vunpack.c.h.bf16 %v1156
    %v1285 = vunpack.c.h.bf16 %v1157
    %v1286 = vunpack.c.h.bf16 %v1158
    %v1287 = vunpack.c.h.bf16 %v1159
    %v1288 = vunpack.c.h.bf16 %v1160
    %v1289 = vunpack.c.h.bf16 %v1161
    %v1290 = vunpack.c.h.bf16 %v1162
    %v1291 = vunpack.c.h.bf16 %v1163
    %v1292 = vunpack.c.h.bf16 %v1164
    %v1293 = vadd.f32 %v1261, %v1277
    %v1294 = vrot.slane %v1293, 4
    %v1295 = vadd.f32 %v1293, %v1294
    %v1296 = vrot.slane %v1295, 2
    %v1297 = vadd.f32 %v1295, %v1296
    %v1298 = vrot.slane %v1297, 1
    %v1299 = vadd.f32 %v1297, %v1298
    %v1300 = vadd.f32 %v1262, %v1278
    %v1301 = vrot.slane %v1300, 4
    %v1302 = vadd.f32 %v1300, %v1301
    %v1303 = vrot.slane %v1302, 2
    %v1304 = vadd.f32 %v1302, %v1303
    %v1305 = vrot.slane %v1304, 1
    %v1306 = vadd.f32 %v1304, %v1305
    %v1307 = vadd.f32 %v1263, %v1279
    %v1308 = vrot.slane %v1307, 4
    %v1309 = vadd.f32 %v1307, %v1308
    %v1310 = vrot.slane %v1309, 2
    %v1311 = vadd.f32 %v1309, %v1310
    %v1312 = vrot.slane %v1311, 1
    %v1313 = vadd.f32 %v1311, %v1312
    %v1314 = vadd.f32 %v1264, %v1280
    %v1315 = vrot.slane %v1314, 4
    %v1316 = vadd.f32 %v1314, %v1315
    %v1317 = vrot.slane %v1316, 2
    %v1318 = vadd.f32 %v1316, %v1317
    %v1319 = vrot.slane %v1318, 1
    %v1320 = vadd.f32 %v1318, %v1319
    %v1321 = vadd.f32 %v1265, %v1281
    %v1322 = vrot.slane %v1321, 4
    %v1323 = vadd.f32 %v1321, %v1322
    %v1324 = vrot.slane %v1323, 2
    %v1325 = vadd.f32 %v1323, %v1324
    %v1326 = vrot.slane %v1325, 1
    %v1327 = vadd.f32 %v1325, %v1326
    %v1328 = vadd.f32 %v1266, %v1282
    %v1329 = vrot.slane %v1328, 4
    %v1330 = vadd.f32 %v1328, %v1329
    %v1331 = vrot.slane %v1330, 2
    %v1332 = vadd.f32 %v1330, %v1331
    %v1333 = vrot.slane %v1332, 1
    %v1334 = vadd.f32 %v1332, %v1333
    %v1335 = vadd.f32 %v1267, %v1283
    %v1336 = vrot.slane %v1335, 4
    %v1337 = vadd.f32 %v1335, %v1336
    %v1338 = vrot.slane %v1337, 2
    %v1339 = vadd.f32 %v1337, %v1338
    %v1340 = vrot.slane %v1339, 1
    %v1341 = vadd.f32 %v1339, %v1340
    %v1342 = vadd.f32 %v1268, %v1284
    %v1343 = vrot.slane %v1342, 4
    %v1344 = vadd.f32 %v1342, %v1343
    %v1345 = vrot.slane %v1344, 2
    %v1346 = vadd.f32 %v1344, %v1345
    %v1347 = vrot.slane %v1346, 1
    %v1348 = vadd.f32 %v1346, %v1347
    %v1349 = vadd.f32 %v1269, %v1285
    %v1350 = vrot.slane %v1349, 4
    %v1351 = vadd.f32 %v1349, %v1350
    %v1352 = vrot.slane %v1351, 2
    %v1353 = vadd.f32 %v1351, %v1352
    %v1354 = vrot.slane %v1353, 1
    %v1355 = vadd.f32 %v1353, %v1354
    %v1356 = vadd.f32 %v1270, %v1286
    %v1357 = vrot.slane %v1356, 4
    %v1358 = vadd.f32 %v1356, %v1357
    %v1359 = vrot.slane %v1358, 2
    %v1360 = vadd.f32 %v1358, %v1359
    %v1361 = vrot.slane %v1360, 1
    %v1362 = vadd.f32 %v1360, %v1361
    %v1363 = vadd.f32 %v1271, %v1287
    %v1364 = vrot.slane %v1363, 4
    %v1365 = vadd.f32 %v1363, %v1364
    %v1366 = vrot.slane %v1365, 2
    %v1367 = vadd.f32 %v1365, %v1366
    %v1368 = vrot.slane %v1367, 1
    %v1369 = vadd.f32 %v1367, %v1368
    %v1370 = vadd.f32 %v1272, %v1288
    %v1371 = vrot.slane %v1370, 4
    %v1372 = vadd.f32 %v1370, %v1371
    %v1373 = vrot.slane %v1372, 2
    %v1374 = vadd.f32 %v1372, %v1373
    %v1375 = vrot.slane %v1374, 1
    %v1376 = vadd.f32 %v1374, %v1375
    %v1377 = vadd.f32 %v1273, %v1289
    %v1378 = vrot.slane %v1377, 4
    %v1379 = vadd.f32 %v1377, %v1378
    %v1380 = vrot.slane %v1379, 2
    %v1381 = vadd.f32 %v1379, %v1380
    %v1382 = vrot.slane %v1381, 1
    %v1383 = vadd.f32 %v1381, %v1382
    %v1384 = vadd.f32 %v1274, %v1290
    %v1385 = vrot.slane %v1384, 4
    %v1386 = vadd.f32 %v1384, %v1385
    %v1387 = vrot.slane %v1386, 2
    %v1388 = vadd.f32 %v1386, %v1387
    %v1389 = vrot.slane %v1388, 1
    %v1390 = vadd.f32 %v1388, %v1389
    %v1391 = vadd.f32 %v1275, %v1291
    %v1392 = vrot.slane %v1391, 4
    %v1393 = vadd.f32 %v1391, %v1392
    %v1394 = vrot.slane %v1393, 2
    %v1395 = vadd.f32 %v1393, %v1394
    %v1396 = vrot.slane %v1395, 1
    %v1397 = vadd.f32 %v1395, %v1396
    %v1398 = vadd.f32 %v1276, %v1292
    %v1399 = vrot.slane %v1398, 4
    %v1400 = vadd.f32 %v1398, %v1399
    %v1401 = vrot.slane %v1400, 2
    %v1402 = vadd.f32 %v1400, %v1401
    %v1403 = vrot.slane %v1402, 1
    %v1404 = vadd.f32 %v1402, %v1403
    %v1421 = vcombine.low %v1299, %v1306
    %v1422 = vcombine.low %v1313, %v1320
    %v1423 = vcombine.low %v1327, %v1334
    %v1424 = vcombine.low %v1341, %v1348
    %v1426 = vunpack.c.l.s4 1966171168
    %v1427 = vunpack.c.0.s8 %v1426
    %v1428 = vlaneseq
    %v1429 = vshrl.u32 %v1428, 7
    %v1430 = vsub.s32 %v1427, %v1429
    %v1431 = vrot.slane %v1421, %v1430
    %v1433 = vunpack.c.l.s4 1966171168
    %v1434 = vunpack.c.0.s8 %v1433
    %v1435 = vlaneseq
    %v1436 = vshrl.u32 %v1435, 7
    %v1437 = vsub.s32 %v1434, %v1436
    %v1438 = vrot.slane %v1422, %v1437
    %v1440 = vunpack.c.l.s4 1966171168
    %v1441 = vunpack.c.0.s8 %v1440
    %v1442 = vlaneseq
    %v1443 = vshrl.u32 %v1442, 7
    %v1444 = vsub.s32 %v1441, %v1443
    %v1445 = vrot.slane %v1423, %v1444
    %v1447 = vunpack.c.l.s4 1966171168
    %v1448 = vunpack.c.0.s8 %v1447
    %v1449 = vlaneseq
    %v1450 = vshrl.u32 %v1449, 7
    %v1451 = vsub.s32 %v1448, %v1450
    %v1452 = vrot.slane %v1424, %v1451
    %v1453 = vcombine.low %v1431, %v1438
    %v1454 = vcombine.low %v1445, %v1452
    %v1456 = vunpack.c.l.s4 1966171168
    %v1457 = vunpack.c.0.s8 %v1456
    %v1458 = vlaneseq
    %v1459 = vshrl.u32 %v1458, 7
    %v1460 = vsub.s32 %v1457, %v1459
    %v1461 = vrot.slane %v1453, %v1460
    %v1463 = vunpack.c.l.s4 1966171168
    %v1464 = vunpack.c.0.s8 %v1463
    %v1465 = vlaneseq
    %v1466 = vshrl.u32 %v1465, 7
    %v1467 = vsub.s32 %v1464, %v1466
    %v1468 = vrot.slane %v1454, %v1467
    %v1469 = vcombine.low %v1461, %v1468
    %v1470 = vcombine.low %v1355, %v1362
    %v1471 = vcombine.low %v1369, %v1376
    %v1472 = vcombine.low %v1383, %v1390
    %v1473 = vcombine.low %v1397, %v1404
    %v1475 = vunpack.c.l.s4 1966171168
    %v1476 = vunpack.c.0.s8 %v1475
    %v1477 = vlaneseq
    %v1478 = vshrl.u32 %v1477, 7
    %v1479 = vsub.s32 %v1476, %v1478
    %v1480 = vrot.slane %v1470, %v1479
    %v1482 = vunpack.c.l.s4 1966171168
    %v1483 = vunpack.c.0.s8 %v1482
    %v1484 = vlaneseq
    %v1485 = vshrl.u32 %v1484, 7
    %v1486 = vsub.s32 %v1483, %v1485
    %v1487 = vrot.slane %v1471, %v1486
    %v1489 = vunpack.c.l.s4 1966171168
    %v1490 = vunpack.c.0.s8 %v1489
    %v1491 = vlaneseq
    %v1492 = vshrl.u32 %v1491, 7
    %v1493 = vsub.s32 %v1490, %v1492
    %v1494 = vrot.slane %v1472, %v1493
    %v1496 = vunpack.c.l.s4 1966171168
    %v1497 = vunpack.c.0.s8 %v1496
    %v1498 = vlaneseq
    %v1499 = vshrl.u32 %v1498, 7
    %v1500 = vsub.s32 %v1497, %v1499
    %v1501 = vrot.slane %v1473, %v1500
    %v1502 = vcombine.low %v1480, %v1487
    %v1503 = vcombine.low %v1494, %v1501
    %v1505 = vunpack.c.l.s4 1966171168
    %v1506 = vunpack.c.0.s8 %v1505
    %v1507 = vlaneseq
    %v1508 = vshrl.u32 %v1507, 7
    %v1509 = vsub.s32 %v1506, %v1508
    %v1510 = vrot.slane %v1502, %v1509
    %v1512 = vunpack.c.l.s4 1966171168
    %v1513 = vunpack.c.0.s8 %v1512
    %v1514 = vlaneseq
    %v1515 = vshrl.u32 %v1514, 7
    %v1516 = vsub.s32 %v1513, %v1515
    %v1517 = vrot.slane %v1503, %v1516
    %v1518 = vcombine.low %v1510, %v1517
    %1521 = vst [vmem:[%s3] sm:$0xff] %v1469
    %1522 = vst [vmem:[%s3 + $0x8] sm:$0xff] %v1518
    %v1523 = vmul.f32 %v1261, %v1261
    %v1524 = vmul.f32 %v1262, %v1262
    %v1525 = vmul.f32 %v1263, %v1263
    %v1526 = vmul.f32 %v1264, %v1264
    %v1527 = vmul.f32 %v1265, %v1265
    %v1528 = vmul.f32 %v1266, %v1266
    %v1529 = vmul.f32 %v1267, %v1267
    %v1530 = vmul.f32 %v1268, %v1268
    %v1531 = vmul.f32 %v1269, %v1269
    %v1532 = vmul.f32 %v1270, %v1270
    %v1533 = vmul.f32 %v1271, %v1271
    %v1534 = vmul.f32 %v1272, %v1272
    %v1535 = vmul.f32 %v1273, %v1273
    %v1536 = vmul.f32 %v1274, %v1274
    %v1537 = vmul.f32 %v1275, %v1275
    %v1538 = vmul.f32 %v1276, %v1276
    %v1539 = vmul.f32 %v1277, %v1277
    %v1540 = vmul.f32 %v1278, %v1278
    %v1541 = vmul.f32 %v1279, %v1279
    %v1542 = vmul.f32 %v1280, %v1280
    %v1543 = vmul.f32 %v1281, %v1281
    %v1544 = vmul.f32 %v1282, %v1282
    %v1545 = vmul.f32 %v1283, %v1283
    %v1546 = vmul.f32 %v1284, %v1284
    %v1547 = vmul.f32 %v1285, %v1285
    %v1548 = vmul.f32 %v1286, %v1286
    %v1549 = vmul.f32 %v1287, %v1287
    %v1550 = vmul.f32 %v1288, %v1288
    %v1551 = vmul.f32 %v1289, %v1289
    %v1552 = vmul.f32 %v1290, %v1290
    %v1553 = vmul.f32 %v1291, %v1291
    %v1554 = vmul.f32 %v1292, %v1292
    %v1555 = vadd.f32 %v1523, %v1539
    %v1556 = vrot.slane %v1555, 4
    %v1557 = vadd.f32 %v1555, %v1556
    %v1558 = vrot.slane %v1557, 2
    %v1559 = vadd.f32 %v1557, %v1558
    %v1560 = vrot.slane %v1559, 1
    %v1561 = vadd.f32 %v1559, %v1560
    %v1562 = vadd.f32 %v1524, %v1540
    %v1563 = vrot.slane %v1562, 4
    %v1564 = vadd.f32 %v1562, %v1563
    %v1565 = vrot.slane %v1564, 2
    %v1566 = vadd.f32 %v1564, %v1565
    %v1567 = vrot.slane %v1566, 1
    %v1568 = vadd.f32 %v1566, %v1567
    %v1569 = vadd.f32 %v1525, %v1541
    %v1570 = vrot.slane %v1569, 4
    %v1571 = vadd.f32 %v1569, %v1570
    %v1572 = vrot.slane %v1571, 2
    %v1573 = vadd.f32 %v1571, %v1572
    %v1574 = vrot.slane %v1573, 1
    %v1575 = vadd.f32 %v1573, %v1574
    %v1576 = vadd.f32 %v1526, %v1542
    %v1577 = vrot.slane %v1576, 4
    %v1578 = vadd.f32 %v1576, %v1577
    %v1579 = vrot.slane %v1578, 2
    %v1580 = vadd.f32 %v1578, %v1579
    %v1581 = vrot.slane %v1580, 1
    %v1582 = vadd.f32 %v1580, %v1581
    %v1583 = vadd.f32 %v1527, %v1543
    %v1584 = vrot.slane %v1583, 4
    %v1585 = vadd.f32 %v1583, %v1584
    %v1586 = vrot.slane %v1585, 2
    %v1587 = vadd.f32 %v1585, %v1586
    %v1588 = vrot.slane %v1587, 1
    %v1589 = vadd.f32 %v1587, %v1588
    %v1590 = vadd.f32 %v1528, %v1544
    %v1591 = vrot.slane %v1590, 4
    %v1592 = vadd.f32 %v1590, %v1591
    %v1593 = vrot.slane %v1592, 2
    %v1594 = vadd.f32 %v1592, %v1593
    %v1595 = vrot.slane %v1594, 1
    %v1596 = vadd.f32 %v1594, %v1595
    %v1597 = vadd.f32 %v1529, %v1545
    %v1598 = vrot.slane %v1597, 4
    %v1599 = vadd.f32 %v1597, %v1598
    %v1600 = vrot.slane %v1599, 2
    %v1601 = vadd.f32 %v1599, %v1600
    %v1602 = vrot.slane %v1601, 1
    %v1603 = vadd.f32 %v1601, %v1602
    %v1604 = vadd.f32 %v1530, %v1546
    %v1605 = vrot.slane %v1604, 4
    %v1606 = vadd.f32 %v1604, %v1605
    %v1607 = vrot.slane %v1606, 2
    %v1608 = vadd.f32 %v1606, %v1607
    %v1609 = vrot.slane %v1608, 1
    %v1610 = vadd.f32 %v1608, %v1609
    %v1611 = vadd.f32 %v1531, %v1547
    %v1612 = vrot.slane %v1611, 4
    %v1613 = vadd.f32 %v1611, %v1612
    %v1614 = vrot.slane %v1613, 2
    %v1615 = vadd.f32 %v1613, %v1614
    %v1616 = vrot.slane %v1615, 1
    %v1617 = vadd.f32 %v1615, %v1616
    %v1618 = vadd.f32 %v1532, %v1548
    %v1619 = vrot.slane %v1618, 4
    %v1620 = vadd.f32 %v1618, %v1619
    %v1621 = vrot.slane %v1620, 2
    %v1622 = vadd.f32 %v1620, %v1621
    %v1623 = vrot.slane %v1622, 1
    %v1624 = vadd.f32 %v1622, %v1623
    %v1625 = vadd.f32 %v1533, %v1549
    %v1626 = vrot.slane %v1625, 4
    %v1627 = vadd.f32 %v1625, %v1626
    %v1628 = vrot.slane %v1627, 2
    %v1629 = vadd.f32 %v1627, %v1628
    %v1630 = vrot.slane %v1629, 1
    %v1631 = vadd.f32 %v1629, %v1630
    %v1632 = vadd.f32 %v1534, %v1550
    %v1633 = vrot.slane %v1632, 4
    %v1634 = vadd.f32 %v1632, %v1633
    %v1635 = vrot.slane %v1634, 2
    %v1636 = vadd.f32 %v1634, %v1635
    %v1637 = vrot.slane %v1636, 1
    %v1638 = vadd.f32 %v1636, %v1637
    %v1639 = vadd.f32 %v1535, %v1551
    %v1640 = vrot.slane %v1639, 4
    %v1641 = vadd.f32 %v1639, %v1640
    %v1642 = vrot.slane %v1641, 2
    %v1643 = vadd.f32 %v1641, %v1642
    %v1644 = vrot.slane %v1643, 1
    %v1645 = vadd.f32 %v1643, %v1644
    %v1646 = vadd.f32 %v1536, %v1552
    %v1647 = vrot.slane %v1646, 4
    %v1648 = vadd.f32 %v1646, %v1647
    %v1649 = vrot.slane %v1648, 2
    %v1650 = vadd.f32 %v1648, %v1649
    %v1651 = vrot.slane %v1650, 1
    %v1652 = vadd.f32 %v1650, %v1651
    %v1653 = vadd.f32 %v1537, %v1553
    %v1654 = vrot.slane %v1653, 4
    %v1655 = vadd.f32 %v1653, %v1654
    %v1656 = vrot.slane %v1655, 2
    %v1657 = vadd.f32 %v1655, %v1656
    %v1658 = vrot.slane %v1657, 1
    %v1659 = vadd.f32 %v1657, %v1658
    %v1660 = vadd.f32 %v1538, %v1554
    %v1661 = vrot.slane %v1660, 4
    %v1662 = vadd.f32 %v1660, %v1661
    %v1663 = vrot.slane %v1662, 2
    %v1664 = vadd.f32 %v1662, %v1663
    %v1665 = vrot.slane %v1664, 1
    %v1666 = vadd.f32 %v1664, %v1665
    %v1683 = vcombine.low %v1561, %v1568
    %v1684 = vcombine.low %v1575, %v1582
    %v1685 = vcombine.low %v1589, %v1596
    %v1686 = vcombine.low %v1603, %v1610
    %v1688 = vunpack.c.l.s4 1966171168
    %v1689 = vunpack.c.0.s8 %v1688
    %v1690 = vlaneseq
    %v1691 = vshrl.u32 %v1690, 7
    %v1692 = vsub.s32 %v1689, %v1691
    %v1693 = vrot.slane %v1683, %v1692
    %v1695 = vunpack.c.l.s4 1966171168
    %v1696 = vunpack.c.0.s8 %v1695
    %v1697 = vlaneseq
    %v1698 = vshrl.u32 %v1697, 7
    %v1699 = vsub.s32 %v1696, %v1698
    %v1700 = vrot.slane %v1684, %v1699
    %v1702 = vunpack.c.l.s4 1966171168
    %v1703 = vunpack.c.0.s8 %v1702
    %v1704 = vlaneseq
    %v1705 = vshrl.u32 %v1704, 7
    %v1706 = vsub.s32 %v1703, %v1705
    %v1707 = vrot.slane %v1685, %v1706
    %v1709 = vunpack.c.l.s4 1966171168
    %v1710 = vunpack.c.0.s8 %v1709
    %v1711 = vlaneseq
    %v1712 = vshrl.u32 %v1711, 7
    %v1713 = vsub.s32 %v1710, %v1712
    %v1714 = vrot.slane %v1686, %v1713
    %v1715 = vcombine.low %v1693, %v1700
    %v1716 = vcombine.low %v1707, %v1714
    %v1718 = vunpack.c.l.s4 1966171168
    %v1719 = vunpack.c.0.s8 %v1718
    %v1720 = vlaneseq
    %v1721 = vshrl.u32 %v1720, 7
    %v1722 = vsub.s32 %v1719, %v1721
    %v1723 = vrot.slane %v1715, %v1722
    %v1725 = vunpack.c.l.s4 1966171168
    %v1726 = vunpack.c.0.s8 %v1725
    %v1727 = vlaneseq
    %v1728 = vshrl.u32 %v1727, 7
    %v1729 = vsub.s32 %v1726, %v1728
    %v1730 = vrot.slane %v1716, %v1729
    %v1731 = vcombine.low %v1723, %v1730
    %v1732 = vcombine.low %v1617, %v1624
    %v1733 = vcombine.low %v1631, %v1638
    %v1734 = vcombine.low %v1645, %v1652
    %v1735 = vcombine.low %v1659, %v1666
    %v1737 = vunpack.c.l.s4 1966171168
    %v1738 = vunpack.c.0.s8 %v1737
    %v1739 = vlaneseq
    %v1740 = vshrl.u32 %v1739, 7
    %v1741 = vsub.s32 %v1738, %v1740
    %v1742 = vrot.slane %v1732, %v1741
    %v1744 = vunpack.c.l.s4 1966171168
    %v1745 = vunpack.c.0.s8 %v1744
    %v1746 = vlaneseq
    %v1747 = vshrl.u32 %v1746, 7
    %v1748 = vsub.s32 %v1745, %v1747
    %v1749 = vrot.slane %v1733, %v1748
    %v1751 = vunpack.c.l.s4 1966171168
    %v1752 = vunpack.c.0.s8 %v1751
    %v1753 = vlaneseq
    %v1754 = vshrl.u32 %v1753, 7
    %v1755 = vsub.s32 %v1752, %v1754
    %v1756 = vrot.slane %v1734, %v1755
    %v1758 = vunpack.c.l.s4 1966171168
    %v1759 = vunpack.c.0.s8 %v1758
    %v1760 = vlaneseq
    %v1761 = vshrl.u32 %v1760, 7
    %v1762 = vsub.s32 %v1759, %v1761
    %v1763 = vrot.slane %v1735, %v1762
    %v1764 = vcombine.low %v1742, %v1749
    %v1765 = vcombine.low %v1756, %v1763
    %v1767 = vunpack.c.l.s4 1966171168
    %v1768 = vunpack.c.0.s8 %v1767
    %v1769 = vlaneseq
    %v1770 = vshrl.u32 %v1769, 7
    %v1771 = vsub.s32 %v1768, %v1770
    %v1772 = vrot.slane %v1764, %v1771
    %v1774 = vunpack.c.l.s4 1966171168
    %v1775 = vunpack.c.0.s8 %v1774
    %v1776 = vlaneseq
    %v1777 = vshrl.u32 %v1776, 7
    %v1778 = vsub.s32 %v1775, %v1777
    %v1779 = vrot.slane %v1765, %v1778
    %v1780 = vcombine.low %v1772, %v1779
    %1783 = vst [vmem:[%s4] sm:$0xff] %v1731
    %1784 = vst [vmem:[%s4 + $0x8] sm:$0xff] %v1780
    // Predicated region
    $region14: #{_lambda_.5} parent=1 // pred_check
      _
    $region15: #{_lambda_.5} parent=1 // pred_check_branch
      %1786 = sbr.rel (0) target = $region17
    $region16: #{_lambda_.5} parent=1 // pred_region
      _
    $region17: #{_lambda_.5} parent=1 // pred_fallthru
      _
    // Predicated region
    $region18: #{_lambda_.5} parent=1 // pred_check
      _
    $region19: #{_lambda_.5} parent=1 // pred_check_branch
      %1788 = sbr.rel (0) target = $region21
    $region20: #{_lambda_.5} parent=1 // pred_region
      _
    $region21: #{_lambda_.5} parent=1 // pred_fallthru
      _
    // Predicated region
    $region22: #{_lambda_.5} parent=1 // pred_check
      _
    $region23: #{_lambda_.5} parent=1 // pred_check_branch
      %1790 = sbr.rel (0) target = $region25
    $region24: #{_lambda_.5} parent=1 // pred_region
      _
    $region25: #{_lambda_.5} parent=1 // pred_fallthru
      _
    // Predicated region
    $region26: #{_lambda_.5} parent=1 // pred_check
      _
    $region27: #{_lambda_.5} parent=1 // pred_check_branch
      %1792 = sbr.rel (0) target = $region29
    $region28: #{_lambda_.5} parent=1 // pred_region
      _
    $region29: #{_lambda_.5} parent=1 // pred_fallthru
      _
    // Predicated region
    $region30: #{_lambda_.5} parent=1 // pred_check
      _
    $region31: #{_lambda_.5} parent=1 // pred_check_branch
      %1794 = sbr.rel (0) target = $region33
    $region32: #{_lambda_.5} parent=1 // pred_region
      _
    $region33: #{_lambda_.5} parent=1 // pred_fallthru
      _
    // Predicated region
    $region34: #{_lambda_.5} parent=1 // pred_check
      _
    $region35: #{_lambda_.5} parent=1 // pred_check_branch
      %1796 = sbr.rel (0) target = $region37
    $region36: #{_lambda_.5} parent=1 // pred_region
      _
    $region37: #{_lambda_.5} parent=1 // pred_fallthru
      _
    %1797 = vsyncpa [#allocation3], 1

// kernel: tile.37
$region0: #{tile.37}
  #allocation0 [shape = 's32[1]{0}', space=sflag, size = 0x4, scoped, tag = 'scoped memory for tile.37']
  %s0 = inlined_call_operand.vmem [shape: f32[64], index: 0, kind: input, shape index: {}]
  %s1 = inlined_call_operand.vmem [shape: f32[4,64], index: 1, kind: output, shape index: {}]
  // Predicated region
  $region2: #{tile.37} parent=0 // pred_check
    _
  $region3: #{tile.37} parent=0 // pred_check_branch
    %3 = sbr.rel (0) target = $region5
  $region4: #{tile.37} parent=0 // pred_region
    _
  $region5: #{tile.37} parent=0 // pred_fallthru
    _
  %v4 = vld [vmem:[%s0] ss:$0 sm:$0xff]
  %5 = vst [vmem:[%s1] sm:$0xf] %v4

// kernel: tile.39
$region0: #{tile.39}
  %s0 = inlined_call_operand.vmem [shape: f32[4,64], index: 0, kind: input, shape index: {}]
  %s1 = inlined_call_operand.vmem [shape: f32[1,256], index: 1, kind: output, shape index: {}]
  $region1: #{tile.39} parent=0
    #allocation0 [shape = 'u8[8192]{0}', space=vmem, size = 0x2000, scoped, tag = 'scoped mem for output reshape']
    #allocation1 [shape = 'u8[4096]{0}', space=vmem, size = 0x1000, scoped, tag = 'scoped mem for input reshape']
    %s3 = sshll.u32 1, 4
    %s4 = ssub.s32 %s3, 1
    %v5 = vld [vmem:[%s0] sm:%s4]
    %6 = vst [vmem:[#allocation1] sm:%s4] %v5
    %s7 = smov 3
    %v8 = vld [vmem:[#allocation1] ss:$2 sm:%s7]
    %vm9 = vcmask 523264
    %10 = vst.msk [vmem:[#allocation0] ss:$8 sm:$0x3] %vm9, %v8
    %s11 = scalar_lea.vmem [#allocation1], 1
    %s12 = smov 3
    %v13 = vld [vmem:[%s11] ss:$2 sm:%s12]
    %14 = vrot.lane.b32.xlu0 %v13, 64
    %v15 = vpop.permute.xlu0 %14
    %vm16 = vcmask 1048064
    %17 = vst.msk [vmem:[#allocation0] ss:$8 sm:$0x3] %vm16, %v15
    %s19 = sshll.u32 1, 1
    %s20 = ssub.s32 %s19, 1
    %v22 = vld [vmem:[#allocation0] sm:%s20]
    %s23 = sshll.u32 1, 1
    %s24 = ssub.s32 %s23, 1
    %25 = vst [vmem:[%s1] sm:%s24] %v22
    %s26 = scalar_lea.vmem [#allocation0], 8
    %v27 = vld [vmem:[%s26] sm:%s20]
    %s28 = sshll.u32 1, 1
    %s29 = ssub.s32 %s28, 1
    %s30 = scalar_lea.vmem %s1, 1
    %31 = vst [vmem:[%s30] sm:%s29] %v27

// kernel: _lambda_.7
$region0: #{_lambda_.7}
  #allocation0 [shape = 'u32[]', space=smem, size = 0x4, offset = 0x4, fixed_abs, tag = 'smem constant byte address 0x4 - core index']
  #allocation1 [shape = 'u32[144,128]{1,0:T(1,128)}', space=vmem, size = 0x12000, scoped, tag = 'internal scratch']
  %s0 = inlined_call_operand.vmem [shape: bf16[64,512], index: 0, kind: input, shape index: {}]
  %s1 = inlined_call_operand.vmem [shape: bf16[512,256], index: 1, kind: input, shape index: {}]
  %s2 = inlined_call_operand.vmem [shape: bf16[64,256], index: 2, kind: output, shape index: {0}]
  %s3 = inlined_call_operand.vmem [shape: f32[2,1,256], index: 3, kind: output, shape index: {1}]
  %s4 = inlined_call_operand.vmem [shape: f32[2,1,256], index: 4, kind: output, shape index: {2}]
  %5 = xla_tuple %s2, %s3, %s4
  %s6 = sld [smem:[#allocation0]]
  $region57: #{_lambda_.7} parent=0
    _
  %s8 = ssub.s32 1, %s6
  %s9 = scalar_select 0, %s8, %s6
  loop: start=0, step=1, limit=4
  $region2: #{_lambda_.7} parent=0 // loop_pre_header
    _
  $region3: #{_lambda_.7} parent=0 // loop_header
    %s11 = sphi 0, %s15
    %p12 = scmp.ge.s32.totalorder %s11, 4
    %s21 = sphi 0, %s23
    %s24 = sphi 0, %s21
    %s25 = sphi 0, %s24
    %s41 = sphi 0, %s25
    %s45 = sphi 0, %s45
    %s47 = sphi 0, %s45
    %s48 = sphi 0, %s47
    %s62 = sphi 0, %s48
    %s68 = sphi 0, %s70
    %s71 = sphi 0, %s68
    %s72 = sphi 0, %s71
    %s88 = sphi 0, %s72
    %s94 = sphi 0, %s96
    %s97 = sphi 0, %s94
    %s98 = sphi 0, %s97
    %s114 = sphi 0, %s98
    %s120 = sphi 0, %s122
    %s123 = sphi 0, %s120
    %s124 = sphi 0, %s123
    %s140 = sphi 0, %s124
  $region4: #{_lambda_.7} parent=0 // loop_header_branch
    %14 = sbr.rel (%p12) target = $region8
  $region5: #{_lambda_.7} parent=0 // loop_body
    %s16 = ssub.s32 %s11, 1
    %s17 = ssub.s32 %s11, 2
    %s18 = sadd.s32 %s11, 1
    %s19 = ssub.s32 %s11, %s18
    %p20 = scmp.eq.s32.totalorder %s19, 0
    %s22 = sadd.s32 %s21, 1
    %s23 = scalar_select %p20, %s21, %s22
    %p26 = pneg %p20
    %p27 = scmp.eq.s32.totalorder %s11, 1
    %p28 = por %p26, %p27
    %p29 = scmp.ne.s32.totalorder %s21, %s24
    %p30 = scmp.eq.s32.totalorder %s11, 0
    %p31 = por %p29, %p30
    %p32 = scmp.ne.s32.totalorder %s21, %s24
    %p33 = scmp.eq.s32.totalorder %s16, 1
    %p34 = por %p32, %p33
    %p35 = scmp.ne.s32.totalorder %s24, %s25
    %p36 = scmp.eq.s32.totalorder %s16, 0
    %p37 = por %p35, %p36
    %p38 = scmp.ne.s32.totalorder %s24, %s25
    %p39 = scmp.eq.s32.totalorder %s17, 1
    %p40 = por %p38, %p39
    %p42 = scmp.ne.s32.totalorder %s25, %s41
    %p43 = scmp.eq.s32.totalorder %s17, 0
    %p44 = por %p42, %p43
    %s46 = sadd.s32 %s45, 1
    %p49 = scmp.eq.s32.totalorder %s11, 1
    %p50 = scmp.ne.s32.totalorder %s45, %s47
    %p51 = scmp.eq.s32.totalorder %s11, 0
    %p52 = por %p50, %p51
    %p53 = scmp.ne.s32.totalorder %s45, %s47
    %p54 = scmp.eq.s32.totalorder %s16, 1
    %p55 = por %p53, %p54
    %p56 = scmp.ne.s32.totalorder %s47, %s48
    %p57 = scmp.eq.s32.totalorder %s16, 0
    %p58 = por %p56, %p57
    %p59 = scmp.ne.s32.totalorder %s47, %s48
    %p60 = scmp.eq.s32.totalorder %s17, 1
    %p61 = por %p59, %p60
    %p63 = scmp.ne.s32.totalorder %s48, %s62
    %p64 = scmp.eq.s32.totalorder %s17, 0
    %p65 = por %p63, %p64
    %s66 = ssub.s32 %s11, %s18
    %p67 = scmp.eq.s32.totalorder %s66, 0
    %s69 = sadd.s32 %s68, 1
    %s70 = scalar_select %p67, %s68, %s69
    %p73 = pneg %p67
    %p74 = scmp.eq.s32.totalorder %s11, 1
    %p75 = por %p73, %p74
    %p76 = scmp.ne.s32.totalorder %s68, %s71
    %p77 = scmp.eq.s32.totalorder %s11, 0
    %p78 = por %p76, %p77
    %p79 = scmp.ne.s32.totalorder %s68, %s71
    %p80 = scmp.eq.s32.totalorder %s16, 1
    %p81 = por %p79, %p80
    %p82 = scmp.ne.s32.totalorder %s71, %s72
    %p83 = scmp.eq.s32.totalorder %s16, 0
    %p84 = por %p82, %p83
    %p85 = scmp.ne.s32.totalorder %s71, %s72
    %p86 = scmp.eq.s32.totalorder %s17, 1
    %p87 = por %p85, %p86
    %p89 = scmp.ne.s32.totalorder %s72, %s88
    %p90 = scmp.eq.s32.totalorder %s17, 0
    %p91 = por %p89, %p90
    %s92 = ssub.s32 %s11, %s18
    %p93 = scmp.eq.s32.totalorder %s92, 0
    %s95 = sadd.s32 %s94, 1
    %s96 = scalar_select %p93, %s94, %s95
    %p99 = pneg %p93
    %p100 = scmp.eq.s32.totalorder %s11, 1
    %p101 = por %p99, %p100
    %p102 = scmp.ne.s32.totalorder %s94, %s97
    %p103 = scmp.eq.s32.totalorder %s11, 0
    %p104 = por %p102, %p103
    %p105 = scmp.ne.s32.totalorder %s94, %s97
    %p106 = scmp.eq.s32.totalorder %s16, 1
    %p107 = por %p105, %p106
    %p108 = scmp.ne.s32.totalorder %s97, %s98
    %p109 = scmp.eq.s32.totalorder %s16, 0
    %p110 = por %p108, %p109
    %p111 = scmp.ne.s32.totalorder %s97, %s98
    %p112 = scmp.eq.s32.totalorder %s17, 1
    %p113 = por %p111, %p112
    %p115 = scmp.ne.s32.totalorder %s98, %s114
    %p116 = scmp.eq.s32.totalorder %s17, 0
    %p117 = por %p115, %p116
    %s118 = ssub.s32 %s11, %s18
    %p119 = scmp.eq.s32.totalorder %s118, 0
    %s121 = sadd.s32 %s120, 1
    %s122 = scalar_select %p119, %s120, %s121
    %p125 = pneg %p119
    %p126 = scmp.eq.s32.totalorder %s11, 1
    %p127 = por %p125, %p126
    %p128 = scmp.ne.s32.totalorder %s120, %s123
    %p129 = scmp.eq.s32.totalorder %s11, 0
    %p130 = por %p128, %p129
    %p131 = scmp.ne.s32.totalorder %s120, %s123
    %p132 = scmp.eq.s32.totalorder %s16, 1
    %p133 = por %p131, %p132
    %p134 = scmp.ne.s32.totalorder %s123, %s124
    %p135 = scmp.eq.s32.totalorder %s16, 0
    %p136 = por %p134, %p135
    %p137 = scmp.ne.s32.totalorder %s123, %s124
    %p138 = scmp.eq.s32.totalorder %s17, 1
    %p139 = por %p137, %p138
    %p141 = scmp.ne.s32.totalorder %s124, %s140
    %p142 = scmp.eq.s32.totalorder %s17, 0
    %p143 = por %p141, %p142
    %p144 = scmp.le.s32.totalorder 1, %s11
    %p145 = scmp.lt.s32.totalorder %s11, 3
    %p146 = pnand %p144, %p145
    %p147 = pneg %p146
    // Predicated region
    $region9: #{_lambda_.7} parent=5 // pred_check
      _
    $region10: #{_lambda_.7} parent=5 // pred_check_branch
      %149 = sbr.rel (%p146) target = $region12
    $region11: #{_lambda_.7} parent=5 // pred_region
      %s150 = ssub.s32 %s11, 1
      // Predicated region
      $region13: #{_lambda_.7} parent=11 // pred_check
        %p151 = pneg %p58
      $region14: #{_lambda_.7} parent=11 // pred_check_branch
        %153 = sbr.rel (%p151) target = $region16
      $region15: #{_lambda_.7} parent=11 // pred_region
        _
      $region16: #{_lambda_.7} parent=11 // pred_fallthru
        _
    $region12: #{_lambda_.7} parent=5 // pred_fallthru
      _
    %p154 = scmp.lt.s32.totalorder %s11, 2
    // Predicated region
    $region17: #{_lambda_.7} parent=5 // pred_check
      %p155 = pneg %p154
    $region18: #{_lambda_.7} parent=5 // pred_check_branch
      %157 = sbr.rel (%p155) target = $region20
    $region19: #{_lambda_.7} parent=5 // pred_region
      // Predicated region
      $region21: #{_lambda_.7} parent=19 // pred_check
        %p158 = pneg %p31
      $region22: #{_lambda_.7} parent=19 // pred_check_branch
        %160 = sbr.rel (%p158) target = $region24
      $region23: #{_lambda_.7} parent=19 // pred_region
        %s161 = smul.u32 4, %s11
        %p162 = scmp.lt.s32.totalorder %s161, 7
        %s163 = scalar_select %p162, %s161, 7
        %s164 = smul.addr %s163, 4
        %s165 = smul.addr %s164, 4
        %s166 = scalar_lea.vmem %s0, %s165
        %s167 = smul.u32 4, %s11
      $region24: #{_lambda_.7} parent=19 // pred_fallthru
        _
    $region20: #{_lambda_.7} parent=5 // pred_fallthru
      _
    %p168 = scmp.le.s32.totalorder 1, %s11
    %p169 = scmp.lt.s32.totalorder %s11, 3
    %p170 = pnand %p168, %p169
    %p171 = pneg %p170
    // Predicated region
    $region25: #{_lambda_.7} parent=5 // pred_check
      _
    $region26: #{_lambda_.7} parent=5 // pred_check_branch
      %173 = sbr.rel (%p170) target = $region28
    $region27: #{_lambda_.7} parent=5 // pred_region
      %s174 = ssub.s32 %s11, 1
      %s175 = smul.u32 4, %s16
      %p176 = scmp.lt.s32.totalorder %s175, 7
      %s177 = scalar_select %p176, %s175, 7
      %s178 = smul.addr %s177, 4
      %s179 = smul.addr %s178, 4
      %s180 = scalar_lea.vmem %s0, %s179
      %p181 = pneg %p37
      %p182 = pneg %p34
      %p183 = pneg %p58
      %p184 = pneg %p55
      %p185 = pneg %p84
      %p186 = pneg %p81
      %s187 = smul.u32 4, %s16
      %p188 = scmp.lt.s32.totalorder %s187, 7
      %s189 = scalar_select %p188, %s187, 7
      %s190 = smul.addr %s189, 2
      %s191 = smul.addr %s190, 4
      %s192 = scalar_lea.vmem %s2, %s191
      %p193 = pneg %p110
      %p194 = pneg %p107
      %p195 = scmp.lt.s32.totalorder %s16, 1
      %s196 = scalar_select %p195, %s16, 1
      %s197 = smul.addr %s196, 2
      %s198 = scalar_lea.vmem %s3, %s197
      %p199 = pneg %p136
      %p200 = pneg %p133
      %p201 = scmp.lt.s32.totalorder %s16, 1
      %s202 = scalar_select %p201, %s16, 1
      %s203 = smul.addr %s202, 2
      %s204 = scalar_lea.vmem %s4, %s203
      %s205 = smul.u32 4, %s16
      %p206 = scmp.lt.s32.totalorder %s205, 7
      %s207 = scalar_select %p206, %s205, 7
      %s208 = smul.addr %s207, 4
      %s209 = smul.addr %s208, 4
      %s210 = scalar_lea.vmem %s0, %s209
      %s211 = smul.u32 4, %s16
      %s212 = smul.u32 4, %s16
      %p213 = scmp.lt.s32.totalorder %s212, 7
      %s214 = scalar_select %p213, %s212, 7
      %s215 = smul.addr %s214, 2
      %s216 = smul.addr %s215, 4
      %s217 = scalar_lea.vmem %s2, %s216
      %s218 = smul.u32 4, %s16
      %p219 = scmp.lt.s32.totalorder %s16, 1
      %s220 = scalar_select %p219, %s16, 1
      %s221 = smul.addr %s220, 2
      %s222 = scalar_lea.vmem %s3, %s221
      %p223 = scmp.lt.s32.totalorder %s16, 1
      %s224 = scalar_select %p223, %s16, 1
      %s225 = smul.addr %s224, 2
      %s226 = scalar_lea.vmem %s4, %s225
      %v227 = vld [vmem:[%s210] sm:$0xff]
      %v228 = vld [vmem:[%s210 + $0x8] sm:$0xff]
      %v229 = vld [vmem:[%s210 + $0x10] sm:$0xff]
      %v230 = vld [vmem:[%s210 + $0x18] sm:$0xff]
      %v231 = vld [vmem:[%s210 + $0x20] sm:$0xff]
      %v232 = vld [vmem:[%s210 + $0x28] sm:$0xff]
      %v233 = vld [vmem:[%s210 + $0x30] sm:$0xff]
      %v234 = vld [vmem:[%s210 + $0x38] sm:$0xff]
      %v235 = vld [vmem:[%s1] sm:$0xff]
      %v236 = vld [vmem:[%s1 + $0x8] sm:$0xff]
      %v237 = vld [vmem:[%s1 + $0x10] sm:$0xff]
      %v238 = vld [vmem:[%s1 + $0x18] sm:$0xff]
      %v239 = vld [vmem:[%s1 + $0x20] sm:$0xff]
      %v240 = vld [vmem:[%s1 + $0x28] sm:$0xff]
      %v241 = vld [vmem:[%s1 + $0x30] sm:$0xff]
      %v242 = vld [vmem:[%s1 + $0x38] sm:$0xff]
      %v243 = vld [vmem:[%s1 + $0x40] sm:$0xff]
      %v244 = vld [vmem:[%s1 + $0x48] sm:$0xff]
      %v245 = vld [vmem:[%s1 + $0x50] sm:$0xff]
      %v246 = vld [vmem:[%s1 + $0x58] sm:$0xff]
      %v247 = vld [vmem:[%s1 + $0x60] sm:$0xff]
      %v248 = vld [vmem:[%s1 + $0x68] sm:$0xff]
      %v249 = vld [vmem:[%s1 + $0x70] sm:$0xff]
      %v250 = vld [vmem:[%s1 + $0x78] sm:$0xff]
      %v251 = vld [vmem:[%s1 + $0x80] sm:$0xff]
      %v252 = vld [vmem:[%s1 + $0x88] sm:$0xff]
      %v253 = vld [vmem:[%s1 + $0x90] sm:$0xff]
      %v254 = vld [vmem:[%s1 + $0x98] sm:$0xff]
      %v255 = vld [vmem:[%s1 + $0xa0] sm:$0xff]
      %v256 = vld [vmem:[%s1 + $0xa8] sm:$0xff]
      %v257 = vld [vmem:[%s1 + $0xb0] sm:$0xff]
      %v258 = vld [vmem:[%s1 + $0xb8] sm:$0xff]
      %v259 = vld [vmem:[%s1 + $0xc0] sm:$0xff]
      %v260 = vld [vmem:[%s1 + $0xc8] sm:$0xff]
      %v261 = vld [vmem:[%s1 + $0xd0] sm:$0xff]
      %v262 = vld [vmem:[%s1 + $0xd8] sm:$0xff]
      %v263 = vld [vmem:[%s1 + $0xe0] sm:$0xff]
      %v264 = vld [vmem:[%s1 + $0xe8] sm:$0xff]
      %v265 = vld [vmem:[%s1 + $0xf0] sm:$0xff]
      %v266 = vld [vmem:[%s1 + $0xf8] sm:$0xff]
      %v267 = vld [vmem:[%s1 + $0x100] sm:$0xff]
      %v268 = vld [vmem:[%s1 + $0x108] sm:$0xff]
      %v269 = vld [vmem:[%s1 + $0x110] sm:$0xff]
      %v270 = vld [vmem:[%s1 + $0x118] sm:$0xff]
      %v271 = vld [vmem:[%s1 + $0x120] sm:$0xff]
      %v272 = vld [vmem:[%s1 + $0x128] sm:$0xff]
      %v273 = vld [vmem:[%s1 + $0x130] sm:$0xff]
      %v274 = vld [vmem:[%s1 + $0x138] sm:$0xff]
      %v275 = vld [vmem:[%s1 + $0x140] sm:$0xff]
      %v276 = vld [vmem:[%s1 + $0x148] sm:$0xff]
      %v277 = vld [vmem:[%s1 + $0x150] sm:$0xff]
      %v278 = vld [vmem:[%s1 + $0x158] sm:$0xff]
      %v279 = vld [vmem:[%s1 + $0x160] sm:$0xff]
      %v280 = vld [vmem:[%s1 + $0x168] sm:$0xff]
      %v281 = vld [vmem:[%s1 + $0x170] sm:$0xff]
      %v282 = vld [vmem:[%s1 + $0x178] sm:$0xff]
      %v283 = vld [vmem:[%s1 + $0x180] sm:$0xff]
      %v284 = vld [vmem:[%s1 + $0x188] sm:$0xff]
      %v285 = vld [vmem:[%s1 + $0x190] sm:$0xff]
      %v286 = vld [vmem:[%s1 + $0x198] sm:$0xff]
      %v287 = vld [vmem:[%s1 + $0x1a0] sm:$0xff]
      %v288 = vld [vmem:[%s1 + $0x1a8] sm:$0xff]
      %v289 = vld [vmem:[%s1 + $0x1b0] sm:$0xff]
      %v290 = vld [vmem:[%s1 + $0x1b8] sm:$0xff]
      %v291 = vld [vmem:[%s1 + $0x1c0] sm:$0xff]
      %v292 = vld [vmem:[%s1 + $0x1c8] sm:$0xff]
      %v293 = vld [vmem:[%s1 + $0x1d0] sm:$0xff]
      %v294 = vld [vmem:[%s1 + $0x1d8] sm:$0xff]
      %v295 = vld [vmem:[%s1 + $0x1e0] sm:$0xff]
      %v296 = vld [vmem:[%s1 + $0x1e8] sm:$0xff]
      %v297 = vld [vmem:[%s1 + $0x1f0] sm:$0xff]
      %v298 = vld [vmem:[%s1 + $0x1f8] sm:$0xff]
      %v307 = vunpack.c.l.b16 %v227
      %v308 = vunpack.c.h.b16 %v227
      %v309 = vunpack.c.l.b16 %v228
      %v310 = vunpack.c.h.b16 %v228
      %v311 = vunpack.c.l.b16 %v229
      %v312 = vunpack.c.h.b16 %v229
      %v313 = vunpack.c.l.b16 %v230
      %v314 = vunpack.c.h.b16 %v230
      %v315 = vunpack.c.l.b16 %v231
      %v316 = vunpack.c.h.b16 %v231
      %v317 = vunpack.c.l.b16 %v232
      %v318 = vunpack.c.h.b16 %v232
      %v319 = vunpack.c.l.b16 %v233
      %v320 = vunpack.c.h.b16 %v233
      %v321 = vunpack.c.l.b16 %v234
      %v322 = vunpack.c.h.b16 %v234
      %v323 = vpack.c.b16 %v311, %v307
      %v324 = vpack.c.b16 %v312, %v308
      %v325 = vpack.c.b16 %v313, %v309
      %v326 = vpack.c.b16 %v314, %v310
      %v327 = vpack.c.b16 %v319, %v315
      %v328 = vpack.c.b16 %v320, %v316
      %v329 = vpack.c.b16 %v321, %v317
      %v330 = vpack.c.b16 %v322, %v318
      %v403 = vunpack.c.l.b16 %v235
      %v404 = vunpack.c.h.b16 %v235
      %v405 = vunpack.c.l.b16 %v236
      %v406 = vunpack.c.h.b16 %v236
      %v407 = vunpack.c.l.b16 %v237
      %v408 = vunpack.c.h.b16 %v237
      %v409 = vunpack.c.l.b16 %v238
      %v410 = vunpack.c.h.b16 %v238
      %v411 = vunpack.c.l.b16 %v239
      %v412 = vunpack.c.h.b16 %v239
      %v413 = vunpack.c.l.b16 %v240
      %v414 = vunpack.c.h.b16 %v240
      %v415 = vunpack.c.l.b16 %v241
      %v416 = vunpack.c.h.b16 %v241
      %v417 = vunpack.c.l.b16 %v242
      %v418 = vunpack.c.h.b16 %v242
      %v419 = vunpack.c.l.b16 %v243
      %v420 = vunpack.c.h.b16 %v243
      %v421 = vunpack.c.l.b16 %v244
      %v422 = vunpack.c.h.b16 %v244
      %v423 = vunpack.c.l.b16 %v245
      %v424 = vunpack.c.h.b16 %v245
      %v425 = vunpack.c.l.b16 %v246
      %v426 = vunpack.c.h.b16 %v246
      %v427 = vunpack.c.l.b16 %v247
      %v428 = vunpack.c.h.b16 %v247
      %v429 = vunpack.c.l.b16 %v248
      %v430 = vunpack.c.h.b16 %v248
      %v431 = vunpack.c.l.b16 %v249
      %v432 = vunpack.c.h.b16 %v249
      %v433 = vunpack.c.l.b16 %v250
      %v434 = vunpack.c.h.b16 %v250
      %v435 = vunpack.c.l.b16 %v251
      %v436 = vunpack.c.h.b16 %v251
      %v437 = vunpack.c.l.b16 %v252
      %v438 = vunpack.c.h.b16 %v252
      %v439 = vunpack.c.l.b16 %v253
      %v440 = vunpack.c.h.b16 %v253
      %v441 = vunpack.c.l.b16 %v254
      %v442 = vunpack.c.h.b16 %v254
      %v443 = vunpack.c.l.b16 %v255
      %v444 = vunpack.c.h.b16 %v255
      %v445 = vunpack.c.l.b16 %v256
      %v446 = vunpack.c.h.b16 %v256
      %v447 = vunpack.c.l.b16 %v257
      %v448 = vunpack.c.h.b16 %v257
      %v449 = vunpack.c.l.b16 %v258
      %v450 = vunpack.c.h.b16 %v258
      %v451 = vunpack.c.l.b16 %v259
      %v452 = vunpack.c.h.b16 %v259
      %v453 = vunpack.c.l.b16 %v260
      %v454 = vunpack.c.h.b16 %v260
      %v455 = vunpack.c.l.b16 %v261
      %v456 = vunpack.c.h.b16 %v261
      %v457 = vunpack.c.l.b16 %v262
      %v458 = vunpack.c.h.b16 %v262
      %v459 = vunpack.c.l.b16 %v263
      %v460 = vunpack.c.h.b16 %v263
      %v461 = vunpack.c.l.b16 %v264
      %v462 = vunpack.c.h.b16 %v264
      %v463 = vunpack.c.l.b16 %v265
      %v464 = vunpack.c.h.b16 %v265
      %v465 = vunpack.c.l.b16 %v266
      %v466 = vunpack.c.h.b16 %v266
      %v467 = vunpack.c.l.b16 %v267
      %v468 = vunpack.c.h.b16 %v267
      %v469 = vunpack.c.l.b16 %v268
      %v470 = vunpack.c.h.b16 %v268
      %v471 = vunpack.c.l.b16 %v269
      %v472 = vunpack.c.h.b16 %v269
      %v473 = vunpack.c.l.b16 %v270
      %v474 = vunpack.c.h.b16 %v270
      %v475 = vunpack.c.l.b16 %v271
      %v476 = vunpack.c.h.b16 %v271
      %v477 = vunpack.c.l.b16 %v272
      %v478 = vunpack.c.h.b16 %v272
      %v479 = vunpack.c.l.b16 %v273
      %v480 = vunpack.c.h.b16 %v273
      %v481 = vunpack.c.l.b16 %v274
      %v482 = vunpack.c.h.b16 %v274
      %v483 = vunpack.c.l.b16 %v275
      %v484 = vunpack.c.h.b16 %v275
      %v485 = vunpack.c.l.b16 %v276
      %v486 = vunpack.c.h.b16 %v276
      %v487 = vunpack.c.l.b16 %v277
      %v488 = vunpack.c.h.b16 %v277
      %v489 = vunpack.c.l.b16 %v278
      %v490 = vunpack.c.h.b16 %v278
      %v491 = vunpack.c.l.b16 %v279
      %v492 = vunpack.c.h.b16 %v279
      %v493 = vunpack.c.l.b16 %v280
      %v494 = vunpack.c.h.b16 %v280
      %v495 = vunpack.c.l.b16 %v281
      %v496 = vunpack.c.h.b16 %v281
      %v497 = vunpack.c.l.b16 %v282
      %v498 = vunpack.c.h.b16 %v282
      %v499 = vunpack.c.l.b16 %v283
      %v500 = vunpack.c.h.b16 %v283
      %v501 = vunpack.c.l.b16 %v284
      %v502 = vunpack.c.h.b16 %v284
      %v503 = vunpack.c.l.b16 %v285
      %v504 = vunpack.c.h.b16 %v285
      %v505 = vunpack.c.l.b16 %v286
      %v506 = vunpack.c.h.b16 %v286
      %v507 = vunpack.c.l.b16 %v287
      %v508 = vunpack.c.h.b16 %v287
      %v509 = vunpack.c.l.b16 %v288
      %v510 = vunpack.c.h.b16 %v288
      %v511 = vunpack.c.l.b16 %v289
      %v512 = vunpack.c.h.b16 %v289
      %v513 = vunpack.c.l.b16 %v290
      %v514 = vunpack.c.h.b16 %v290
      %v515 = vunpack.c.l.b16 %v291
      %v516 = vunpack.c.h.b16 %v291
      %v517 = vunpack.c.l.b16 %v292
      %v518 = vunpack.c.h.b16 %v292
      %v519 = vunpack.c.l.b16 %v293
      %v520 = vunpack.c.h.b16 %v293
      %v521 = vunpack.c.l.b16 %v294
      %v522 = vunpack.c.h.b16 %v294
      %v523 = vunpack.c.l.b16 %v295
      %v524 = vunpack.c.h.b16 %v295
      %v525 = vunpack.c.l.b16 %v296
      %v526 = vunpack.c.h.b16 %v296
      %v527 = vunpack.c.l.b16 %v297
      %v528 = vunpack.c.h.b16 %v297
      %v529 = vunpack.c.l.b16 %v298
      %v530 = vunpack.c.h.b16 %v298
      %v531 = vpack.c.b16 %v405, %v403
      %v532 = vpack.c.b16 %v406, %v404
      %v533 = vpack.c.b16 %v409, %v407
      %v534 = vpack.c.b16 %v410, %v408
      %v535 = vpack.c.b16 %v413, %v411
      %v536 = vpack.c.b16 %v414, %v412
      %v537 = vpack.c.b16 %v417, %v415
      %v538 = vpack.c.b16 %v418, %v416
      %v539 = vpack.c.b16 %v421, %v419
      %v540 = vpack.c.b16 %v422, %v420
      %v541 = vpack.c.b16 %v425, %v423
      %v542 = vpack.c.b16 %v426, %v424
      %v543 = vpack.c.b16 %v429, %v427
      %v544 = vpack.c.b16 %v430, %v428
      %v545 = vpack.c.b16 %v433, %v431
      %v546 = vpack.c.b16 %v434, %v432
      %v547 = vpack.c.b16 %v437, %v435
      %v548 = vpack.c.b16 %v438, %v436
      %v549 = vpack.c.b16 %v441, %v439
      %v550 = vpack.c.b16 %v442, %v440
      %v551 = vpack.c.b16 %v445, %v443
      %v552 = vpack.c.b16 %v446, %v444
      %v553 = vpack.c.b16 %v449, %v447
      %v554 = vpack.c.b16 %v450, %v448
      %v555 = vpack.c.b16 %v453, %v451
      %v556 = vpack.c.b16 %v454, %v452
      %v557 = vpack.c.b16 %v457, %v455
      %v558 = vpack.c.b16 %v458, %v456
      %v559 = vpack.c.b16 %v461, %v459
      %v560 = vpack.c.b16 %v462, %v460
      %v561 = vpack.c.b16 %v465, %v463
      %v562 = vpack.c.b16 %v466, %v464
      %v563 = vpack.c.b16 %v469, %v467
      %v564 = vpack.c.b16 %v470, %v468
      %v565 = vpack.c.b16 %v473, %v471
      %v566 = vpack.c.b16 %v474, %v472
      %v567 = vpack.c.b16 %v477, %v475
      %v568 = vpack.c.b16 %v478, %v476
      %v569 = vpack.c.b16 %v481, %v479
      %v570 = vpack.c.b16 %v482, %v480
      %v571 = vpack.c.b16 %v485, %v483
      %v572 = vpack.c.b16 %v486, %v484
      %v573 = vpack.c.b16 %v489, %v487
      %v574 = vpack.c.b16 %v490, %v488
      %v575 = vpack.c.b16 %v493, %v491
      %v576 = vpack.c.b16 %v494, %v492
      %v577 = vpack.c.b16 %v497, %v495
      %v578 = vpack.c.b16 %v498, %v496
      %v579 = vpack.c.b16 %v501, %v499
      %v580 = vpack.c.b16 %v502, %v500
      %v581 = vpack.c.b16 %v505, %v503
      %v582 = vpack.c.b16 %v506, %v504
      %v583 = vpack.c.b16 %v509, %v507
      %v584 = vpack.c.b16 %v510, %v508
      %v585 = vpack.c.b16 %v513, %v511
      %v586 = vpack.c.b16 %v514, %v512
      %v587 = vpack.c.b16 %v517, %v515
      %v588 = vpack.c.b16 %v518, %v516
      %v589 = vpack.c.b16 %v521, %v519
      %v590 = vpack.c.b16 %v522, %v520
      %v591 = vpack.c.b16 %v525, %v523
      %v592 = vpack.c.b16 %v526, %v524
      %v593 = vpack.c.b16 %v529, %v527
      %v594 = vpack.c.b16 %v530, %v528
      %659 = vmatprep.subr.bf16.mxu0 %v546
      %660 = vmatpush1.bf16.msra.mxu0 %v545
      %661 = vmatprep.subr.bf16.mxu0 %v544
      %662 = vmatpush1.bf16.msra.mxu0 %v543
      %663 = vmatprep.subr.bf16.mxu0 %v542
      %664 = vmatpush1.bf16.msra.mxu0 %v541
      %665 = vmatprep.subr.bf16.mxu0 %v540
      %666 = vmatpush1.bf16.msra.mxu0 %v539
      %667 = vmatprep.subr.bf16.mxu0 %v538
      %668 = vmatpush1.bf16.msra.mxu0 %v537
      %669 = vmatprep.subr.bf16.mxu0 %v536
      %670 = vmatpush1.bf16.msra.mxu0 %v535
      %671 = vmatprep.subr.bf16.mxu0 %v534
      %672 = vmatpush1.bf16.msra.mxu0 %v533
      %673 = vmatprep.subr.bf16.mxu0 %v532
      %674 = vmatpush1.bf16.msra.mxu0 %v531
      %675 = vmatprep.subr.bf16.mxu0 %v562
      %676 = vmatpush2.bf16.msra.mxu0 %v561
      %677 = vmatprep.subr.bf16.mxu0 %v560
      %678 = vmatpush2.bf16.msra.mxu0 %v559
      %679 = vmatprep.subr.bf16.mxu0 %v558
      %680 = vmatpush2.bf16.msra.mxu0 %v557
      %681 = vmatprep.subr.bf16.mxu0 %v556
      %682 = vmatpush2.bf16.msra.mxu0 %v555
      %683 = vmatprep.subr.bf16.mxu0 %v554
      %684 = vmatpush2.bf16.msra.mxu0 %v553
      %685 = vmatprep.subr.bf16.mxu0 %v552
      %686 = vmatpush2.bf16.msra.mxu0 %v551
      %687 = vmatprep.subr.bf16.mxu0 %v550
      %688 = vmatpush2.bf16.msra.mxu0 %v549
      %689 = vmatprep.subr.bf16.mxu0 %v548
      %690 = vmatpush2.bf16.msra.mxu0 %v547
      %691 = vmatprep.mubr.bf16.mxu0 %v324
      %692 = vmatmul.mubr.bf16.gmra.mxu0 %v323
      %v693 = vpop.f32.mrf.mxu0
      %v694 = vadd.f32 0.0, %v693
      %v695 = vpop.f32.mrf.mxu0
      %v696 = vadd.f32 0.0, %v695
      %v697 = vpop.f32.mrf.mxu0
      %v698 = vadd.f32 0.0, %v697
      %v699 = vpop.f32.mrf.mxu0
      %v700 = vadd.f32 0.0, %v699
      %701 = vmatprep.mubr.bf16.mxu0 %v328
      %702 = vmatmul.mubr.bf16.gmra.mxu0 %v327
      %v703 = vpop.f32.mrf.mxu0
      %v704 = vadd.f32 0.0, %v703
      %v705 = vpop.f32.mrf.mxu0
      %v706 = vadd.f32 0.0, %v705
      %v707 = vpop.f32.mrf.mxu0
      %v708 = vadd.f32 0.0, %v707
      %v709 = vpop.f32.mrf.mxu0
      %v710 = vadd.f32 0.0, %v709
      %711 = vdwg.mxu0
      %712 = vmatprep.subr.bf16.mxu0 %v578
      %713 = vmatpush1.bf16.msra.mxu0 %v577
      %714 = vmatprep.subr.bf16.mxu0 %v576
      %715 = vmatpush1.bf16.msra.mxu0 %v575
      %716 = vmatprep.subr.bf16.mxu0 %v574
      %717 = vmatpush1.bf16.msra.mxu0 %v573
      %718 = vmatprep.subr.bf16.mxu0 %v572
      %719 = vmatpush1.bf16.msra.mxu0 %v571
      %720 = vmatprep.subr.bf16.mxu0 %v570
      %721 = vmatpush1.bf16.msra.mxu0 %v569
      %722 = vmatprep.subr.bf16.mxu0 %v568
      %723 = vmatpush1.bf16.msra.mxu0 %v567
      %724 = vmatprep.subr.bf16.mxu0 %v566
      %725 = vmatpush1.bf16.msra.mxu0 %v565
      %726 = vmatprep.subr.bf16.mxu0 %v564
      %727 = vmatpush1.bf16.msra.mxu0 %v563
      %728 = vmatprep.subr.bf16.mxu0 %v594
      %729 = vmatpush2.bf16.msra.mxu0 %v593
      %730 = vmatprep.subr.bf16.mxu0 %v592
      %731 = vmatpush2.bf16.msra.mxu0 %v591
      %732 = vmatprep.subr.bf16.mxu0 %v590
      %733 = vmatpush2.bf16.msra.mxu0 %v589
      %734 = vmatprep.subr.bf16.mxu0 %v588
      %735 = vmatpush2.bf16.msra.mxu0 %v587
      %736 = vmatprep.subr.bf16.mxu0 %v586
      %737 = vmatpush2.bf16.msra.mxu0 %v585
      %738 = vmatprep.subr.bf16.mxu0 %v584
      %739 = vmatpush2.bf16.msra.mxu0 %v583
      %740 = vmatprep.subr.bf16.mxu0 %v582
      %741 = vmatpush2.bf16.msra.mxu0 %v581
      %742 = vmatprep.subr.bf16.mxu0 %v580
      %743 = vmatpush2.bf16.msra.mxu0 %v579
      %744 = vmatprep.mubr.bf16.mxu0 %v326
      %745 = vmatmul.mubr.bf16.gmra.mxu0 %v325
      %v746 = vpop.f32.mrf.mxu0
      %v747 = vadd.f32 %v694, %v746
      %v748 = vpop.f32.mrf.mxu0
      %v749 = vadd.f32 %v696, %v748
      %v750 = vpop.f32.mrf.mxu0
      %v751 = vadd.f32 %v698, %v750
      %v752 = vpop.f32.mrf.mxu0
      %v753 = vadd.f32 %v700, %v752
      %754 = vmatprep.mubr.bf16.mxu0 %v330
      %755 = vmatmul.mubr.bf16.gmra.mxu0 %v329
      %v756 = vpop.f32.mrf.mxu0
      %v757 = vadd.f32 %v704, %v756
      %v758 = vpop.f32.mrf.mxu0
      %v759 = vadd.f32 %v706, %v758
      %v760 = vpop.f32.mrf.mxu0
      %v761 = vadd.f32 %v708, %v760
      %v762 = vpop.f32.mrf.mxu0
      %v763 = vadd.f32 %v710, %v762
      %764 = vdwg.mxu0
      %v765 = vpack.c.bf16 %v751, %v747
      %v766 = vpack.c.bf16 %v753, %v749
      %v767 = vpack.c.bf16 %v761, %v757
      %v768 = vpack.c.bf16 %v763, %v759
      %v773 = vunpack.c.l.b16 %v765
      %v774 = vunpack.c.l.b16 %v766
      %v775 = vunpack.c.h.b16 %v765
      %v776 = vunpack.c.h.b16 %v766
      %v777 = vunpack.c.l.b16 %v767
      %v778 = vunpack.c.l.b16 %v768
      %v779 = vunpack.c.h.b16 %v767
      %v780 = vunpack.c.h.b16 %v768
      %v781 = vpack.c.b16 %v774, %v773
      %v782 = vpack.c.b16 %v776, %v775
      %v783 = vpack.c.b16 %v778, %v777
      %v784 = vpack.c.b16 %v780, %v779
      %789 = vst [vmem:[%s217] sm:$0xff] %v781
      %790 = vst [vmem:[%s217 + $0x8] sm:$0xff] %v782
      %791 = vst [vmem:[%s217 + $0x10] sm:$0xff] %v783
      %792 = vst [vmem:[%s217 + $0x18] sm:$0xff] %v784
      %v793 = vunpack.c.l.bf16 %v765
      %v794 = vunpack.c.l.bf16 %v766
      %v795 = vunpack.c.h.bf16 %v765
      %v796 = vunpack.c.h.bf16 %v766
      %v797 = vunpack.c.l.bf16 %v767
      %v798 = vunpack.c.l.bf16 %v768
      %v799 = vunpack.c.h.bf16 %v767
      %v800 = vunpack.c.h.bf16 %v768
      %v801 = vadd.f32 %v793, %v795
      %v802 = vadd.f32 %v801, %v797
      %v803 = vadd.f32 %v802, %v799
      %v804 = vrot.slane %v803, 4
      %v805 = vadd.f32 %v803, %v804
      %v806 = vrot.slane %v805, 2
      %v807 = vadd.f32 %v805, %v806
      %v808 = vrot.slane %v807, 1
      %v809 = vadd.f32 %v807, %v808
      %v810 = vadd.f32 %v794, %v796
      %v811 = vadd.f32 %v810, %v798
      %v812 = vadd.f32 %v811, %v800
      %v813 = vrot.slane %v812, 4
      %v814 = vadd.f32 %v812, %v813
      %v815 = vrot.slane %v814, 2
      %v816 = vadd.f32 %v814, %v815
      %v817 = vrot.slane %v816, 1
      %v818 = vadd.f32 %v816, %v817
      %v821 = vcombine.low %v809, %v818
      %v823 = vunpack.c.l.s4 1966171168
      %v824 = vunpack.c.0.s8 %v823
      %v825 = vlaneseq
      %v826 = vshrl.u32 %v825, 7
      %v827 = vsub.s32 %v824, %v826
      %v828 = vrot.slane %v821, %v827
      %v830 = vunpack.c.l.s4 1966171168
      %v831 = vunpack.c.0.s8 %v830
      %v832 = vlaneseq
      %v833 = vshrl.u32 %v832, 7
      %v834 = vsub.s32 %v831, %v833
      %v835 = vrot.slane %v828, %v834
      %v837 = vlaneseq
      %vm838 = vcmp.ge.s32.totalorder %v837, 0
      %vm839 = vcmp.lt.s32.totalorder %v837, 256
      %vm840 = vmand %vm838, %vm839
      %841 = vst.msk [vmem:[%s222] sm:$0x3] %vm840, %v835
      %v842 = vmul.f32 %v793, %v793
      %v843 = vmul.f32 %v794, %v794
      %v844 = vmul.f32 %v795, %v795
      %v845 = vmul.f32 %v796, %v796
      %v846 = vmul.f32 %v797, %v797
      %v847 = vmul.f32 %v798, %v798
      %v848 = vmul.f32 %v799, %v799
      %v849 = vmul.f32 %v800, %v800
      %v850 = vadd.f32 %v842, %v844
      %v851 = vadd.f32 %v850, %v846
      %v852 = vadd.f32 %v851, %v848
      %v853 = vrot.slane %v852, 4
      %v854 = vadd.f32 %v852, %v853
      %v855 = vrot.slane %v854, 2
      %v856 = vadd.f32 %v854, %v855
      %v857 = vrot.slane %v856, 1
      %v858 = vadd.f32 %v856, %v857
      %v859 = vadd.f32 %v843, %v845
      %v860 = vadd.f32 %v859, %v847
      %v861 = vadd.f32 %v860, %v849
      %v862 = vrot.slane %v861, 4
      %v863 = vadd.f32 %v861, %v862
      %v864 = vrot.slane %v863, 2
      %v865 = vadd.f32 %v863, %v864
      %v866 = vrot.slane %v865, 1
      %v867 = vadd.f32 %v865, %v866
      %v870 = vcombine.low %v858, %v867
      %v872 = vunpack.c.l.s4 1966171168
      %v873 = vunpack.c.0.s8 %v872
      %v874 = vlaneseq
      %v875 = vshrl.u32 %v874, 7
      %v876 = vsub.s32 %v873, %v875
      %v877 = vrot.slane %v870, %v876
      %v879 = vunpack.c.l.s4 1966171168
      %v880 = vunpack.c.0.s8 %v879
      %v881 = vlaneseq
      %v882 = vshrl.u32 %v881, 7
      %v883 = vsub.s32 %v880, %v882
      %v884 = vrot.slane %v877, %v883
      %886 = vst.msk [vmem:[%s226] sm:$0x3] %vm840, %v884
      %s887 = smul.u32 4, %s16
      %p888 = scmp.lt.s32.totalorder %s887, 7
      %s889 = scalar_select %p888, %s887, 7
      %s890 = smul.addr %s889, 2
      %s891 = smul.addr %s890, 4
      %s892 = scalar_lea.vmem %s2, %s891
      %p893 = scmp.lt.s32.totalorder %s16, 1
      %s894 = scalar_select %p893, %s16, 1
      %s895 = smul.addr %s894, 2
      %s896 = scalar_lea.vmem %s3, %s895
      %p897 = scmp.lt.s32.totalorder %s16, 1
      %s898 = scalar_select %p897, %s16, 1
      %s899 = smul.addr %s898, 2
      %s900 = scalar_lea.vmem %s4, %s899
      // Predicated region
      $region29: #{_lambda_.7} parent=27 // pred_check
        %p901 = pneg %p81
      $region30: #{_lambda_.7} parent=27 // pred_check_branch
        %903 = sbr.rel (%p901) target = $region32
      $region31: #{_lambda_.7} parent=27 // pred_region
        %s904 = smul.u32 4, %s16
      $region32: #{_lambda_.7} parent=27 // pred_fallthru
        _
      // Predicated region
      $region33: #{_lambda_.7} parent=27 // pred_check
        %p905 = pneg %p107
      $region34: #{_lambda_.7} parent=27 // pred_check_branch
        %907 = sbr.rel (%p905) target = $region36
      $region35: #{_lambda_.7} parent=27 // pred_region
        _
      $region36: #{_lambda_.7} parent=27 // pred_fallthru
        _
      // Predicated region
      $region37: #{_lambda_.7} parent=27 // pred_check
        %p908 = pneg %p133
      $region38: #{_lambda_.7} parent=27 // pred_check_branch
        %910 = sbr.rel (%p908) target = $region40
      $region39: #{_lambda_.7} parent=27 // pred_region
        _
      $region40: #{_lambda_.7} parent=27 // pred_fallthru
        _
    $region28: #{_lambda_.7} parent=5 // pred_fallthru
      _
    %p911 = scmp.le.s32.totalorder 2, %s11
    // Predicated region
    $region41: #{_lambda_.7} parent=5 // pred_check
      %p912 = pneg %p911
    $region42: #{_lambda_.7} parent=5 // pred_check_branch
      %914 = sbr.rel (%p912) target = $region44
    $region43: #{_lambda_.7} parent=5 // pred_region
      %s915 = ssub.s32 %s11, 2
      // Predicated region
      $region45: #{_lambda_.7} parent=43 // pred_check
        %p916 = pneg %p87
      $region46: #{_lambda_.7} parent=43 // pred_check_branch
        %918 = sbr.rel (%p916) target = $region48
      $region47: #{_lambda_.7} parent=43 // pred_region
        %s919 = smul.u32 4, %s17
        %p920 = scmp.lt.s32.totalorder %s919, 7
        %s921 = scalar_select %p920, %s919, 7
        %s922 = smul.addr %s921, 2
        %s923 = smul.addr %s922, 4
        %s924 = scalar_lea.vmem %s2, %s923
      $region48: #{_lambda_.7} parent=43 // pred_fallthru
        _
      // Predicated region
      $region49: #{_lambda_.7} parent=43 // pred_check
        %p925 = pneg %p113
      $region50: #{_lambda_.7} parent=43 // pred_check_branch
        %927 = sbr.rel (%p925) target = $region52
      $region51: #{_lambda_.7} parent=43 // pred_region
        %p928 = scmp.lt.s32.totalorder %s17, 1
        %s929 = scalar_select %p928, %s17, 1
        %s930 = smul.addr %s929, 2
        %s931 = scalar_lea.vmem %s3, %s930
      $region52: #{_lambda_.7} parent=43 // pred_fallthru
        _
      // Predicated region
      $region53: #{_lambda_.7} parent=43 // pred_check
        %p932 = pneg %p139
      $region54: #{_lambda_.7} parent=43 // pred_check_branch
        %934 = sbr.rel (%p932) target = $region56
      $region55: #{_lambda_.7} parent=43 // pred_region
        %p935 = scmp.lt.s32.totalorder %s17, 1
        %s936 = scalar_select %p935, %s17, 1
        %s937 = smul.addr %s936, 2
        %s938 = scalar_lea.vmem %s4, %s937
      $region56: #{_lambda_.7} parent=43 // pred_fallthru
        _
    $region44: #{_lambda_.7} parent=5 // pred_fallthru
      _
  $region6: #{_lambda_.7} parent=0 // loop_footer
    %s15 = sadd.s32 1, %s11
  $region7: #{_lambda_.7} parent=0 // loop_footer_branch
    %10 = sbr.rel target = $region3
  $region8: #{_lambda_.7} parent=0 // loop_exit
    _

// kernel: _lambda_.8
$region0: #{_lambda_.8}
  #allocation0 [shape = 'u32[]', space=smem, size = 0x4, offset = 0x4, fixed_abs, tag = 'smem constant byte address 0x4 - core index']
  #allocation1 [shape = 'u32[144,128]{1,0:T(1,128)}', space=vmem, size = 0x12000, scoped, tag = 'internal scratch']
  %s0 = inlined_call_operand.vmem [shape: bf16[64,256], index: 0, kind: input, shape index: {}]
  %s1 = inlined_call_operand.vmem [shape: f32[1,256], index: 1, kind: input, shape index: {}]
  %s2 = inlined_call_operand.vmem [shape: f32[1,256], index: 2, kind: input, shape index: {}]
  %s3 = inlined_call_operand.vmem [shape: bf16[64,256], index: 3, kind: output, shape index: {}]
  %s4 = sld [smem:[#allocation0]]
  $region45: #{_lambda_.8} parent=0
    _
  %s6 = ssub.s32 1, %s4
  %s7 = scalar_select 0, %s6, %s4
  loop: start=0, step=1, limit=4
  $region2: #{_lambda_.8} parent=0 // loop_pre_header
    _
  $region3: #{_lambda_.8} parent=0 // loop_header
    %s9 = sphi 0, %s13
    %p10 = scmp.ge.s32.totalorder %s9, 4
    %s19 = sphi 0, %s21
    %s22 = sphi 0, %s19
    %s23 = sphi 0, %s22
    %s39 = sphi 0, %s23
    %s43 = sphi 0, %s43
    %s45 = sphi 0, %s43
    %s46 = sphi 0, %s45
    %s60 = sphi 0, %s46
    %s64 = sphi 0, %s64
    %s66 = sphi 0, %s64
    %s67 = sphi 0, %s66
    %s81 = sphi 0, %s67
    %s87 = sphi 0, %s89
    %s90 = sphi 0, %s87
    %s91 = sphi 0, %s90
    %s107 = sphi 0, %s91
  $region4: #{_lambda_.8} parent=0 // loop_header_branch
    %12 = sbr.rel (%p10) target = $region8
  $region5: #{_lambda_.8} parent=0 // loop_body
    %s14 = ssub.s32 %s9, 1
    %s15 = ssub.s32 %s9, 2
    %s16 = sadd.s32 %s9, 1
    %s17 = ssub.s32 %s9, %s16
    %p18 = scmp.eq.s32.totalorder %s17, 0
    %s20 = sadd.s32 %s19, 1
    %s21 = scalar_select %p18, %s19, %s20
    %p24 = pneg %p18
    %p25 = scmp.eq.s32.totalorder %s9, 1
    %p26 = por %p24, %p25
    %p27 = scmp.ne.s32.totalorder %s19, %s22
    %p28 = scmp.eq.s32.totalorder %s9, 0
    %p29 = por %p27, %p28
    %p30 = scmp.ne.s32.totalorder %s19, %s22
    %p31 = scmp.eq.s32.totalorder %s14, 1
    %p32 = por %p30, %p31
    %p33 = scmp.ne.s32.totalorder %s22, %s23
    %p34 = scmp.eq.s32.totalorder %s14, 0
    %p35 = por %p33, %p34
    %p36 = scmp.ne.s32.totalorder %s22, %s23
    %p37 = scmp.eq.s32.totalorder %s15, 1
    %p38 = por %p36, %p37
    %p40 = scmp.ne.s32.totalorder %s23, %s39
    %p41 = scmp.eq.s32.totalorder %s15, 0
    %p42 = por %p40, %p41
    %s44 = sadd.s32 %s43, 1
    %p47 = scmp.eq.s32.totalorder %s9, 1
    %p48 = scmp.ne.s32.totalorder %s43, %s45
    %p49 = scmp.eq.s32.totalorder %s9, 0
    %p50 = por %p48, %p49
    %p51 = scmp.ne.s32.totalorder %s43, %s45
    %p52 = scmp.eq.s32.totalorder %s14, 1
    %p53 = por %p51, %p52
    %p54 = scmp.ne.s32.totalorder %s45, %s46
    %p55 = scmp.eq.s32.totalorder %s14, 0
    %p56 = por %p54, %p55
    %p57 = scmp.ne.s32.totalorder %s45, %s46
    %p58 = scmp.eq.s32.totalorder %s15, 1
    %p59 = por %p57, %p58
    %p61 = scmp.ne.s32.totalorder %s46, %s60
    %p62 = scmp.eq.s32.totalorder %s15, 0
    %p63 = por %p61, %p62
    %s65 = sadd.s32 %s64, 1
    %p68 = scmp.eq.s32.totalorder %s9, 1
    %p69 = scmp.ne.s32.totalorder %s64, %s66
    %p70 = scmp.eq.s32.totalorder %s9, 0
    %p71 = por %p69, %p70
    %p72 = scmp.ne.s32.totalorder %s64, %s66
    %p73 = scmp.eq.s32.totalorder %s14, 1
    %p74 = por %p72, %p73
    %p75 = scmp.ne.s32.totalorder %s66, %s67
    %p76 = scmp.eq.s32.totalorder %s14, 0
    %p77 = por %p75, %p76
    %p78 = scmp.ne.s32.totalorder %s66, %s67
    %p79 = scmp.eq.s32.totalorder %s15, 1
    %p80 = por %p78, %p79
    %p82 = scmp.ne.s32.totalorder %s67, %s81
    %p83 = scmp.eq.s32.totalorder %s15, 0
    %p84 = por %p82, %p83
    %s85 = ssub.s32 %s9, %s16
    %p86 = scmp.eq.s32.totalorder %s85, 0
    %s88 = sadd.s32 %s87, 1
    %s89 = scalar_select %p86, %s87, %s88
    %p92 = pneg %p86
    %p93 = scmp.eq.s32.totalorder %s9, 1
    %p94 = por %p92, %p93
    %p95 = scmp.ne.s32.totalorder %s87, %s90
    %p96 = scmp.eq.s32.totalorder %s9, 0
    %p97 = por %p95, %p96
    %p98 = scmp.ne.s32.totalorder %s87, %s90
    %p99 = scmp.eq.s32.totalorder %s14, 1
    %p100 = por %p98, %p99
    %p101 = scmp.ne.s32.totalorder %s90, %s91
    %p102 = scmp.eq.s32.totalorder %s14, 0
    %p103 = por %p101, %p102
    %p104 = scmp.ne.s32.totalorder %s90, %s91
    %p105 = scmp.eq.s32.totalorder %s15, 1
    %p106 = por %p104, %p105
    %p108 = scmp.ne.s32.totalorder %s91, %s107
    %p109 = scmp.eq.s32.totalorder %s15, 0
    %p110 = por %p108, %p109
    %p111 = scmp.le.s32.totalorder 1, %s9
    %p112 = scmp.lt.s32.totalorder %s9, 3
    %p113 = pnand %p111, %p112
    %p114 = pneg %p113
    // Predicated region
    $region9: #{_lambda_.8} parent=5 // pred_check
      _
    $region10: #{_lambda_.8} parent=5 // pred_check_branch
      %116 = sbr.rel (%p113) target = $region12
    $region11: #{_lambda_.8} parent=5 // pred_region
      %s117 = ssub.s32 %s9, 1
      // Predicated region
      $region13: #{_lambda_.8} parent=11 // pred_check
        %p118 = pneg %p56
      $region14: #{_lambda_.8} parent=11 // pred_check_branch
        %120 = sbr.rel (%p118) target = $region16
      $region15: #{_lambda_.8} parent=11 // pred_region
        _
      $region16: #{_lambda_.8} parent=11 // pred_fallthru
        _
      // Predicated region
      $region17: #{_lambda_.8} parent=11 // pred_check
        %p121 = pneg %p77
      $region18: #{_lambda_.8} parent=11 // pred_check_branch
        %123 = sbr.rel (%p121) target = $region20
      $region19: #{_lambda_.8} parent=11 // pred_region
        _
      $region20: #{_lambda_.8} parent=11 // pred_fallthru
        _
    $region12: #{_lambda_.8} parent=5 // pred_fallthru
      _
    %p124 = scmp.lt.s32.totalorder %s9, 2
    // Predicated region
    $region21: #{_lambda_.8} parent=5 // pred_check
      %p125 = pneg %p124
    $region22: #{_lambda_.8} parent=5 // pred_check_branch
      %127 = sbr.rel (%p125) target = $region24
    $region23: #{_lambda_.8} parent=5 // pred_region
      // Predicated region
      $region25: #{_lambda_.8} parent=23 // pred_check
        %p128 = pneg %p29
      $region26: #{_lambda_.8} parent=23 // pred_check_branch
        %130 = sbr.rel (%p128) target = $region28
      $region27: #{_lambda_.8} parent=23 // pred_region
        %s131 = smul.u32 4, %s9
        %p132 = scmp.lt.s32.totalorder %s131, 7
        %s133 = scalar_select %p132, %s131, 7
        %s134 = smul.addr %s133, 2
        %s135 = smul.addr %s134, 4
        %s136 = scalar_lea.vmem %s0, %s135
        %s137 = smul.u32 4, %s9
      $region28: #{_lambda_.8} parent=23 // pred_fallthru
        _
    $region24: #{_lambda_.8} parent=5 // pred_fallthru
      _
    %p138 = scmp.le.s32.totalorder 1, %s9
    %p139 = scmp.lt.s32.totalorder %s9, 3
    %p140 = pnand %p138, %p139
    %p141 = pneg %p140
    // Predicated region
    $region29: #{_lambda_.8} parent=5 // pred_check
      _
    $region30: #{_lambda_.8} parent=5 // pred_check_branch
      %143 = sbr.rel (%p140) target = $region32
    $region31: #{_lambda_.8} parent=5 // pred_region
      %s144 = ssub.s32 %s9, 1
      %s145 = smul.u32 4, %s14
      %p146 = scmp.lt.s32.totalorder %s145, 7
      %s147 = scalar_select %p146, %s145, 7
      %s148 = smul.addr %s147, 2
      %s149 = smul.addr %s148, 4
      %s150 = scalar_lea.vmem %s0, %s149
      %p151 = pneg %p35
      %p152 = pneg %p32
      %p153 = pneg %p56
      %p154 = pneg %p53
      %p155 = pneg %p77
      %p156 = pneg %p74
      %p157 = pneg %p103
      %p158 = pneg %p100
      %s159 = smul.u32 4, %s14
      %p160 = scmp.lt.s32.totalorder %s159, 7
      %s161 = scalar_select %p160, %s159, 7
      %s162 = smul.addr %s161, 2
      %s163 = smul.addr %s162, 4
      %s164 = scalar_lea.vmem %s3, %s163
      %s165 = smul.u32 4, %s14
      %p166 = scmp.lt.s32.totalorder %s165, 7
      %s167 = scalar_select %p166, %s165, 7
      %s168 = smul.addr %s167, 2
      %s169 = smul.addr %s168, 4
      %s170 = scalar_lea.vmem %s0, %s169
      %s171 = smul.u32 4, %s14
      %s172 = smul.u32 4, %s14
      %p173 = scmp.lt.s32.totalorder %s172, 7
      %s174 = scalar_select %p173, %s172, 7
      %s175 = smul.addr %s174, 2
      %s176 = smul.addr %s175, 4
      %s177 = scalar_lea.vmem %s3, %s176
      %s178 = smul.u32 4, %s14
      %v179 = vld [vmem:[%s170] sm:$0xff]
      %v180 = vld [vmem:[%s170 + $0x8] sm:$0xff]
      %v181 = vld [vmem:[%s170 + $0x10] sm:$0xff]
      %v182 = vld [vmem:[%s170 + $0x18] sm:$0xff]
      %v183 = vunpack.c.l.bf16 %v179
      %v184 = vunpack.c.h.bf16 %v179
      %v185 = vunpack.c.l.bf16 %v180
      %v186 = vunpack.c.h.bf16 %v180
      %v187 = vunpack.c.l.bf16 %v181
      %v188 = vunpack.c.h.bf16 %v181
      %v189 = vunpack.c.l.bf16 %v182
      %v190 = vunpack.c.h.bf16 %v182
      %v191 = vld [vmem:[%s1] sm:$0x3]
      %v193 = vlaneseq
      %v194 = vshrl.u32 %v193, 7
      %v195 = vsub.s32 0, %v194
      %v196 = vrot.slane %v191, %v195
      %v197 = vlaneseq
      %v198 = vshrl.u32 %v197, 7
      %v199 = vsub.s32 1, %v198
      %v200 = vrot.slane %v191, %v199
      %v203 = vmul.f32 %v183, %v196
      %v204 = vmul.f32 %v184, %v200
      %v205 = vmul.f32 %v185, %v196
      %v206 = vmul.f32 %v186, %v200
      %v207 = vmul.f32 %v187, %v196
      %v208 = vmul.f32 %v188, %v200
      %v209 = vmul.f32 %v189, %v196
      %v210 = vmul.f32 %v190, %v200
      %v211 = vld [vmem:[%s2] sm:$0x3]
      %v213 = vlaneseq
      %v214 = vshrl.u32 %v213, 7
      %v215 = vsub.s32 0, %v214
      %v216 = vrot.slane %v211, %v215
      %v217 = vlaneseq
      %v218 = vshrl.u32 %v217, 7
      %v219 = vsub.s32 1, %v218
      %v220 = vrot.slane %v211, %v219
      %v223 = vadd.f32 %v203, %v216
      %v224 = vadd.f32 %v204, %v220
      %v225 = vadd.f32 %v205, %v216
      %v226 = vadd.f32 %v206, %v220
      %v227 = vadd.f32 %v207, %v216
      %v228 = vadd.f32 %v208, %v220
      %v229 = vadd.f32 %v209, %v216
      %v230 = vadd.f32 %v210, %v220
      %v231 = vmax.f32 %v223, 0.0
      %v232 = vmax.f32 %v224, 0.0
      %v233 = vmax.f32 %v225, 0.0
      %v234 = vmax.f32 %v226, 0.0
      %v235 = vmax.f32 %v227, 0.0
      %v236 = vmax.f32 %v228, 0.0
      %v237 = vmax.f32 %v229, 0.0
      %v238 = vmax.f32 %v230, 0.0
      %v239 = vpack.c.bf16 %v233, %v231
      %v240 = vpack.c.bf16 %v234, %v232
      %v241 = vpack.c.bf16 %v237, %v235
      %v242 = vpack.c.bf16 %v238, %v236
      %v247 = vunpack.c.l.b16 %v239
      %v248 = vunpack.c.l.b16 %v240
      %v249 = vunpack.c.h.b16 %v239
      %v250 = vunpack.c.h.b16 %v240
      %v251 = vunpack.c.l.b16 %v241
      %v252 = vunpack.c.l.b16 %v242
      %v253 = vunpack.c.h.b16 %v241
      %v254 = vunpack.c.h.b16 %v242
      %v255 = vpack.c.b16 %v248, %v247
      %v256 = vpack.c.b16 %v250, %v249
      %v257 = vpack.c.b16 %v252, %v251
      %v258 = vpack.c.b16 %v254, %v253
      %263 = vst [vmem:[%s177] sm:$0xff] %v255
      %264 = vst [vmem:[%s177 + $0x8] sm:$0xff] %v256
      %265 = vst [vmem:[%s177 + $0x10] sm:$0xff] %v257
      %266 = vst [vmem:[%s177 + $0x18] sm:$0xff] %v258
      %s267 = smul.u32 4, %s14
      %p268 = scmp.lt.s32.totalorder %s267, 7
      %s269 = scalar_select %p268, %s267, 7
      %s270 = smul.addr %s269, 2
      %s271 = smul.addr %s270, 4
      %s272 = scalar_lea.vmem %s3, %s271
      // Predicated region
      $region33: #{_lambda_.8} parent=31 // pred_check
        %p273 = pneg %p100
      $region34: #{_lambda_.8} parent=31 // pred_check_branch
        %275 = sbr.rel (%p273) target = $region36
      $region35: #{_lambda_.8} parent=31 // pred_region
        %s276 = smul.u32 4, %s14
      $region36: #{_lambda_.8} parent=31 // pred_fallthru
        _
    $region32: #{_lambda_.8} parent=5 // pred_fallthru
      _
    %p277 = scmp.le.s32.totalorder 2, %s9
    // Predicated region
    $region37: #{_lambda_.8} parent=5 // pred_check
      %p278 = pneg %p277
    $region38: #{_lambda_.8} parent=5 // pred_check_branch
      %280 = sbr.rel (%p278) target = $region40
    $region39: #{_lambda_.8} parent=5 // pred_region
      %s281 = ssub.s32 %s9, 2
      // Predicated region
      $region41: #{_lambda_.8} parent=39 // pred_check
        %p282 = pneg %p106
      $region42: #{_lambda_.8} parent=39 // pred_check_branch
        %284 = sbr.rel (%p282) target = $region44
      $region43: #{_lambda_.8} parent=39 // pred_region
        %s285 = smul.u32 4, %s15
        %p286 = scmp.lt.s32.totalorder %s285, 7
        %s287 = scalar_select %p286, %s285, 7
        %s288 = smul.addr %s287, 2
        %s289 = smul.addr %s288, 4
        %s290 = scalar_lea.vmem %s3, %s289
      $region44: #{_lambda_.8} parent=39 // pred_fallthru
        _
    $region40: #{_lambda_.8} parent=5 // pred_fallthru
      _
  $region6: #{_lambda_.8} parent=0 // loop_footer
    %s13 = sadd.s32 1, %s9
  $region7: #{_lambda_.8} parent=0 // loop_footer_branch
    %8 = sbr.rel target = $region3
  $region8: #{_lambda_.8} parent=0 // loop_exit
    _

// kernel: _lambda_.9
$region0: #{_lambda_.9}
  #allocation0 [shape = 'u32[]', space=smem, size = 0x4, offset = 0x4, fixed_abs, tag = 'smem constant byte address 0x4 - core index']
  #allocation1 [shape = 'u32[144,128]{1,0:T(1,128)}', space=vmem, size = 0x12000, scoped, tag = 'internal scratch']
  %s0 = inlined_call_operand.vmem [shape: bf16[192,256], index: 0, kind: input, shape index: {}]
  %s1 = inlined_call_operand.vmem [shape: bf16[256,128], index: 1, kind: input, shape index: {}]
  %s2 = inlined_call_operand.vmem [shape: bf16[192,128], index: 2, kind: output, shape index: {}]
  %s3 = sld [smem:[#allocation0]]
  $region41: #{_lambda_.9} parent=0
    _
  %s5 = ssub.s32 1, %s3
  %s6 = scalar_select 0, %s5, %s3
  loop: start=0, step=1, limit=4
  $region2: #{_lambda_.9} parent=0 // loop_pre_header
    _
  $region3: #{_lambda_.9} parent=0 // loop_header
    %s8 = sphi 0, %s12
    %p9 = scmp.ge.s32.totalorder %s8, 4
    %s18 = sphi 0, %s20
    %s21 = sphi 0, %s18
    %s22 = sphi 0, %s21
    %s38 = sphi 0, %s22
    %s42 = sphi 0, %s42
    %s44 = sphi 0, %s42
    %s45 = sphi 0, %s44
    %s59 = sphi 0, %s45
    %s65 = sphi 0, %s67
    %s68 = sphi 0, %s65
    %s69 = sphi 0, %s68
    %s85 = sphi 0, %s69
  $region4: #{_lambda_.9} parent=0 // loop_header_branch
    %11 = sbr.rel (%p9) target = $region8
  $region5: #{_lambda_.9} parent=0 // loop_body
    %s13 = ssub.s32 %s8, 1
    %s14 = ssub.s32 %s8, 2
    %s15 = sadd.s32 %s8, 1
    %s16 = ssub.s32 %s8, %s15
    %p17 = scmp.eq.s32.totalorder %s16, 0
    %s19 = sadd.s32 %s18, 1
    %s20 = scalar_select %p17, %s18, %s19
    %p23 = pneg %p17
    %p24 = scmp.eq.s32.totalorder %s8, 1
    %p25 = por %p23, %p24
    %p26 = scmp.ne.s32.totalorder %s18, %s21
    %p27 = scmp.eq.s32.totalorder %s8, 0
    %p28 = por %p26, %p27
    %p29 = scmp.ne.s32.totalorder %s18, %s21
    %p30 = scmp.eq.s32.totalorder %s13, 1
    %p31 = por %p29, %p30
    %p32 = scmp.ne.s32.totalorder %s21, %s22
    %p33 = scmp.eq.s32.totalorder %s13, 0
    %p34 = por %p32, %p33
    %p35 = scmp.ne.s32.totalorder %s21, %s22
    %p36 = scmp.eq.s32.totalorder %s14, 1
    %p37 = por %p35, %p36
    %p39 = scmp.ne.s32.totalorder %s22, %s38
    %p40 = scmp.eq.s32.totalorder %s14, 0
    %p41 = por %p39, %p40
    %s43 = sadd.s32 %s42, 1
    %p46 = scmp.eq.s32.totalorder %s8, 1
    %p47 = scmp.ne.s32.totalorder %s42, %s44
    %p48 = scmp.eq.s32.totalorder %s8, 0
    %p49 = por %p47, %p48
    %p50 = scmp.ne.s32.totalorder %s42, %s44
    %p51 = scmp.eq.s32.totalorder %s13, 1
    %p52 = por %p50, %p51
    %p53 = scmp.ne.s32.totalorder %s44, %s45
    %p54 = scmp.eq.s32.totalorder %s13, 0
    %p55 = por %p53, %p54
    %p56 = scmp.ne.s32.totalorder %s44, %s45
    %p57 = scmp.eq.s32.totalorder %s14, 1
    %p58 = por %p56, %p57
    %p60 = scmp.ne.s32.totalorder %s45, %s59
    %p61 = scmp.eq.s32.totalorder %s14, 0
    %p62 = por %p60, %p61
    %s63 = ssub.s32 %s8, %s15
    %p64 = scmp.eq.s32.totalorder %s63, 0
    %s66 = sadd.s32 %s65, 1
    %s67 = scalar_select %p64, %s65, %s66
    %p70 = pneg %p64
    %p71 = scmp.eq.s32.totalorder %s8, 1
    %p72 = por %p70, %p71
    %p73 = scmp.ne.s32.totalorder %s65, %s68
    %p74 = scmp.eq.s32.totalorder %s8, 0
    %p75 = por %p73, %p74
    %p76 = scmp.ne.s32.totalorder %s65, %s68
    %p77 = scmp.eq.s32.totalorder %s13, 1
    %p78 = por %p76, %p77
    %p79 = scmp.ne.s32.totalorder %s68, %s69
    %p80 = scmp.eq.s32.totalorder %s13, 0
    %p81 = por %p79, %p80
    %p82 = scmp.ne.s32.totalorder %s68, %s69
    %p83 = scmp.eq.s32.totalorder %s14, 1
    %p84 = por %p82, %p83
    %p86 = scmp.ne.s32.totalorder %s69, %s85
    %p87 = scmp.eq.s32.totalorder %s14, 0
    %p88 = por %p86, %p87
    %p89 = scmp.le.s32.totalorder 1, %s8
    %p90 = scmp.lt.s32.totalorder %s8, 3
    %p91 = pnand %p89, %p90
    %p92 = pneg %p91
    // Predicated region
    $region9: #{_lambda_.9} parent=5 // pred_check
      _
    $region10: #{_lambda_.9} parent=5 // pred_check_branch
      %94 = sbr.rel (%p91) target = $region12
    $region11: #{_lambda_.9} parent=5 // pred_region
      %s95 = ssub.s32 %s8, 1
      // Predicated region
      $region13: #{_lambda_.9} parent=11 // pred_check
        %p96 = pneg %p55
      $region14: #{_lambda_.9} parent=11 // pred_check_branch
        %98 = sbr.rel (%p96) target = $region16
      $region15: #{_lambda_.9} parent=11 // pred_region
        _
      $region16: #{_lambda_.9} parent=11 // pred_fallthru
        _
    $region12: #{_lambda_.9} parent=5 // pred_fallthru
      _
    %p99 = scmp.lt.s32.totalorder %s8, 2
    // Predicated region
    $region17: #{_lambda_.9} parent=5 // pred_check
      %p100 = pneg %p99
    $region18: #{_lambda_.9} parent=5 // pred_check_branch
      %102 = sbr.rel (%p100) target = $region20
    $region19: #{_lambda_.9} parent=5 // pred_region
      // Predicated region
      $region21: #{_lambda_.9} parent=19 // pred_check
        %p103 = pneg %p28
      $region22: #{_lambda_.9} parent=19 // pred_check_branch
        %105 = sbr.rel (%p103) target = $region24
      $region23: #{_lambda_.9} parent=19 // pred_region
        %s106 = smul.u32 12, %s8
        %p107 = scmp.lt.s32.totalorder %s106, 23
        %s108 = scalar_select %p107, %s106, 23
        %s109 = smul.addr %s108, 2
        %s110 = smul.addr %s109, 4
        %s111 = scalar_lea.vmem %s0, %s110
        %s112 = smul.u32 12, %s8
      $region24: #{_lambda_.9} parent=19 // pred_fallthru
        _
    $region20: #{_lambda_.9} parent=5 // pred_fallthru
      _
    %p113 = scmp.le.s32.totalorder 1, %s8
    %p114 = scmp.lt.s32.totalorder %s8, 3
    %p115 = pnand %p113, %p114
    %p116 = pneg %p115
    // Predicated region
    $region25: #{_lambda_.9} parent=5 // pred_check
      _
    $region26: #{_lambda_.9} parent=5 // pred_check_branch
      %118 = sbr.rel (%p115) target = $region28
    $region27: #{_lambda_.9} parent=5 // pred_region
      %s119 = ssub.s32 %s8, 1
      %s120 = smul.u32 12, %s13
      %p121 = scmp.lt.s32.totalorder %s120, 23
      %s122 = scalar_select %p121, %s120, 23
      %s123 = smul.addr %s122, 2
      %s124 = smul.addr %s123, 4
      %s125 = scalar_lea.vmem %s0, %s124
      %p126 = pneg %p34
      %p127 = pneg %p31
      %p128 = pneg %p55
      %p129 = pneg %p52
      %p130 = pneg %p81
      %p131 = pneg %p78
      %s132 = smul.u32 12, %s13
      %p133 = scmp.lt.s32.totalorder %s132, 23
      %s134 = scalar_select %p133, %s132, 23
      %s135 = smul.addr %s134, 4
      %s136 = scalar_lea.vmem %s2, %s135
      %s137 = smul.u32 12, %s13
      %p138 = scmp.lt.s32.totalorder %s137, 23
      %s139 = scalar_select %p138, %s137, 23
      %s140 = smul.addr %s139, 2
      %s141 = smul.addr %s140, 4
      %s142 = scalar_lea.vmem %s0, %s141
      %s143 = smul.u32 12, %s13
      %s144 = smul.u32 12, %s13
      %p145 = scmp.lt.s32.totalorder %s144, 23
      %s146 = scalar_select %p145, %s144, 23
      %s147 = smul.addr %s146, 4
      %s148 = scalar_lea.vmem %s2, %s147
      %s149 = smul.u32 12, %s13
      %v151 = vld [vmem:[%s142] sm:$0xff]
      %v152 = vld [vmem:[%s142 + $0x8] sm:$0xff]
      %v153 = vld [vmem:[%s142 + $0x10] sm:$0xff]
      %v154 = vld [vmem:[%s142 + $0x18] sm:$0xff]
      %v155 = vld [vmem:[%s142 + $0x20] sm:$0xff]
      %v156 = vld [vmem:[%s142 + $0x28] sm:$0xff]
      %v157 = vld [vmem:[%s142 + $0x30] sm:$0xff]
      %v158 = vld [vmem:[%s142 + $0x38] sm:$0xff]
      %v159 = vld [vmem:[%s142 + $0x40] sm:$0xff]
      %v160 = vld [vmem:[%s142 + $0x48] sm:$0xff]
      %v161 = vld [vmem:[%s142 + $0x50] sm:$0xff]
      %v162 = vld [vmem:[%s142 + $0x58] sm:$0xff]
      %v163 = vld [vmem:[%s1] sm:$0xf]
      %v164 = vld [vmem:[%s1 + $0x4] sm:$0xf]
      %v165 = vld [vmem:[%s1 + $0x8] sm:$0xf]
      %v166 = vld [vmem:[%s1 + $0xc] sm:$0xf]
      %v167 = vld [vmem:[%s1 + $0x10] sm:$0xf]
      %v168 = vld [vmem:[%s1 + $0x14] sm:$0xf]
      %v169 = vld [vmem:[%s1 + $0x18] sm:$0xf]
      %v170 = vld [vmem:[%s1 + $0x1c] sm:$0xf]
      %v171 = vld [vmem:[%s1 + $0x20] sm:$0xf]
      %v172 = vld [vmem:[%s1 + $0x24] sm:$0xf]
      %v173 = vld [vmem:[%s1 + $0x28] sm:$0xf]
      %v174 = vld [vmem:[%s1 + $0x2c] sm:$0xf]
      %v175 = vld [vmem:[%s1 + $0x30] sm:$0xf]
      %v176 = vld [vmem:[%s1 + $0x34] sm:$0xf]
      %v177 = vld [vmem:[%s1 + $0x38] sm:$0xf]
      %v178 = vld [vmem:[%s1 + $0x3c] sm:$0xf]
      %v179 = vld [vmem:[%s1 + $0x40] sm:$0xf]
      %v180 = vld [vmem:[%s1 + $0x44] sm:$0xf]
      %v181 = vld [vmem:[%s1 + $0x48] sm:$0xf]
      %v182 = vld [vmem:[%s1 + $0x4c] sm:$0xf]
      %v183 = vld [vmem:[%s1 + $0x50] sm:$0xf]
      %v184 = vld [vmem:[%s1 + $0x54] sm:$0xf]
      %v185 = vld [vmem:[%s1 + $0x58] sm:$0xf]
      %v186 = vld [vmem:[%s1 + $0x5c] sm:$0xf]
      %v187 = vld [vmem:[%s1 + $0x60] sm:$0xf]
      %v188 = vld [vmem:[%s1 + $0x64] sm:$0xf]
      %v189 = vld [vmem:[%s1 + $0x68] sm:$0xf]
      %v190 = vld [vmem:[%s1 + $0x6c] sm:$0xf]
      %v191 = vld [vmem:[%s1 + $0x70] sm:$0xf]
      %v192 = vld [vmem:[%s1 + $0x74] sm:$0xf]
      %v193 = vld [vmem:[%s1 + $0x78] sm:$0xf]
      %v194 = vld [vmem:[%s1 + $0x7c] sm:$0xf]
      %v207 = vunpack.c.l.b16 %v151
      %v208 = vunpack.c.h.b16 %v151
      %v209 = vunpack.c.l.b16 %v152
      %v210 = vunpack.c.h.b16 %v152
      %v211 = vunpack.c.l.b16 %v153
      %v212 = vunpack.c.h.b16 %v153
      %v213 = vunpack.c.l.b16 %v154
      %v214 = vunpack.c.h.b16 %v154
      %v215 = vunpack.c.l.b16 %v155
      %v216 = vunpack.c.h.b16 %v155
      %v217 = vunpack.c.l.b16 %v156
      %v218 = vunpack.c.h.b16 %v156
      %v219 = vunpack.c.l.b16 %v157
      %v220 = vunpack.c.h.b16 %v157
      %v221 = vunpack.c.l.b16 %v158
      %v222 = vunpack.c.h.b16 %v158
      %v223 = vunpack.c.l.b16 %v159
      %v224 = vunpack.c.h.b16 %v159
      %v225 = vunpack.c.l.b16 %v160
      %v226 = vunpack.c.h.b16 %v160
      %v227 = vunpack.c.l.b16 %v161
      %v228 = vunpack.c.h.b16 %v161
      %v229 = vunpack.c.l.b16 %v162
      %v230 = vunpack.c.h.b16 %v162
      %v231 = vpack.c.b16 %v209, %v207
      %v232 = vpack.c.b16 %v210, %v208
      %v233 = vpack.c.b16 %v213, %v211
      %v234 = vpack.c.b16 %v214, %v212
      %v235 = vpack.c.b16 %v217, %v215
      %v236 = vpack.c.b16 %v218, %v216
      %v237 = vpack.c.b16 %v221, %v219
      %v238 = vpack.c.b16 %v222, %v220
      %v239 = vpack.c.b16 %v225, %v223
      %v240 = vpack.c.b16 %v226, %v224
      %v241 = vpack.c.b16 %v229, %v227
      %v242 = vpack.c.b16 %v230, %v228
      %v287 = vunpack.c.l.b16 %v163
      %v288 = vunpack.c.l.b16 %v164
      %v289 = vunpack.c.l.b16 %v165
      %v290 = vunpack.c.l.b16 %v166
      %v291 = vunpack.c.l.b16 %v167
      %v292 = vunpack.c.l.b16 %v168
      %v293 = vunpack.c.l.b16 %v169
      %v294 = vunpack.c.l.b16 %v170
      %v295 = vunpack.c.l.b16 %v171
      %v296 = vunpack.c.l.b16 %v172
      %v297 = vunpack.c.l.b16 %v173
      %v298 = vunpack.c.l.b16 %v174
      %v299 = vunpack.c.l.b16 %v175
      %v300 = vunpack.c.l.b16 %v176
      %v301 = vunpack.c.l.b16 %v177
      %v302 = vunpack.c.l.b16 %v178
      %v303 = vunpack.c.l.b16 %v179
      %v304 = vunpack.c.l.b16 %v180
      %v305 = vunpack.c.l.b16 %v181
      %v306 = vunpack.c.l.b16 %v182
      %v307 = vunpack.c.l.b16 %v183
      %v308 = vunpack.c.l.b16 %v184
      %v309 = vunpack.c.l.b16 %v185
      %v310 = vunpack.c.l.b16 %v186
      %v311 = vunpack.c.l.b16 %v187
      %v312 = vunpack.c.l.b16 %v188
      %v313 = vunpack.c.l.b16 %v189
      %v314 = vunpack.c.l.b16 %v190
      %v315 = vunpack.c.l.b16 %v191
      %v316 = vunpack.c.l.b16 %v192
      %v317 = vunpack.c.l.b16 %v193
      %v318 = vunpack.c.l.b16 %v194
      %v319 = vpack.c.b16 %v288, %v287
      %v320 = vpack.c.b16 %v290, %v289
      %v321 = vpack.c.b16 %v292, %v291
      %v322 = vpack.c.b16 %v294, %v293
      %v323 = vpack.c.b16 %v296, %v295
      %v324 = vpack.c.b16 %v298, %v297
      %v325 = vpack.c.b16 %v300, %v299
      %v326 = vpack.c.b16 %v302, %v301
      %v327 = vpack.c.b16 %v304, %v303
      %v328 = vpack.c.b16 %v306, %v305
      %v329 = vpack.c.b16 %v308, %v307
      %v330 = vpack.c.b16 %v310, %v309
      %v331 = vpack.c.b16 %v312, %v311
      %v332 = vpack.c.b16 %v314, %v313
      %v333 = vpack.c.b16 %v316, %v315
      %v334 = vpack.c.b16 %v318, %v317
      %351 = vmatprep.subr.bf16.mxu0 0
      %352 = vmatpush1.bf16.msra.mxu0 %v326
      %353 = vmatprep.subr.bf16.mxu0 0
      %354 = vmatpush1.bf16.msra.mxu0 %v325
      %355 = vmatprep.subr.bf16.mxu0 0
      %356 = vmatpush1.bf16.msra.mxu0 %v324
      %357 = vmatprep.subr.bf16.mxu0 0
      %358 = vmatpush1.bf16.msra.mxu0 %v323
      %359 = vmatprep.subr.bf16.mxu0 0
      %360 = vmatpush1.bf16.msra.mxu0 %v322
      %361 = vmatprep.subr.bf16.mxu0 0
      %362 = vmatpush1.bf16.msra.mxu0 %v321
      %363 = vmatprep.subr.bf16.mxu0 0
      %364 = vmatpush1.bf16.msra.mxu0 %v320
      %365 = vmatprep.subr.bf16.mxu0 0
      %366 = vmatpush1.bf16.msra.mxu0 %v319
      %367 = vmatprep.subr.bf16.mxu0 0
      %368 = vmatpush2.bf16.msra.mxu0 %v334
      %369 = vmatprep.subr.bf16.mxu0 0
      %370 = vmatpush2.bf16.msra.mxu0 %v333
      %371 = vmatprep.subr.bf16.mxu0 0
      %372 = vmatpush2.bf16.msra.mxu0 %v332
      %373 = vmatprep.subr.bf16.mxu0 0
      %374 = vmatpush2.bf16.msra.mxu0 %v331
      %375 = vmatprep.subr.bf16.mxu0 0
      %376 = vmatpush2.bf16.msra.mxu0 %v330
      %377 = vmatprep.subr.bf16.mxu0 0
      %378 = vmatpush2.bf16.msra.mxu0 %v329
      %379 = vmatprep.subr.bf16.mxu0 0
      %380 = vmatpush2.bf16.msra.mxu0 %v328
      %381 = vmatprep.subr.bf16.mxu0 0
      %382 = vmatpush2.bf16.msra.mxu0 %v327
      %383 = vmatprep.mubr.bf16.mxu0 %v232
      %384 = vmatmul.mubr.bf16.gmra.mxu0 %v231
      %v385 = vpop.f32.mrf.mxu0
      %v386 = vadd.f32 0.0, %v385
      %v387 = vpop.f32.mrf.mxu0
      %v388 = vpop.f32.mrf.mxu0
      %v389 = vadd.f32 0.0, %v388
      %v390 = vpop.f32.mrf.mxu0
      %391 = vmatprep.mubr.bf16.mxu0 %v234
      %392 = vmatmul.mubr.bf16.gmra.mxu0 %v233
      %v393 = vpop.f32.mrf.mxu0
      %v394 = vadd.f32 0.0, %v393
      %v395 = vpop.f32.mrf.mxu0
      %v396 = vpop.f32.mrf.mxu0
      %v397 = vadd.f32 0.0, %v396
      %v398 = vpop.f32.mrf.mxu0
      %399 = vmatprep.mubr.bf16.mxu0 %v236
      %400 = vmatmul.mubr.bf16.gmra.mxu0 %v235
      %v401 = vpop.f32.mrf.mxu0
      %v402 = vadd.f32 0.0, %v401
      %v403 = vpop.f32.mrf.mxu0
      %v404 = vpop.f32.mrf.mxu0
      %v405 = vadd.f32 0.0, %v404
      %v406 = vpop.f32.mrf.mxu0
      %407 = vmatprep.mubr.bf16.mxu0 %v238
      %408 = vmatmul.mubr.bf16.gmra.mxu0 %v237
      %v409 = vpop.f32.mrf.mxu0
      %v410 = vadd.f32 0.0, %v409
      %v411 = vpop.f32.mrf.mxu0
      %v412 = vpop.f32.mrf.mxu0
      %v413 = vadd.f32 0.0, %v412
      %v414 = vpop.f32.mrf.mxu0
      %415 = vmatprep.mubr.bf16.mxu0 %v240
      %416 = vmatmul.mubr.bf16.gmra.mxu0 %v239
      %v417 = vpop.f32.mrf.mxu0
      %v418 = vadd.f32 0.0, %v417
      %v419 = vpop.f32.mrf.mxu0
      %v420 = vpop.f32.mrf.mxu0
      %v421 = vadd.f32 0.0, %v420
      %v422 = vpop.f32.mrf.mxu0
      %423 = vmatprep.mubr.bf16.mxu0 %v242
      %424 = vmatmul.mubr.bf16.gmra.mxu0 %v241
      %v425 = vpop.f32.mrf.mxu0
      %v426 = vadd.f32 0.0, %v425
      %v427 = vpop.f32.mrf.mxu0
      %v428 = vpop.f32.mrf.mxu0
      %v429 = vadd.f32 0.0, %v428
      %v430 = vpop.f32.mrf.mxu0
      %431 = vdwg.mxu0
      %v432 = vtanh.pop %v386
      %v433 = vtanh.pop %v389
      %v434 = vtanh.pop %v394
      %v435 = vtanh.pop %v397
      %v436 = vtanh.pop %v402
      %v437 = vtanh.pop %v405
      %v438 = vtanh.pop %v410
      %v439 = vtanh.pop %v413
      %v440 = vtanh.pop %v418
      %v441 = vtanh.pop %v421
      %v442 = vtanh.pop %v426
      %v443 = vtanh.pop %v429
      %v444 = vpack.c.bf16 %v433, %v432
      %v445 = vpack.c.bf16 %v435, %v434
      %v446 = vpack.c.bf16 %v437, %v436
      %v447 = vpack.c.bf16 %v439, %v438
      %v448 = vpack.c.bf16 %v441, %v440
      %v449 = vpack.c.bf16 %v443, %v442
      %v456 = vunpack.c.l.b16 %v444
      %v457 = vunpack.c.h.b16 %v444
      %v458 = vunpack.c.l.b16 %v445
      %v459 = vunpack.c.h.b16 %v445
      %v460 = vunpack.c.l.b16 %v446
      %v461 = vunpack.c.h.b16 %v446
      %v462 = vunpack.c.l.b16 %v447
      %v463 = vunpack.c.h.b16 %v447
      %v464 = vunpack.c.l.b16 %v448
      %v465 = vunpack.c.h.b16 %v448
      %v466 = vunpack.c.l.b16 %v449
      %v467 = vunpack.c.h.b16 %v449
      %v468 = vpack.c.b16 %v456, %v456
      %v469 = vpack.c.b16 %v457, %v457
      %v470 = vpack.c.b16 %v458, %v458
      %v471 = vpack.c.b16 %v459, %v459
      %v472 = vpack.c.b16 %v460, %v460
      %v473 = vpack.c.b16 %v461, %v461
      %v474 = vpack.c.b16 %v462, %v462
      %v475 = vpack.c.b16 %v463, %v463
      %v476 = vpack.c.b16 %v464, %v464
      %v477 = vpack.c.b16 %v465, %v465
      %v478 = vpack.c.b16 %v466, %v466
      %v479 = vpack.c.b16 %v467, %v467
      %492 = vst [vmem:[%s148] sm:$0xf] %v468
      %493 = vst [vmem:[%s148 + $0x4] sm:$0xf] %v469
      %494 = vst [vmem:[%s148 + $0x8] sm:$0xf] %v470
      %495 = vst [vmem:[%s148 + $0xc] sm:$0xf] %v471
      %496 = vst [vmem:[%s148 + $0x10] sm:$0xf] %v472
      %497 = vst [vmem:[%s148 + $0x14] sm:$0xf] %v473
      %498 = vst [vmem:[%s148 + $0x18] sm:$0xf] %v474
      %499 = vst [vmem:[%s148 + $0x1c] sm:$0xf] %v475
      %500 = vst [vmem:[%s148 + $0x20] sm:$0xf] %v476
      %501 = vst [vmem:[%s148 + $0x24] sm:$0xf] %v477
      %502 = vst [vmem:[%s148 + $0x28] sm:$0xf] %v478
      %503 = vst [vmem:[%s148 + $0x2c] sm:$0xf] %v479
      %s504 = smul.u32 12, %s13
      %p505 = scmp.lt.s32.totalorder %s504, 23
      %s506 = scalar_select %p505, %s504, 23
      %s507 = smul.addr %s506, 4
      %s508 = scalar_lea.vmem %s2, %s507
      // Predicated region
      $region29: #{_lambda_.9} parent=27 // pred_check
        %p509 = pneg %p78
      $region30: #{_lambda_.9} parent=27 // pred_check_branch
        %511 = sbr.rel (%p509) target = $region32
      $region31: #{_lambda_.9} parent=27 // pred_region
        %s512 = smul.u32 12, %s13
      $region32: #{_lambda_.9} parent=27 // pred_fallthru
        _
    $region28: #{_lambda_.9} parent=5 // pred_fallthru
      _
    %p513 = scmp.le.s32.totalorder 2, %s8
    // Predicated region
    $region33: #{_lambda_.9} parent=5 // pred_check
      %p514 = pneg %p513
    $region34: #{_lambda_.9} parent=5 // pred_check_branch
      %516 = sbr.rel (%p514) target = $region36
    $region35: #{_lambda_.9} parent=5 // pred_region
      %s517 = ssub.s32 %s8, 2
      // Predicated region
      $region37: #{_lambda_.9} parent=35 // pred_check
        %p518 = pneg %p84
      $region38: #{_lambda_.9} parent=35 // pred_check_branch
        %520 = sbr.rel (%p518) target = $region40
      $region39: #{_lambda_.9} parent=35 // pred_region
        %s521 = smul.u32 12, %s14
        %p522 = scmp.lt.s32.totalorder %s521, 23
        %s523 = scalar_select %p522, %s521, 23
        %s524 = smul.addr %s523, 4
        %s525 = scalar_lea.vmem %s2, %s524
      $region40: #{_lambda_.9} parent=35 // pred_fallthru
        _
    $region36: #{_lambda_.9} parent=5 // pred_fallthru
      _
  $region6: #{_lambda_.9} parent=0 // loop_footer
    %s12 = sadd.s32 1, %s8
  $region7: #{_lambda_.9} parent=0 // loop_footer_branch
    %7 = sbr.rel target = $region3
  $region8: #{_lambda_.9} parent=0 // loop_exit
    _

</llo_original>
